<compile_context>
chip_gen: v7x
topology: tpu7x:2x2x1
jax: 0.10.0
libtpu: 0.0.40
codegen_flags: <defaults>
</compile_context>

<pallas_src>
import functools

import jax
import jax.numpy as jnp
from jax.experimental import pallas as pl
from jax.experimental.pallas import tpu as pltpu


LANE = 128   # TPU lane width; channel / contraction dims are padded lane-dense to this
CPAD = 128


# ---------------------------------------------------------------------------
# helpers
# ---------------------------------------------------------------------------

def _round_up(x, m):
    return (x + m - 1) // m * m


def _cpad(c):
    return _round_up(c, CPAD)


def _default_vmem_limit():
    """~64 MiB scoped VMEM on 128-MiB chips (v5e/v6e), ~38 MiB on v7x (64 MiB physical)."""
    cap = 128 * 1024 * 1024
    try:
        info = pltpu.get_tpu_info()
        cap = int(getattr(info, "vmem_capacity_bytes", 0)) or cap
    except Exception:
        pass
    return int(min(64 * 1024 * 1024, cap * 6 // 10))


_VMEM_LIMIT = _default_vmem_limit()


def _pick_m_tile(m, pref=2048):
    """(padded_M, TM): TM from {256,512,1024,2048}, minimal padding waste, prefer >=2 tiles
    (v7x 2-TensorCore balance); fall back to a single 16-aligned tile for small/ragged M."""
    cands = [c for c in (256, 512, 1024, 2048) if c <= max(pref, 256)]
    best = None
    for tm in cands:
        mp = _round_up(m, tm)
        key = (mp - m, 0 if mp // tm >= 2 else 1, -tm)
        if best is None or key < best[0]:
            best = (key, mp, tm)
    mp1 = _round_up(m, 16)                       # bf16 sublane packing
    if mp1 <= 1024 and (mp1 - m) < best[0][0]:
        return mp1, mp1
    return best[1], best[2]


def _pick_div_tile(total, pref):
    """Largest multiple-of-128 divisor of `total` (itself a 128 multiple) that is <= pref."""
    if total <= pref or total % LANE != 0:
        return total
    q = total // LANE
    best = 1
    for d in range(1, q + 1):
        if q % d == 0 and LANE * d <= pref:
            best = d
    return LANE * best


# ---------------------------------------------------------------------------
# Pallas kernels
# ---------------------------------------------------------------------------

def _mm_kernel(a_ref, w_ref, b_ref, o_ref, acc_ref, *, relu):
    # blocks (leading head dim squeezed): a (TM,TK) bf16, w (TK,TN) bf16, b (1,TN) f32
    k = pl.program_id(3)

    @pl.when(k == 0)
    def _init():
        acc_ref[...] = jnp.zeros_like(acc_ref)

    acc_ref[...] += jnp.dot(a_ref[...], w_ref[...], preferred_element_type=jnp.float32)

    @pl.when(k == pl.num_programs(3) - 1)
    def _fin():
        out = acc_ref[...] + b_ref[...]
        if relu:
            out = jnp.maximum(out, 0.0)
        o_ref[...] = out.astype(o_ref.dtype)


def _mm_res_kernel(a_ref, w_ref, b_ref, r_ref, o_ref, acc_ref, *, relu):
    # same as _mm_kernel but with a fused residual add in the epilogue (bottleneck conv3)
    k = pl.program_id(3)

    @pl.when(k == 0)
    def _init():
        acc_ref[...] = jnp.zeros_like(acc_ref)

    acc_ref[...] += jnp.dot(a_ref[...], w_ref[...], preferred_element_type=jnp.float32)

    @pl.when(k == pl.num_programs(3) - 1)
    def _fin():
        out = acc_ref[...] + b_ref[...] + r_ref[...].astype(jnp.float32)
        if relu:
            out = jnp.maximum(out, 0.0)
        o_ref[...] = out.astype(o_ref.dtype)


def bmm_bias(a, w, b, residual=None, relu=False, out_dtype=jnp.bfloat16,
             tm_pref=2048, tk_pref=512, tn_pref=512):
    """Batched (per-head) matmul: (NHa,M,K) @ (NH,K,N) + b[NH,N] (+residual) (+ReLU).

    bf16 MXU inputs, f32 accumulation, grid (head, M, N, K) with lane-dense (128-padded) K,
    and head-folding into N when the activations are broadcast across heads (NHa==1):
    the broadcast layer3 features are then read from HBM once instead of once per head.
    """
    NH, K, N = w.shape
    NHa, M, Ka = a.shape
    assert Ka == K and NHa in (1, NH)

    if NH > 1 and NHa == 1 and residual is None:
        # fold heads into N: one wide lane-dense matmul, no per-head re-DMA of A
        wf = jnp.transpose(w, (1, 0, 2)).reshape(1, K, NH * N)
        bf = b.reshape(1, NH * N)
        out = bmm_bias(a, wf, bf, residual=None, relu=relu, out_dtype=out_dtype,
                       tm_pref=tm_pref, tk_pref=tk_pref, tn_pref=tn_pref)
        m_out = out.shape[1]
        return jnp.transpose(out.reshape(m_out, NH, N), (1, 0, 2))

    Mp, TM = _pick_m_tile(M, tm_pref)
    Kp = _round_up(K, LANE)                        # lane-dense contraction (zero padded)
    TK = _pick_div_tile(Kp, tk_pref)
    TN = _pick_div_tile(N, tn_pref)

    a16 = a.astype(jnp.bfloat16)
    w16 = w.astype(jnp.bfloat16)
    if Mp != M or Kp != K:
        a16 = jnp.pad(a16, ((0, 0), (0, Mp - M), (0, Kp - K)))
    if Kp != K:
        w16 = jnp.pad(w16, ((0, 0), (0, Kp - K), (0, 0)))
    b3 = b.astype(jnp.float32).reshape(NH, 1, N)

    nm, nn, nk = Mp // TM, N // TN, Kp // TK
    a_idx = (lambda h, i, n, k: (0, i, k)) if NHa == 1 else (lambda h, i, n, k: (h, i, k))

    in_specs = [
        pl.BlockSpec((None, TM, TK), a_idx),
        pl.BlockSpec((None, TK, TN), lambda h, i, n, k: (h, k, n)),
        pl.BlockSpec((None, 1, TN), lambda h, i, n, k: (h, 0, n)),
    ]
    args = [a16, w16, b3]

    out_bytes = int(jnp.dtype(out_dtype).itemsize)
    bytes_acc = (2 * (1 if NHa == 1 else NH) * Mp * Kp + 2 * NH * Kp * N
                 + NH * Mp * N * out_bytes + 4 * NH * N)
    if residual is not None:
        NHr = residual.shape[0]
        r16 = residual.astype(jnp.bfloat16)
        if Mp != M:
            r16 = jnp.pad(r16, ((0, 0), (0, Mp - M), (0, 0)))
        r_idx = (lambda h, i, n, k: (0, i, n)) if NHr == 1 else (lambda h, i, n, k: (h, i, n))
        in_specs.append(pl.BlockSpec((None, TM, TN), r_idx))
        args.append(r16)
        kernel = functools.partial(_mm_res_kernel, relu=relu)
        bytes_acc += 2 * NH * Mp * N
    else:
        kernel = functools.partial(_mm_kernel, relu=relu)

    flops = 2 * NH * Mp * Kp * N

    out = pl.pallas_call(
        kernel,
        out_shape=jax.ShapeDtypeStruct((NH, Mp, N), out_dtype),
        grid=(NH, nm, nn, nk),
        in_specs=in_specs,
        out_specs=pl.BlockSpec((None, TM, TN), lambda h, i, n, k: (h, i, n)),
        scratch_shapes=[pltpu.VMEM((TM, TN), jnp.float32)],
        compiler_params=pltpu.CompilerParams(
            dimension_semantics=("parallel", "parallel", "parallel", "arbitrary"),
            vmem_limit_bytes=_VMEM_LIMIT),
        cost_estimate=pl.CostEstimate(flops=flops, transcendentals=0,
                                      bytes_accessed=int(bytes_acc)),
    )(*args)
    if Mp != M:
        out = out[:, :M, :]
    return out


def _window_max_kernel(x_ref, o_ref):
    # x_ref: [9, TR, 128] -> max over the 9 pooling taps (unrolled, lane-dense vregs)
    m = x_ref[0]
    for t in range(1, x_ref.shape[0]):
        m = jnp.maximum(m, x_ref[t])
    o_ref[...] = m


def maxpool_3x3_s2(x):
    """3x3/stride-2/pad-1 max pool on NHWC.  Taps are flattened and reshaped to a lane-dense
    (rows, 128) layout so every vreg is fully populated and the output store is unmasked."""
    B, H, W, C = x.shape
    k, s, p = 3, 2, 1
    Ho = (H + 2 * p - k) // s + 1
    Wo = (W + 2 * p - k) // s + 1
    xp = jnp.pad(x.astype(jnp.bfloat16), ((0, 0), (p, p), (p, p), (0, 0)),
                 constant_values=-jnp.inf)
    wins = [xp[:, i:i + s * Ho:s, j:j + s * Wo:s, :].reshape(-1)
            for i in range(k) for j in range(k)]
    stacked = jnp.stack(wins, axis=0)                      # (9, B*Ho*Wo*C) bf16
    total = B * Ho * Wo * C
    R = pl.cdiv(total, LANE)
    Rp, TR = _pick_m_tile(R, 2048)
    pad = Rp * LANE - total
    if pad:
        stacked = jnp.pad(stacked, ((0, 0), (0, pad)), constant_values=-jnp.inf)
    stacked = stacked.reshape(k * k, Rp, LANE)

    out = pl.pallas_call(
        _window_max_kernel,
        out_shape=jax.ShapeDtypeStruct((Rp, LANE), jnp.bfloat16),
        grid=(Rp // TR,),
        in_specs=[pl.BlockSpec((k * k, TR, LANE), lambda i: (0, i, 0))],
        out_specs=pl.BlockSpec((TR, LANE), lambda i: (i, 0)),
        compiler_params=pltpu.CompilerParams(
            dimension_semantics=("parallel",), vmem_limit_bytes=_VMEM_LIMIT),
    )(stacked)
    return out.reshape(-1)[:total].reshape(B, Ho, Wo, C)


def _head_tail_kernel(x_ref, w1_ref, b1_ref, w2_ref, b2_ref, o_ref):
    # Per-head tail, head axis is the (parallel) grid axis.  Blocks (head dim squeezed):
    #   x (B, HW, C4) bf16, w1 (C4, Pp) bf16, b1 (1, Pp) f32, w2 (Pp, NCp) bf16, b2 (1, NCp) f32
    x = x_ref[...].astype(jnp.float32)
    feat = jnp.mean(x, axis=1)                            # AdaptiveAvgPool2d((1,1)) + Flatten
    # PFC: Linear + folded BatchNorm1d + ReLU (Dropout(0.5): identity in eval)
    h = jnp.dot(feat.astype(jnp.bfloat16), w1_ref[...],
                preferred_element_type=jnp.float32) + b1_ref[...]
    h = jnp.maximum(h, 0.0)
    # ClsHead: Linear -> logits (lane-dense: N padded to a multiple of 128, sliced in wrapper)
    o_ref[...] = jnp.dot(h.astype(jnp.bfloat16), w2_ref[...],
                         preferred_element_type=jnp.float32) + b2_ref[...]


def head_tail(x, w1, b1, w2, b2):
    """Fused AvgPool+Flatten+PFC+ClsHead for ALL heads in one pallas_call (head grid axis)."""
    NH, B, Hh, Wh, C4 = x.shape
    HW = Hh * Wh
    P = w1.shape[2]
    NCp = w2.shape[2]
    xr = x.reshape(NH, B, HW, C4).astype(jnp.bfloat16)
    return pl.pallas_call(
        _head_tail_kernel,
        out_shape=jax.ShapeDtypeStruct((NH, B, NCp), jnp.float32),
        grid=(NH,),
        in_specs=[
            pl.BlockSpec((None, B, HW, C4), lambda h: (h, 0, 0, 0)),
            pl.BlockSpec((None, C4, P), lambda h: (h, 0, 0)),
            pl.BlockSpec((None, 1, P), lambda h: (h, 0, 0)),
            pl.BlockSpec((None, P, NCp), lambda h: (h, 0, 0)),
            pl.BlockSpec((None, 1, NCp), lambda h: (h, 0, 0)),
        ],
        out_specs=pl.BlockSpec((None, B, NCp), lambda h: (h, 0, 0)),
        compiler_params=pltpu.CompilerParams(
            dimension_semantics=("parallel",), vmem_limit_bytes=_VMEM_LIMIT),
    )(xr, w1.astype(jnp.bfloat16), b1.astype(jnp.float32).reshape(NH, 1, P),
      w2.astype(jnp.bfloat16), b2.astype(jnp.float32).reshape(NH, 1, NCp))


# ---------------------------------------------------------------------------
# Glue: convolution wrapper (the matmul + BN-bias + residual + ReLU run in Pallas)
# ---------------------------------------------------------------------------

def conv_bn(x, wfold, bfold, k, stride, pad, relu, residual=None):
    """x: (NHx,B,H,W,Cin_width) with NHx in {1, NH}; wfold: (NH,k*k*Cin_width,Cout_pad)."""
    NH = wfold.shape[0]
    NHx, B, H, W, C = x.shape
    Ho = (H + 2 * pad - k) // stride + 1
    Wo = (W + 2 * pad - k) // stride + 1
    Cout = wfold.shape[2]

    if k == 1:
        xs = x if stride == 1 else x[:, :, ::stride, ::stride, :]
        patches = xs.reshape(NHx, B * Ho * Wo, C)             # no im2col blow-up for 1x1
    else:
        xp = jnp.pad(x.astype(jnp.bfloat16),
                     ((0, 0), (0, 0), (pad, pad), (pad, pad), (0, 0)))
        cols = []
        for i in range(k):
            for j in range(k):
                cols.append(xp[:, :, i:i + stride * Ho:stride, j:j + stride * Wo:stride, :])
        patches = jnp.concatenate(cols, axis=-1).reshape(NHx, B * Ho * Wo, k * k * C)

    res2 = None
    if residual is not None:
        res2 = residual.reshape(residual.shape[0], B * Ho * Wo, Cout)

    out = bmm_bias(patches, wfold, bfold, residual=res2, relu=relu)
    return out.reshape(NH, B, Ho, Wo, Cout)


# ---------------------------------------------------------------------------
# Deterministic parameter construction (synthetic weights, lane-dense padded)
# ---------------------------------------------------------------------------

_BASE_KEY = jax.random.PRNGKey(0)
_COUNTER = [0]


def _next_key():
    _COUNTER[0] += 1
    return jax.random.fold_in(_BASE_KEY, _COUNTER[0])


def make_conv_bn(cin, cout, k, nh=1, cin_width=None):
    """Conv2d(cin,cout,k,bias=False)+BatchNorm2d(cout) folded for inference, stacked on nh.

    The weight is laid out for im2col features of width `cin_width` (the actual, lane-padded
    activation channel width) and output channels are padded lane-dense to _cpad(cout).
    All padding weights/biases are zero so the logical computation is unchanged."""
    cin_width = cin if cin_width is None else cin_width
    cout_pad = _cpad(cout)
    w = jax.random.normal(_next_key(), (nh, cout, cin, k, k), jnp.float32) / jnp.sqrt(cin * k * k)
    gamma = 1.0 + 0.1 * jax.random.normal(_next_key(), (nh, cout), jnp.float32)
    beta = 0.1 * jax.random.normal(_next_key(), (nh, cout), jnp.float32)
    r_mean = 0.1 * jax.random.normal(_next_key(), (nh, cout), jnp.float32)
    r_var = 1.0 + 0.1 * jax.random.uniform(_next_key(), (nh, cout), jnp.float32)
    scale = gamma / jnp.sqrt(r_var + 1e-5)
    # im2col feature order is (kh, kw, cin) -> reorder torch OIHW weight to (kh,kw,cin,cout)
    w_khwc = jnp.transpose(w, (0, 3, 4, 2, 1)) * scale[:, None, None, None, :]
    w_khwc = jnp.pad(w_khwc, ((0, 0), (0, 0), (0, 0),
                              (0, cin_width - cin), (0, cout_pad - cout)))
    w_mat = w_khwc.reshape(nh, k * k * cin_width, cout_pad)
    b_fold = jnp.pad(beta - r_mean * scale, ((0, 0), (0, cout_pad - cout)))
    return {"w": w_mat, "b": b_fold, "k": k}


def make_linear_bn(cin, cout, nh=1):
    """Linear + BatchNorm1d folded (PFC body), stacked on nh."""
    w = jax.random.normal(_next_key(), (nh, cin, cout), jnp.float32) / jnp.sqrt(cin)
    b = 0.01 * jax.random.normal(_next_key(), (nh, cout), jnp.float32)
    gamma = 1.0 + 0.1 * jax.random.normal(_next_key(), (nh, cout), jnp.float32)
    beta = 0.1 * jax.random.normal(_next_key(), (nh, cout), jnp.float32)
    r_mean = 0.1 * jax.random.normal(_next_key(), (nh, cout), jnp.float32)
    r_var = 1.0 + 0.1 * jax.random.uniform(_next_key(), (nh, cout), jnp.float32)
    scale = gamma / jnp.sqrt(r_var + 1e-5)
    return w * scale[:, None, :], (b - r_mean) * scale + beta


def make_linear(cin, cout, nh=1):
    w = jax.random.normal(_next_key(), (nh, cin, cout), jnp.float32) / jnp.sqrt(cin)
    b = 0.01 * jax.random.normal(_next_key(), (nh, cout), jnp.float32)
    return w, b


def make_bottleneck(cin, mid, cout, stride, nh=1, cin_width=None):
    cin_width = _cpad(cin) if cin_width is None else cin_width
    p = {
        "conv1": make_conv_bn(cin, mid, 1, nh, cin_width=cin_width),
        "conv2": make_conv_bn(mid, mid, 3, nh, cin_width=_cpad(mid)),
        "conv3": make_conv_bn(mid, cout, 1, nh, cin_width=_cpad(mid)),
        "stride": stride,
    }
    if stride != 1 or cin != cout:
        p["downsample"] = make_conv_bn(cin, cout, 1, nh, cin_width=cin_width)
    return p


def run_bottleneck(x, p):
    s = p["stride"]
    out = conv_bn(x, p["conv1"]["w"], p["conv1"]["b"], 1, 1, 0, relu=True)
    out = conv_bn(out, p["conv2"]["w"], p["conv2"]["b"], 3, s, 1, relu=True)
    if "downsample" in p:
        idn = conv_bn(x, p["downsample"]["w"], p["downsample"]["b"], 1, s, 0, relu=False)
    else:
        idn = x
    # conv3 with the residual add + ReLU fused into the matmul epilogue
    return conv_bn(out, p["conv3"]["w"], p["conv3"]["b"], 1, 1, 0, relu=True, residual=idn)


def make_resnet_layer(cin, mid, cout, stride, blocks, nh=1, cin_width=None):
    cin_width = _cpad(cin) if cin_width is None else cin_width
    params = [make_bottleneck(cin, mid, cout, stride, nh, cin_width=cin_width)]
    for _ in range(blocks - 1):
        params.append(make_bottleneck(cout, mid, cout, 1, nh, cin_width=_cpad(cout)))
    return params


def run_resnet_layer(x, layer_params):
    for p in layer_params:
        x = run_bottleneck(x, p)
    return x


# ---------------------------------------------------------------------------
# GroupModel (Pallas)
# ---------------------------------------------------------------------------

# Scaled ResNet50 widths (/16) and truncated depths (see TODO at top of file).
STEM_C = 4
L1 = (4, 16, 1)    # (mid, out, blocks)
L2 = (8, 32, 1)
L3 = (16, 64, 1)
L4 = (32, 128, 1)
PFC_OUT = 16       # PFC 2048->256 scaled /16


class GroupModelPallas:
    def __init__(self, label_groups, num_classes=10, mode="fusion"):
        self.label_groups = label_groups
        self.num_classes = num_classes
        self.mode = mode

        # backbone = IntermediateLayerGetter(resnet50, return_layers={'layer3': 'layer3'})
        self.stem = make_conv_bn(3, STEM_C, 7, nh=1, cin_width=3)
        self.layer1 = make_resnet_layer(STEM_C, L1[0], L1[1], 1, L1[2], nh=1)
        self.layer2 = make_resnet_layer(L1[1], L2[0], L2[1], 2, L2[2], nh=1)
        self.layer3 = make_resnet_layer(L2[1], L3[0], L3[1], 2, L3[2], nh=1)

        # heads: local heads (one per label group) then the global head, all stacked on a
        # leading head axis so layer4 + PFC + ClsHead run as batched Pallas kernels.
        head_nc = []
        if mode in ("local", "fusion"):
            head_nc += [len(g) for g in label_groups]
        if mode in ("global", "fusion"):
            head_nc += [num_classes]
        self.head_nc = head_nc
        self.n_heads = len(head_nc)

        self.layer4 = make_resnet_layer(L3[1], L4[0], L4[1], 2, L4[2], nh=self.n_heads)

        # PFC (folded BN), hidden width padded lane-dense to 128 (zeros in padding)
        P_pad = _cpad(PFC_OUT)
        w1, b1 = make_linear_bn(_cpad(L4[1]), PFC_OUT, nh=self.n_heads)
        self.w1 = jnp.pad(w1, ((0, 0), (0, 0), (0, P_pad - PFC_OUT)))
        self.b1 = jnp.pad(b1, ((0, 0), (0, P_pad - PFC_OUT)))

        # classifier weights padded to a lane-dense (multiple of 128) shared output width
        NC_pad = max(128, _round_up(max(head_nc), 128))
        w2s, b2s = [], []
        for nc in head_nc:
            w, b = make_linear(PFC_OUT, nc, nh=1)
            w2s.append(jnp.pad(w[0], ((0, P_pad - PFC_OUT), (0, NC_pad - nc))))
            b2s.append(jnp.pad(b[0], ((0, NC_pad - nc),)))
        self.w2 = jnp.stack(w2s)         # (NH, P_pad, NC_pad)
        self.b2 = jnp.stack(b2s)         # (NH, NC_pad)
        self.NC_pad = NC_pad

    def __call__(self, x_nchw, training=False):
        b = x_nchw.shape[0]
        x = jnp.transpose(x_nchw, (0, 2, 3, 1)).astype(jnp.bfloat16)[None]   # (1,B,H,W,3)

        # backbone -> 'layer3' features (channels carried lane-dense / 128-padded)
        x = conv_bn(x, self.stem["w"], self.stem["b"], 7, 2, 3, relu=True)
        x = maxpool_3x3_s2(x[0])[None]
        x = run_resnet_layer(x, self.layer1)
        x = run_resnet_layer(x, self.layer2)
        x = run_resnet_layer(x, self.layer3)          # (1, B, h3, w3, 128)

        # all heads batched: layer4 (head-folded 1x1s read layer3 once) + fused head tail
        feat4 = run_resnet_layer(x, self.layer4)      # (NH, B, h4, w4, 128)
        logits = head_tail(feat4, self.w1, self.b1, self.w2, self.b2)   # (NH, B, NC_pad) f32

        global_logit = local_logit = None
        if self.mode in ("local", "fusion"):
            local_logit = jnp.zeros((b, self.num_classes), jnp.float32)
            for i, g in enumerate(self.label_groups):
                local_logit = local_logit.at[:, jnp.array(g)].set(logits[i, :, :len(g)])
        if self.mode in ("global", "fusion"):
            global_logit = logits[-1, :, :self.num_classes]

        if training:
            return local_logit, global_logit
        if local_logit is None:
            return global_logit
        if global_logit is None:
            return local_logit
        return (local_logit + global_logit) / 2.0


# ---------------------------------------------------------------------------

if __name__ == "__main__":
    label_groups = [[0, 1, 2, 3], [4, 5, 6, 7, 8, 9]]
    num_classes = 10
    model = GroupModelPallas(label_groups, num_classes=num_classes, mode="fusion")

    key = jax.random.PRNGKey(0)
    x = jax.random.normal(key, (2, 3, 64, 64), jnp.float32)  # NCHW input (PyTorch convention)

    out = model(x, training=False)   # eval: (local_logit + global_logit) / 2
    out = jax.block_until_ready(out)

    assert out.shape == (2, num_classes)
    assert bool(jnp.all(jnp.isfinite(out)))
    print("KERNEL_OK")
</pallas_src>

<mosaic_0001>
module attributes {stable_mosaic.version = 11 : i64} {
  func.func @_mm_kernel(%arg0: i32, %arg1: i32, %arg2: i32, %arg3: i32, %arg4: memref<1x1024x256xbf16, #tpu.memory_space<vmem>>, %arg5: memref<1x256x128xbf16, #tpu.memory_space<vmem>>, %arg6: memref<1x1x128xf32, #tpu.memory_space<vmem>>, %arg7: memref<1x1024x128xbf16, #tpu.memory_space<vmem>>, %arg8: memref<1024x128xf32, #tpu.memory_space<vmem>>) attributes {dimension_semantics = [#tpu.dimension_semantics<parallel>, #tpu.dimension_semantics<parallel>, #tpu.dimension_semantics<parallel>, #tpu.dimension_semantics<arbitrary>], iteration_bounds = array<i64: 1, 2, 1, 1>, scalar_prefetch = 0 : i64, scratch_operands = 1 : i64, tpu.core_type = #tpu.core_type<tc>, window_params = [{transform_indices = @transform_0, window_bounds = array<i64: 1, 1024, 256>}, {transform_indices = @transform_1, window_bounds = array<i64: 1, 256, 128>}, {transform_indices = @transform_2, window_bounds = array<i64: 1, 1, 128>}, {transform_indices = @transform_3, window_bounds = array<i64: 1, 1024, 128>}]} {
    %c0_i32 = arith.constant 0 : i32
    %0 = arith.cmpi eq, %arg3, %c0_i32 : i32
    %1 = arith.extui %0 : i1 to i32
    %c0_i32_0 = arith.constant 0 : i32
    %2 = arith.cmpi ne, %1, %c0_i32_0 : i32
    scf.if %2 {
      %cst_12 = arith.constant 0.000000e+00 : f32
      %14 = vector.broadcast %cst_12 : f32 to vector<1024x128xf32>
      %c0_13 = arith.constant 0 : index
      %c0_14 = arith.constant 0 : index
      %15 = vector.load %arg8[%c0_13, %c0_14] : memref<1024x128xf32, #tpu.memory_space<vmem>>, vector<1024x128xf32>
      tpu.vector_store %arg8[%c0_13, %c0_14], %14 {strides = array<i32>} : memref<1024x128xf32, #tpu.memory_space<vmem>>, vector<1024x128xf32>,
    } else {
    }
    %c0 = arith.constant 0 : index
    %c0_1 = arith.constant 0 : index
    %3 = vector.load %arg8[%c0, %c0_1] : memref<1024x128xf32, #tpu.memory_space<vmem>>, vector<1024x128xf32>
    %c0_2 = arith.constant 0 : index
    %c0_3 = arith.constant 0 : index
    %c0_4 = arith.constant 0 : index
    %4 = vector.load %arg4[%c0_2, %c0_3, %c0_4] : memref<1x1024x256xbf16, #tpu.memory_space<vmem>>, vector<1x1024x256xbf16>
    %5 = vector.shape_cast %4 : vector<1x1024x256xbf16> to vector<1024x256xbf16>
    %c0_5 = arith.constant 0 : index
    %c0_6 = arith.constant 0 : index
    %c0_7 = arith.constant 0 : index
    %6 = vector.load %arg5[%c0_5, %c0_6, %c0_7] : memref<1x256x128xbf16, #tpu.memory_space<vmem>>, vector<1x256x128xbf16>
    %7 = vector.shape_cast %6 : vector<1x256x128xbf16> to vector<256x128xbf16>
    %cst = arith.constant dense<0.000000e+00> : vector<1024x128xf32>
    %8 = tpu.matmul %5, %7, %cst {dimension_numbers = #tpu.dot_dimension_numbers<[1], [0], [0], [1], [0, 0, 1, 1], [], []>} : vector<1024x256xbf16>, vector<256x128xbf16>, vector<1024x128xf32> -> vector<1024x128xf32>
    %9 = arith.addf %3, %8 : vector<1024x128xf32>
    %c0_8 = arith.constant 0 : index
    %c0_9 = arith.constant 0 : index
    %10 = vector.load %arg8[%c0_8, %c0_9] : memref<1024x128xf32, #tpu.memory_space<vmem>>, vector<1024x128xf32>
    tpu.vector_store %arg8[%c0_8, %c0_9], %9 {strides = array<i32>} : memref<1024x128xf32, #tpu.memory_space<vmem>>, vector<1024x128xf32>,
    %c0_i32_10 = arith.constant 0 : i32
    %11 = arith.cmpi eq, %arg3, %c0_i32_10 : i32
    %12 = arith.extui %11 : i1 to i32
    %c0_i32_11 = arith.constant 0 : i32
    %13 = arith.cmpi ne, %12, %c0_i32_11 : i32
    scf.if %13 {
      %c0_12 = arith.constant 0 : index
      %c0_13 = arith.constant 0 : index
      %14 = vector.load %arg8[%c0_12, %c0_13] : memref<1024x128xf32, #tpu.memory_space<vmem>>, vector<1024x128xf32>
      %c0_14 = arith.constant 0 : index
      %c0_15 = arith.constant 0 : index
      %c0_16 = arith.constant 0 : index
      %15 = vector.load %arg6[%c0_14, %c0_15, %c0_16] : memref<1x1x128xf32, #tpu.memory_space<vmem>>, vector<1x1x128xf32>
      %16 = vector.shape_cast %15 : vector<1x1x128xf32> to vector<1x128xf32>
      %17 = vector.broadcast %16 : vector<1x128xf32> to vector<1024x128xf32>
      %18 = arith.addf %14, %17 : vector<1024x128xf32>
      %cst_17 = arith.constant 0.000000e+00 : f32
      %19 = vector.broadcast %cst_17 : f32 to vector<1024x128xf32>
      %20 = arith.maximumf %18, %19 : vector<1024x128xf32>
      %21 = arith.truncf %20 : vector<1024x128xf32> to vector<1024x128xbf16>
      %c0_18 = arith.constant 0 : index
      %c0_19 = arith.constant 0 : index
      %c0_20 = arith.constant 0 : index
      %22 = vector.load %arg7[%c0_18, %c0_19, %c0_20] : memref<1x1024x128xbf16, #tpu.memory_space<vmem>>, vector<1x1024x128xbf16>
      %23 = vector.shape_cast %22 : vector<1x1024x128xbf16> to vector<1024x128xbf16>
      %24 = vector.shape_cast %21 : vector<1024x128xbf16> to vector<1x1024x128xbf16>
      tpu.vector_store %arg7[%c0_18, %c0_19, %c0_20], %24 {strides = array<i32>} : memref<1x1024x128xbf16, #tpu.memory_space<vmem>>, vector<1x1024x128xbf16>,
    } else {
    }
    return
  }
  func.func @transform_0(%arg0: i32, %arg1: i32, %arg2: i32, %arg3: i32) -> (i32, i32, i32) {
    %c0_i32 = arith.constant 0 : i32
    %c0_i32_0 = arith.constant 0 : i32
    return %c0_i32, %arg1, %arg3 : i32, i32, i32
  }
  func.func @transform_1(%arg0: i32, %arg1: i32, %arg2: i32, %arg3: i32) -> (i32, i32, i32) {
    %c0_i32 = arith.constant 0 : i32
    return %arg0, %arg3, %arg2 : i32, i32, i32
  }
  func.func @transform_2(%arg0: i32, %arg1: i32, %arg2: i32, %arg3: i32) -> (i32, i32, i32) {
    %c0_i32 = arith.constant 0 : i32
    %c0_i32_0 = arith.constant 0 : i32
    return %arg0, %c0_i32, %arg2 : i32, i32, i32
  }
  func.func @transform_3(%arg0: i32, %arg1: i32, %arg2: i32, %arg3: i32) -> (i32, i32, i32) {
    %c0_i32 = arith.constant 0 : i32
    return %arg0, %arg1, %arg2 : i32, i32, i32
  }
}

</mosaic_0001>

<llo_original>
// kernel: tpu_custom_call.1
$region0: #{tpu_custom_call.1}
  #allocation0 [shape = 'u32[]', space=smem, size = 0x4, offset = 0x4, fixed_abs, tag = 'smem constant byte address 0x4 - core index']
  #allocation1 [shape = 'u32[144,128]{1,0:T(1,128)}', space=vmem, size = 0x12000, scoped, tag = 'internal scratch']
  #allocation2 [shape = 'f32[1024,128]{1,0:T(8,128)}', space=vmem, size = 0x80000, scoped, tag = 'scratch operand']
  %s0 = inlined_call_operand.hbm [shape: bf16[1,2048,256], index: 0, kind: input, shape index: {}]
  %s1 = inlined_call_operand.hbm [shape: bf16[1,256,128], index: 1, kind: input, shape index: {}]
  %s2 = inlined_call_operand.hbm [shape: f32[1,1,128], index: 2, kind: input, shape index: {}]
  %s3 = inlined_call_operand.hbm [shape: bf16[1,2048,128], index: 3, kind: output, shape index: {}]
  %s4 = sld [smem:[#allocation0]]
  $region65: #{tpu_custom_call.1} parent=0
    _
  %s6 = ssub.s32 1, %s4
  %s7 = scalar_select 0, %s6, %s4
  $region1: #{tpu_custom_call.1} parent=0
    #allocation3 [shape = 'u8[1048576]{0}', space=vmem, size = 0x100000, scoped, tag = 'input window, operand 0']
    #allocation4 [shape = 's32[2]{0}', space=sflag, size = 0x8, scoped, tag = 'scoped memory for tpu_custom_call.1']
    #allocation5 [shape = 's32[2]{0}', space=sflag, size = 0x8, scoped, tag = 'scoped memory for tpu_custom_call.1']
    #allocation6 [shape = 'u8[65536]{0}', space=vmem, size = 0x10000, scoped, tag = 'input window, operand 1, single buffered']
    #allocation7 [shape = 's32[1]{0}', space=sflag, size = 0x4, scoped, tag = 'scoped memory for tpu_custom_call.1']
    #allocation8 [shape = 'u8[512]{0}', space=vmem, size = 0x400, scoped, tag = 'input window, operand 2, single buffered']
    #allocation9 [shape = 'u8[524288]{0}', space=vmem, size = 0x80000, scoped, tag = 'output window, operand 0']
    %8 = vsyncpa [#allocation4], 0
    %s9 = scalar_lea.sflag [#allocation4], 1
    %10 = vsyncpa %s9, 0
    %11 = vsyncpa [#allocation7], 0
    %12 = vsyncpa [#allocation5], 0
    %s13 = scalar_lea.sflag [#allocation5], 1
    %14 = vsyncpa %s13, 0
    loop: start=0, step=1, limit=4
    $region2: #{tpu_custom_call.1} parent=1 // loop_pre_header
      _
    $region3: #{tpu_custom_call.1} parent=1 // loop_header
      %s16 = sphi 0, %s20
      %p17 = scmp.ge.s32.totalorder %s16, 4
      %s23 = sphi 0, %s49
      %s24 = sphi 0, %s45
      %s25 = sphi 0, %s41
      %s26 = sphi 0, %s37
      %s27 = sphi 0, %s23
      %s28 = sphi 0, %s24
      %s29 = sphi 0, %s25
      %s30 = sphi 0, %s26
      %s31 = sphi 0, %s27
      %s32 = sphi 0, %s28
      %s33 = sphi 0, %s29
      %s34 = sphi 0, %s30
      %s54 = sphi 0, %s56
      %s57 = sphi 0, %s54
      %s58 = sphi 0, %s57
      %s74 = sphi 0, %s58
      %s84 = sphi 0, %s86
      %s87 = sphi 0, %s84
      %s88 = sphi 0, %s87
      %s104 = sphi 0, %s88
      %s112 = sphi 0, %s114
      %s115 = sphi 0, %s112
      %s116 = sphi 0, %s115
      %s132 = sphi 0, %s116
      %s142 = sphi 0, %s144
      %s145 = sphi 0, %s142
      %s146 = sphi 0, %s145
      %s162 = sphi 0, %s146
    $region4: #{tpu_custom_call.1} parent=1 // loop_header_branch
      %19 = sbr.rel (%p17) target = $region8
    $region5: #{tpu_custom_call.1} parent=1 // loop_body
      %s21 = ssub.s32 %s16, 1
      %s22 = ssub.s32 %s16, 2
      %s35 = sadd.s32 1, %s26
      %p36 = scmp.ge.s32.totalorder %s35, 1
      %s37 = scalar_select %p36, 0, %s35
      %s38 = sadd.s32 1, %s25
      %s39 = scalar_select %p36, %s38, %s25
      %p40 = scmp.ge.s32.totalorder %s39, 1
      %s41 = scalar_select %p40, 0, %s39
      %s42 = sadd.s32 1, %s24
      %s43 = scalar_select %p40, %s42, %s24
      %p44 = scmp.ge.s32.totalorder %s43, 2
      %s45 = scalar_select %p44, 0, %s43
      %s46 = sadd.s32 1, %s23
      %s47 = scalar_select %p44, %s46, %s23
      %p48 = scmp.ge.s32.totalorder %s47, 1
      %s49 = scalar_select %p48, 0, %s47
      %s50 = ssub.s32 %s24, %s45
      %s51 = ssub.s32 %s26, %s37
      %s52 = sor.u32 %s50, %s51
      %p53 = scmp.eq.s32.totalorder %s52, 0
      %s55 = sadd.s32 %s54, 1
      %s56 = scalar_select %p53, %s54, %s55
      %p59 = pneg %p53
      %p60 = scmp.eq.s32.totalorder %s16, 1
      %p61 = por %p59, %p60
      %p62 = scmp.ne.s32.totalorder %s54, %s57
      %p63 = scmp.eq.s32.totalorder %s16, 0
      %p64 = por %p62, %p63
      %p65 = scmp.ne.s32.totalorder %s54, %s57
      %p66 = scmp.eq.s32.totalorder %s21, 1
      %p67 = por %p65, %p66
      %p68 = scmp.ne.s32.totalorder %s57, %s58
      %p69 = scmp.eq.s32.totalorder %s21, 0
      %p70 = por %p68, %p69
      %p71 = scmp.ne.s32.totalorder %s57, %s58
      %p72 = scmp.eq.s32.totalorder %s22, 1
      %p73 = por %p71, %p72
      %p75 = scmp.ne.s32.totalorder %s58, %s74
      %p76 = scmp.eq.s32.totalorder %s22, 0
      %p77 = por %p75, %p76
      %s78 = ssub.s32 %s23, %s49
      %s79 = ssub.s32 %s26, %s37
      %s80 = sor.u32 %s78, %s79
      %s81 = ssub.s32 %s25, %s41
      %s82 = sor.u32 %s80, %s81
      %p83 = scmp.eq.s32.totalorder %s82, 0
      %s85 = sadd.s32 %s84, 1
      %s86 = scalar_select %p83, %s84, %s85
      %p89 = pneg %p83
      %p90 = scmp.eq.s32.totalorder %s16, 1
      %p91 = por %p89, %p90
      %p92 = scmp.ne.s32.totalorder %s84, %s87
      %p93 = scmp.eq.s32.totalorder %s16, 0
      %p94 = por %p92, %p93
      %p95 = scmp.ne.s32.totalorder %s84, %s87
      %p96 = scmp.eq.s32.totalorder %s21, 1
      %p97 = por %p95, %p96
      %p98 = scmp.ne.s32.totalorder %s87, %s88
      %p99 = scmp.eq.s32.totalorder %s21, 0
      %p100 = por %p98, %p99
      %p101 = scmp.ne.s32.totalorder %s87, %s88
      %p102 = scmp.eq.s32.totalorder %s22, 1
      %p103 = por %p101, %p102
      %p105 = scmp.ne.s32.totalorder %s88, %s104
      %p106 = scmp.eq.s32.totalorder %s22, 0
      %p107 = por %p105, %p106
      %s108 = ssub.s32 %s23, %s49
      %s109 = ssub.s32 %s25, %s41
      %s110 = sor.u32 %s108, %s109
      %p111 = scmp.eq.s32.totalorder %s110, 0
      %s113 = sadd.s32 %s112, 1
      %s114 = scalar_select %p111, %s112, %s113
      %p117 = pneg %p111
      %p118 = scmp.eq.s32.totalorder %s16, 1
      %p119 = por %p117, %p118
      %p120 = scmp.ne.s32.totalorder %s112, %s115
      %p121 = scmp.eq.s32.totalorder %s16, 0
      %p122 = por %p120, %p121
      %p123 = scmp.ne.s32.totalorder %s112, %s115
      %p124 = scmp.eq.s32.totalorder %s21, 1
      %p125 = por %p123, %p124
      %p126 = scmp.ne.s32.totalorder %s115, %s116
      %p127 = scmp.eq.s32.totalorder %s21, 0
      %p128 = por %p126, %p127
      %p129 = scmp.ne.s32.totalorder %s115, %s116
      %p130 = scmp.eq.s32.totalorder %s22, 1
      %p131 = por %p129, %p130
      %p133 = scmp.ne.s32.totalorder %s116, %s132
      %p134 = scmp.eq.s32.totalorder %s22, 0
      %p135 = por %p133, %p134
      %s136 = ssub.s32 %s23, %s49
      %s137 = ssub.s32 %s24, %s45
      %s138 = sor.u32 %s136, %s137
      %s139 = ssub.s32 %s25, %s41
      %s140 = sor.u32 %s138, %s139
      %p141 = scmp.eq.s32.totalorder %s140, 0
      %s143 = sadd.s32 %s142, 1
      %s144 = scalar_select %p141, %s142, %s143
      %p147 = pneg %p141
      %p148 = scmp.eq.s32.totalorder %s16, 1
      %p149 = por %p147, %p148
      %p150 = scmp.ne.s32.totalorder %s142, %s145
      %p151 = scmp.eq.s32.totalorder %s16, 0
      %p152 = por %p150, %p151
      %p153 = scmp.ne.s32.totalorder %s142, %s145
      %p154 = scmp.eq.s32.totalorder %s21, 1
      %p155 = por %p153, %p154
      %p156 = scmp.ne.s32.totalorder %s145, %s146
      %p157 = scmp.eq.s32.totalorder %s21, 0
      %p158 = por %p156, %p157
      %p159 = scmp.ne.s32.totalorder %s145, %s146
      %p160 = scmp.eq.s32.totalorder %s22, 1
      %p161 = por %p159, %p160
      %p163 = scmp.ne.s32.totalorder %s146, %s162
      %p164 = scmp.eq.s32.totalorder %s22, 0
      %p165 = por %p163, %p164
      %p166 = scmp.le.s32.totalorder 1, %s16
      %p167 = scmp.lt.s32.totalorder %s16, 3
      %p168 = pnand %p166, %p167
      %p169 = pneg %p168
      // Predicated region
      $region9: #{tpu_custom_call.1} parent=5 // pred_check
        _
      $region10: #{tpu_custom_call.1} parent=5 // pred_check_branch
        %171 = sbr.rel (%p168) target = $region12
      $region11: #{tpu_custom_call.1} parent=5 // pred_region
        %s172 = ssub.s32 %s16, 1
        // Predicated region
        $region13: #{tpu_custom_call.1} parent=11 // pred_check
          %p173 = pneg %p100
        $region14: #{tpu_custom_call.1} parent=11 // pred_check_branch
          %175 = sbr.rel (%p173) target = $region16
        $region15: #{tpu_custom_call.1} parent=11 // pred_region
          %s176 = smul.u32 32, %s30
          %s178 = ssub.s32 2048, 2048
          %179 = vsyncadd [#allocation7], %s178
          %s180 = sadd.s32 %s29, %s176
          %s181 = smul.addr %s27, 32
          %s182 = sadd.s32 %s180, %s181
          %s183 = smul.addr %s182, 64
          %s184 = scalar_lea.hbm %s1, %s183
          %s185 = sshll.u32 [#allocation6], 4
          %s186 = int_to_ptr.vmem [resolvable:$true] %s185
          %191 = dma.hbm_to_vmem [thread:$0]  %s184, 2048, %s186, [#allocation7], 64, 64, 4
        $region16: #{tpu_custom_call.1} parent=11 // pred_fallthru
          _
        // Predicated region
        $region17: #{tpu_custom_call.1} parent=11 // pred_check
          %p192 = pneg %p128
        $region18: #{tpu_custom_call.1} parent=11 // pred_check_branch
          %194 = sbr.rel (%p192) target = $region20
        $region19: #{tpu_custom_call.1} parent=11 // pred_region
          %s196 = ssub.s32 16, 16
          %197 = vsyncadd [#allocation7], %s196
          %s198 = sadd.s32 %s29, %s27
          %s199 = smul.addr %s198, 16
          %s200 = scalar_lea.hbm %s2, %s199
          %s202 = sshll.u32 [#allocation8], 4
          %s203 = int_to_ptr.vmem [resolvable:$true] %s202
          %205 = dma.hbm_to_vmem [thread:$0]  %s200, 16, %s203, [#allocation7]
        $region20: #{tpu_custom_call.1} parent=11 // pred_fallthru
          _
      $region12: #{tpu_custom_call.1} parent=5 // pred_fallthru
        _
      %p206 = scmp.lt.s32.totalorder %s16, 2
      // Predicated region
      $region21: #{tpu_custom_call.1} parent=5 // pred_check
        %p207 = pneg %p206
      $region22: #{tpu_custom_call.1} parent=5 // pred_check_branch
        %209 = sbr.rel (%p207) target = $region24
      $region23: #{tpu_custom_call.1} parent=5 // pred_region
        // Predicated region
        $region25: #{tpu_custom_call.1} parent=23 // pred_check
          %p210 = pneg %p64
        $region26: #{tpu_custom_call.1} parent=23 // pred_check_branch
          %212 = sbr.rel (%p210) target = $region28
        $region27: #{tpu_custom_call.1} parent=23 // pred_region
          %s213 = sand.u32 %s54, 1
          %s214 = scalar_lea.sflag [#allocation4], %s213
          %s215 = sand.u32 %s54, 1
          %s216 = smul.addr %s215, 1024
          %s217 = scalar_lea.vmem [#allocation3], %s216
          %s218 = smul.u32 128, %s24
          %s219 = smul.u32 2, %s26
          %s221 = ssub.s32 16384, 16384
          %222 = vsyncadd %s214, %s221
          %s223 = smul.addr %s218, 2
          %s224 = sadd.s32 %s219, %s223
          %s225 = smul.addr %s224, 64
          %s226 = scalar_lea.hbm %s0, %s225
          %s227 = sshll.u32 %s217, 4
          %s228 = int_to_ptr.vmem [resolvable:$true] %s227
          %233 = dma.hbm_to_vmem [thread:$0]  %s226, 16384, %s228, %s214, 128, 128, 8
        $region28: #{tpu_custom_call.1} parent=23 // pred_fallthru
          _
      $region24: #{tpu_custom_call.1} parent=5 // pred_fallthru
        _
      %p234 = scmp.le.s32.totalorder 1, %s16
      %p235 = scmp.lt.s32.totalorder %s16, 3
      %p236 = pnand %p234, %p235
      %p237 = pneg %p236
      // Predicated region
      $region29: #{tpu_custom_call.1} parent=5 // pred_check
        _
      $region30: #{tpu_custom_call.1} parent=5 // pred_check_branch
        %239 = sbr.rel (%p236) target = $region32
      $region31: #{tpu_custom_call.1} parent=5 // pred_region
        %s240 = ssub.s32 %s16, 1
        %s241 = sand.u32 %s57, 1
        %s242 = scalar_lea.sflag [#allocation4], %s241
        %s243 = sand.u32 %s57, 1
        %s244 = smul.addr %s243, 1024
        %s245 = scalar_lea.vmem [#allocation3], %s244
        // Predicated region
        $region33: #{tpu_custom_call.1} parent=31 // pred_check
          %p246 = pneg %p70
        $region34: #{tpu_custom_call.1} parent=31 // pred_check_branch
          %248 = sbr.rel (%p246) target = $region36
        $region35: #{tpu_custom_call.1} parent=31 // pred_region
          %249 = dma.done %s242, 16384
        $region36: #{tpu_custom_call.1} parent=31 // pred_fallthru
          _
        // Predicated region
        $region37: #{tpu_custom_call.1} parent=31 // pred_check
          %p250 = pneg %p100
        $region38: #{tpu_custom_call.1} parent=31 // pred_check_branch
          %252 = sbr.rel (%p250) target = $region40
        $region39: #{tpu_custom_call.1} parent=31 // pred_region
          %253 = dma.done [#allocation7], 2048
        $region40: #{tpu_custom_call.1} parent=31 // pred_fallthru
          _
        // Predicated region
        $region41: #{tpu_custom_call.1} parent=31 // pred_check
          %p254 = pneg %p128
        $region42: #{tpu_custom_call.1} parent=31 // pred_check_branch
          %256 = sbr.rel (%p254) target = $region44
        $region43: #{tpu_custom_call.1} parent=31 // pred_region
          %257 = dma.done [#allocation7], 16
        $region44: #{tpu_custom_call.1} parent=31 // pred_fallthru
          _
        %s258 = sand.u32 %s57, 1
        %s259 = scalar_lea.sflag [#allocation4], %s258
        %s260 = sand.u32 %s57, 1
        %s261 = smul.addr %s260, 1024
        %s262 = scalar_lea.vmem [#allocation3], %s261
        %p263 = pneg %p70
        %p264 = pneg %p67
        %p265 = pneg %p100
        %p266 = pneg %p97
        %p267 = pneg %p128
        %p268 = pneg %p125
        %p269 = pneg %p158
        %p270 = pneg %p155
        %s271 = sand.u32 %s145, 1
        %s272 = scalar_lea.sflag [#allocation5], %s271
        %s273 = sand.u32 %s145, 1
        %s274 = smul.addr %s273, 512
        %s275 = scalar_lea.vmem [#allocation9], %s274
        %s276 = smul.u32 128, %s28
        %s277 = smul.u32 2, %s30
        %s278 = smul.u32 32, %s30
        %s279 = smul.u32 128, %s28
        %p281 = scmp.eq.s32.totalorder %s30, 0
        // Predicated region
        $region45: #{tpu_custom_call.1} parent=31 // pred_check
          %p282 = pneg %p281
        $region46: #{tpu_custom_call.1} parent=31 // pred_check_branch
          %284 = sbr.rel (%p282) target = $region48
        $region47: #{tpu_custom_call.1} parent=31 // pred_region
          %285 = vst [vmem:[#allocation2] sm:$0xff] 0.0
          %286 = vst [vmem:[#allocation2 + $0x8] sm:$0xff] 0.0
          %287 = vst [vmem:[#allocation2 + $0x10] sm:$0xff] 0.0
          %288 = vst [vmem:[#allocation2 + $0x18] sm:$0xff] 0.0
          %289 = vst [vmem:[#allocation2 + $0x20] sm:$0xff] 0.0
          %290 = vst [vmem:[#allocation2 + $0x28] sm:$0xff] 0.0
          %291 = vst [vmem:[#allocation2 + $0x30] sm:$0xff] 0.0
          %292 = vst [vmem:[#allocation2 + $0x38] sm:$0xff] 0.0
          %293 = vst [vmem:[#allocation2 + $0x40] sm:$0xff] 0.0
          %294 = vst [vmem:[#allocation2 + $0x48] sm:$0xff] 0.0
          %295 = vst [vmem:[#allocation2 + $0x50] sm:$0xff] 0.0
          %296 = vst [vmem:[#allocation2 + $0x58] sm:$0xff] 0.0
          %297 = vst [vmem:[#allocation2 + $0x60] sm:$0xff] 0.0
          %298 = vst [vmem:[#allocation2 + $0x68] sm:$0xff] 0.0
          %299 = vst [vmem:[#allocation2 + $0x70] sm:$0xff] 0.0
          %300 = vst [vmem:[#allocation2 + $0x78] sm:$0xff] 0.0
          %301 = vst [vmem:[#allocation2 + $0x80] sm:$0xff] 0.0
          %302 = vst [vmem:[#allocation2 + $0x88] sm:$0xff] 0.0
          %303 = vst [vmem:[#allocation2 + $0x90] sm:$0xff] 0.0
          %304 = vst [vmem:[#allocation2 + $0x98] sm:$0xff] 0.0
          %305 = vst [vmem:[#allocation2 + $0xa0] sm:$0xff] 0.0
          %306 = vst [vmem:[#allocation2 + $0xa8] sm:$0xff] 0.0
          %307 = vst [vmem:[#allocation2 + $0xb0] sm:$0xff] 0.0
          %308 = vst [vmem:[#allocation2 + $0xb8] sm:$0xff] 0.0
          %309 = vst [vmem:[#allocation2 + $0xc0] sm:$0xff] 0.0
          %310 = vst [vmem:[#allocation2 + $0xc8] sm:$0xff] 0.0
          %311 = vst [vmem:[#allocation2 + $0xd0] sm:$0xff] 0.0
          %312 = vst [vmem:[#allocation2 + $0xd8] sm:$0xff] 0.0
          %313 = vst [vmem:[#allocation2 + $0xe0] sm:$0xff] 0.0
          %314 = vst [vmem:[#allocation2 + $0xe8] sm:$0xff] 0.0
          %315 = vst [vmem:[#allocation2 + $0xf0] sm:$0xff] 0.0
          %316 = vst [vmem:[#allocation2 + $0xf8] sm:$0xff] 0.0
          %317 = vst [vmem:[#allocation2 + $0x100] sm:$0xff] 0.0
          %318 = vst [vmem:[#allocation2 + $0x108] sm:$0xff] 0.0
          %319 = vst [vmem:[#allocation2 + $0x110] sm:$0xff] 0.0
          %320 = vst [vmem:[#allocation2 + $0x118] sm:$0xff] 0.0
          %321 = vst [vmem:[#allocation2 + $0x120] sm:$0xff] 0.0
          %322 = vst [vmem:[#allocation2 + $0x128] sm:$0xff] 0.0
          %323 = vst [vmem:[#allocation2 + $0x130] sm:$0xff] 0.0
          %324 = vst [vmem:[#allocation2 + $0x138] sm:$0xff] 0.0
          %325 = vst [vmem:[#allocation2 + $0x140] sm:$0xff] 0.0
          %326 = vst [vmem:[#allocation2 + $0x148] sm:$0xff] 0.0
          %327 = vst [vmem:[#allocation2 + $0x150] sm:$0xff] 0.0
          %328 = vst [vmem:[#allocation2 + $0x158] sm:$0xff] 0.0
          %329 = vst [vmem:[#allocation2 + $0x160] sm:$0xff] 0.0
          %330 = vst [vmem:[#allocation2 + $0x168] sm:$0xff] 0.0
          %331 = vst [vmem:[#allocation2 + $0x170] sm:$0xff] 0.0
          %332 = vst [vmem:[#allocation2 + $0x178] sm:$0xff] 0.0
          %333 = vst [vmem:[#allocation2 + $0x180] sm:$0xff] 0.0
          %334 = vst [vmem:[#allocation2 + $0x188] sm:$0xff] 0.0
          %335 = vst [vmem:[#allocation2 + $0x190] sm:$0xff] 0.0
          %336 = vst [vmem:[#allocation2 + $0x198] sm:$0xff] 0.0
          %337 = vst [vmem:[#allocation2 + $0x1a0] sm:$0xff] 0.0
          %338 = vst [vmem:[#allocation2 + $0x1a8] sm:$0xff] 0.0
          %339 = vst [vmem:[#allocation2 + $0x1b0] sm:$0xff] 0.0
          %340 = vst [vmem:[#allocation2 + $0x1b8] sm:$0xff] 0.0
          %341 = vst [vmem:[#allocation2 + $0x1c0] sm:$0xff] 0.0
          %342 = vst [vmem:[#allocation2 + $0x1c8] sm:$0xff] 0.0
          %343 = vst [vmem:[#allocation2 + $0x1d0] sm:$0xff] 0.0
          %344 = vst [vmem:[#allocation2 + $0x1d8] sm:$0xff] 0.0
          %345 = vst [vmem:[#allocation2 + $0x1e0] sm:$0xff] 0.0
          %346 = vst [vmem:[#allocation2 + $0x1e8] sm:$0xff] 0.0
          %347 = vst [vmem:[#allocation2 + $0x1f0] sm:$0xff] 0.0
          %348 = vst [vmem:[#allocation2 + $0x1f8] sm:$0xff] 0.0
          %349 = vst [vmem:[#allocation2 + $0x200] sm:$0xff] 0.0
          %350 = vst [vmem:[#allocation2 + $0x208] sm:$0xff] 0.0
          %351 = vst [vmem:[#allocation2 + $0x210] sm:$0xff] 0.0
          %352 = vst [vmem:[#allocation2 + $0x218] sm:$0xff] 0.0
          %353 = vst [vmem:[#allocation2 + $0x220] sm:$0xff] 0.0
          %354 = vst [vmem:[#allocation2 + $0x228] sm:$0xff] 0.0
          %355 = vst [vmem:[#allocation2 + $0x230] sm:$0xff] 0.0
          %356 = vst [vmem:[#allocation2 + $0x238] sm:$0xff] 0.0
          %357 = vst [vmem:[#allocation2 + $0x240] sm:$0xff] 0.0
          %358 = vst [vmem:[#allocation2 + $0x248] sm:$0xff] 0.0
          %359 = vst [vmem:[#allocation2 + $0x250] sm:$0xff] 0.0
          %360 = vst [vmem:[#allocation2 + $0x258] sm:$0xff] 0.0
          %361 = vst [vmem:[#allocation2 + $0x260] sm:$0xff] 0.0
          %362 = vst [vmem:[#allocation2 + $0x268] sm:$0xff] 0.0
          %363 = vst [vmem:[#allocation2 + $0x270] sm:$0xff] 0.0
          %364 = vst [vmem:[#allocation2 + $0x278] sm:$0xff] 0.0
          %365 = vst [vmem:[#allocation2 + $0x280] sm:$0xff] 0.0
          %366 = vst [vmem:[#allocation2 + $0x288] sm:$0xff] 0.0
          %367 = vst [vmem:[#allocation2 + $0x290] sm:$0xff] 0.0
          %368 = vst [vmem:[#allocation2 + $0x298] sm:$0xff] 0.0
          %369 = vst [vmem:[#allocation2 + $0x2a0] sm:$0xff] 0.0
          %370 = vst [vmem:[#allocation2 + $0x2a8] sm:$0xff] 0.0
          %371 = vst [vmem:[#allocation2 + $0x2b0] sm:$0xff] 0.0
          %372 = vst [vmem:[#allocation2 + $0x2b8] sm:$0xff] 0.0
          %373 = vst [vmem:[#allocation2 + $0x2c0] sm:$0xff] 0.0
          %374 = vst [vmem:[#allocation2 + $0x2c8] sm:$0xff] 0.0
          %375 = vst [vmem:[#allocation2 + $0x2d0] sm:$0xff] 0.0
          %376 = vst [vmem:[#allocation2 + $0x2d8] sm:$0xff] 0.0
          %377 = vst [vmem:[#allocation2 + $0x2e0] sm:$0xff] 0.0
          %378 = vst [vmem:[#allocation2 + $0x2e8] sm:$0xff] 0.0
          %379 = vst [vmem:[#allocation2 + $0x2f0] sm:$0xff] 0.0
          %380 = vst [vmem:[#allocation2 + $0x2f8] sm:$0xff] 0.0
          %381 = vst [vmem:[#allocation2 + $0x300] sm:$0xff] 0.0
          %382 = vst [vmem:[#allocation2 + $0x308] sm:$0xff] 0.0
          %383 = vst [vmem:[#allocation2 + $0x310] sm:$0xff] 0.0
          %384 = vst [vmem:[#allocation2 + $0x318] sm:$0xff] 0.0
          %385 = vst [vmem:[#allocation2 + $0x320] sm:$0xff] 0.0
          %386 = vst [vmem:[#allocation2 + $0x328] sm:$0xff] 0.0
          %387 = vst [vmem:[#allocation2 + $0x330] sm:$0xff] 0.0
          %388 = vst [vmem:[#allocation2 + $0x338] sm:$0xff] 0.0
          %389 = vst [vmem:[#allocation2 + $0x340] sm:$0xff] 0.0
          %390 = vst [vmem:[#allocation2 + $0x348] sm:$0xff] 0.0
          %391 = vst [vmem:[#allocation2 + $0x350] sm:$0xff] 0.0
          %392 = vst [vmem:[#allocation2 + $0x358] sm:$0xff] 0.0
          %393 = vst [vmem:[#allocation2 + $0x360] sm:$0xff] 0.0
          %394 = vst [vmem:[#allocation2 + $0x368] sm:$0xff] 0.0
          %395 = vst [vmem:[#allocation2 + $0x370] sm:$0xff] 0.0
          %396 = vst [vmem:[#allocation2 + $0x378] sm:$0xff] 0.0
          %397 = vst [vmem:[#allocation2 + $0x380] sm:$0xff] 0.0
          %398 = vst [vmem:[#allocation2 + $0x388] sm:$0xff] 0.0
          %399 = vst [vmem:[#allocation2 + $0x390] sm:$0xff] 0.0
          %400 = vst [vmem:[#allocation2 + $0x398] sm:$0xff] 0.0
          %401 = vst [vmem:[#allocation2 + $0x3a0] sm:$0xff] 0.0
          %402 = vst [vmem:[#allocation2 + $0x3a8] sm:$0xff] 0.0
          %403 = vst [vmem:[#allocation2 + $0x3b0] sm:$0xff] 0.0
          %404 = vst [vmem:[#allocation2 + $0x3b8] sm:$0xff] 0.0
          %405 = vst [vmem:[#allocation2 + $0x3c0] sm:$0xff] 0.0
          %406 = vst [vmem:[#allocation2 + $0x3c8] sm:$0xff] 0.0
          %407 = vst [vmem:[#allocation2 + $0x3d0] sm:$0xff] 0.0
          %408 = vst [vmem:[#allocation2 + $0x3d8] sm:$0xff] 0.0
          %409 = vst [vmem:[#allocation2 + $0x3e0] sm:$0xff] 0.0
          %410 = vst [vmem:[#allocation2 + $0x3e8] sm:$0xff] 0.0
          %411 = vst [vmem:[#allocation2 + $0x3f0] sm:$0xff] 0.0
          %412 = vst [vmem:[#allocation2 + $0x3f8] sm:$0xff] 0.0
        $region48: #{tpu_custom_call.1} parent=31 // pred_fallthru
          _
        %v413 = vld [vmem:[#allocation2] sm:$0xff]
        %v414 = vld [vmem:[#allocation2 + $0x8] sm:$0xff]
        %v415 = vld [vmem:[#allocation2 + $0x10] sm:$0xff]
        %v416 = vld [vmem:[#allocation2 + $0x18] sm:$0xff]
        %v417 = vld [vmem:[#allocation2 + $0x20] sm:$0xff]
        %v418 = vld [vmem:[#allocation2 + $0x28] sm:$0xff]
        %v419 = vld [vmem:[#allocation2 + $0x30] sm:$0xff]
        %v420 = vld [vmem:[#allocation2 + $0x38] sm:$0xff]
        %v421 = vld [vmem:[#allocation2 + $0x40] sm:$0xff]
        %v422 = vld [vmem:[#allocation2 + $0x48] sm:$0xff]
        %v423 = vld [vmem:[#allocation2 + $0x50] sm:$0xff]
        %v424 = vld [vmem:[#allocation2 + $0x58] sm:$0xff]
        %v425 = vld [vmem:[#allocation2 + $0x60] sm:$0xff]
        %v426 = vld [vmem:[#allocation2 + $0x68] sm:$0xff]
        %v427 = vld [vmem:[#allocation2 + $0x70] sm:$0xff]
        %v428 = vld [vmem:[#allocation2 + $0x78] sm:$0xff]
        %v429 = vld [vmem:[#allocation2 + $0x80] sm:$0xff]
        %v430 = vld [vmem:[#allocation2 + $0x88] sm:$0xff]
        %v431 = vld [vmem:[#allocation2 + $0x90] sm:$0xff]
        %v432 = vld [vmem:[#allocation2 + $0x98] sm:$0xff]
        %v433 = vld [vmem:[#allocation2 + $0xa0] sm:$0xff]
        %v434 = vld [vmem:[#allocation2 + $0xa8] sm:$0xff]
        %v435 = vld [vmem:[#allocation2 + $0xb0] sm:$0xff]
        %v436 = vld [vmem:[#allocation2 + $0xb8] sm:$0xff]
        %v437 = vld [vmem:[#allocation2 + $0xc0] sm:$0xff]
        %v438 = vld [vmem:[#allocation2 + $0xc8] sm:$0xff]
        %v439 = vld [vmem:[#allocation2 + $0xd0] sm:$0xff]
        %v440 = vld [vmem:[#allocation2 + $0xd8] sm:$0xff]
        %v441 = vld [vmem:[#allocation2 + $0xe0] sm:$0xff]
        %v442 = vld [vmem:[#allocation2 + $0xe8] sm:$0xff]
        %v443 = vld [vmem:[#allocation2 + $0xf0] sm:$0xff]
        %v444 = vld [vmem:[#allocation2 + $0xf8] sm:$0xff]
        %v445 = vld [vmem:[#allocation2 + $0x100] sm:$0xff]
        %v446 = vld [vmem:[#allocation2 + $0x108] sm:$0xff]
        %v447 = vld [vmem:[#allocation2 + $0x110] sm:$0xff]
        %v448 = vld [vmem:[#allocation2 + $0x118] sm:$0xff]
        %v449 = vld [vmem:[#allocation2 + $0x120] sm:$0xff]
        %v450 = vld [vmem:[#allocation2 + $0x128] sm:$0xff]
        %v451 = vld [vmem:[#allocation2 + $0x130] sm:$0xff]
        %v452 = vld [vmem:[#allocation2 + $0x138] sm:$0xff]
        %v453 = vld [vmem:[#allocation2 + $0x140] sm:$0xff]
        %v454 = vld [vmem:[#allocation2 + $0x148] sm:$0xff]
        %v455 = vld [vmem:[#allocation2 + $0x150] sm:$0xff]
        %v456 = vld [vmem:[#allocation2 + $0x158] sm:$0xff]
        %v457 = vld [vmem:[#allocation2 + $0x160] sm:$0xff]
        %v458 = vld [vmem:[#allocation2 + $0x168] sm:$0xff]
        %v459 = vld [vmem:[#allocation2 + $0x170] sm:$0xff]
        %v460 = vld [vmem:[#allocation2 + $0x178] sm:$0xff]
        %v461 = vld [vmem:[#allocation2 + $0x180] sm:$0xff]
        %v462 = vld [vmem:[#allocation2 + $0x188] sm:$0xff]
        %v463 = vld [vmem:[#allocation2 + $0x190] sm:$0xff]
        %v464 = vld [vmem:[#allocation2 + $0x198] sm:$0xff]
        %v465 = vld [vmem:[#allocation2 + $0x1a0] sm:$0xff]
        %v466 = vld [vmem:[#allocation2 + $0x1a8] sm:$0xff]
        %v467 = vld [vmem:[#allocation2 + $0x1b0] sm:$0xff]
        %v468 = vld [vmem:[#allocation2 + $0x1b8] sm:$0xff]
        %v469 = vld [vmem:[#allocation2 + $0x1c0] sm:$0xff]
        %v470 = vld [vmem:[#allocation2 + $0x1c8] sm:$0xff]
        %v471 = vld [vmem:[#allocation2 + $0x1d0] sm:$0xff]
        %v472 = vld [vmem:[#allocation2 + $0x1d8] sm:$0xff]
        %v473 = vld [vmem:[#allocation2 + $0x1e0] sm:$0xff]
        %v474 = vld [vmem:[#allocation2 + $0x1e8] sm:$0xff]
        %v475 = vld [vmem:[#allocation2 + $0x1f0] sm:$0xff]
        %v476 = vld [vmem:[#allocation2 + $0x1f8] sm:$0xff]
        %v477 = vld [vmem:[#allocation2 + $0x200] sm:$0xff]
        %v478 = vld [vmem:[#allocation2 + $0x208] sm:$0xff]
        %v479 = vld [vmem:[#allocation2 + $0x210] sm:$0xff]
        %v480 = vld [vmem:[#allocation2 + $0x218] sm:$0xff]
        %v481 = vld [vmem:[#allocation2 + $0x220] sm:$0xff]
        %v482 = vld [vmem:[#allocation2 + $0x228] sm:$0xff]
        %v483 = vld [vmem:[#allocation2 + $0x230] sm:$0xff]
        %v484 = vld [vmem:[#allocation2 + $0x238] sm:$0xff]
        %v485 = vld [vmem:[#allocation2 + $0x240] sm:$0xff]
        %v486 = vld [vmem:[#allocation2 + $0x248] sm:$0xff]
        %v487 = vld [vmem:[#allocation2 + $0x250] sm:$0xff]
        %v488 = vld [vmem:[#allocation2 + $0x258] sm:$0xff]
        %v489 = vld [vmem:[#allocation2 + $0x260] sm:$0xff]
        %v490 = vld [vmem:[#allocation2 + $0x268] sm:$0xff]
        %v491 = vld [vmem:[#allocation2 + $0x270] sm:$0xff]
        %v492 = vld [vmem:[#allocation2 + $0x278] sm:$0xff]
        %v493 = vld [vmem:[#allocation2 + $0x280] sm:$0xff]
        %v494 = vld [vmem:[#allocation2 + $0x288] sm:$0xff]
        %v495 = vld [vmem:[#allocation2 + $0x290] sm:$0xff]
        %v496 = vld [vmem:[#allocation2 + $0x298] sm:$0xff]
        %v497 = vld [vmem:[#allocation2 + $0x2a0] sm:$0xff]
        %v498 = vld [vmem:[#allocation2 + $0x2a8] sm:$0xff]
        %v499 = vld [vmem:[#allocation2 + $0x2b0] sm:$0xff]
        %v500 = vld [vmem:[#allocation2 + $0x2b8] sm:$0xff]
        %v501 = vld [vmem:[#allocation2 + $0x2c0] sm:$0xff]
        %v502 = vld [vmem:[#allocation2 + $0x2c8] sm:$0xff]
        %v503 = vld [vmem:[#allocation2 + $0x2d0] sm:$0xff]
        %v504 = vld [vmem:[#allocation2 + $0x2d8] sm:$0xff]
        %v505 = vld [vmem:[#allocation2 + $0x2e0] sm:$0xff]
        %v506 = vld [vmem:[#allocation2 + $0x2e8] sm:$0xff]
        %v507 = vld [vmem:[#allocation2 + $0x2f0] sm:$0xff]
        %v508 = vld [vmem:[#allocation2 + $0x2f8] sm:$0xff]
        %v509 = vld [vmem:[#allocation2 + $0x300] sm:$0xff]
        %v510 = vld [vmem:[#allocation2 + $0x308] sm:$0xff]
        %v511 = vld [vmem:[#allocation2 + $0x310] sm:$0xff]
        %v512 = vld [vmem:[#allocation2 + $0x318] sm:$0xff]
        %v513 = vld [vmem:[#allocation2 + $0x320] sm:$0xff]
        %v514 = vld [vmem:[#allocation2 + $0x328] sm:$0xff]
        %v515 = vld [vmem:[#allocation2 + $0x330] sm:$0xff]
        %v516 = vld [vmem:[#allocation2 + $0x338] sm:$0xff]
        %v517 = vld [vmem:[#allocation2 + $0x340] sm:$0xff]
        %v518 = vld [vmem:[#allocation2 + $0x348] sm:$0xff]
        %v519 = vld [vmem:[#allocation2 + $0x350] sm:$0xff]
        %v520 = vld [vmem:[#allocation2 + $0x358] sm:$0xff]
        %v521 = vld [vmem:[#allocation2 + $0x360] sm:$0xff]
        %v522 = vld [vmem:[#allocation2 + $0x368] sm:$0xff]
        %v523 = vld [vmem:[#allocation2 + $0x370] sm:$0xff]
        %v524 = vld [vmem:[#allocation2 + $0x378] sm:$0xff]
        %v525 = vld [vmem:[#allocation2 + $0x380] sm:$0xff]
        %v526 = vld [vmem:[#allocation2 + $0x388] sm:$0xff]
        %v527 = vld [vmem:[#allocation2 + $0x390] sm:$0xff]
        %v528 = vld [vmem:[#allocation2 + $0x398] sm:$0xff]
        %v529 = vld [vmem:[#allocation2 + $0x3a0] sm:$0xff]
        %v530 = vld [vmem:[#allocation2 + $0x3a8] sm:$0xff]
        %v531 = vld [vmem:[#allocation2 + $0x3b0] sm:$0xff]
        %v532 = vld [vmem:[#allocation2 + $0x3b8] sm:$0xff]
        %v533 = vld [vmem:[#allocation2 + $0x3c0] sm:$0xff]
        %v534 = vld [vmem:[#allocation2 + $0x3c8] sm:$0xff]
        %v535 = vld [vmem:[#allocation2 + $0x3d0] sm:$0xff]
        %v536 = vld [vmem:[#allocation2 + $0x3d8] sm:$0xff]
        %v537 = vld [vmem:[#allocation2 + $0x3e0] sm:$0xff]
        %v538 = vld [vmem:[#allocation2 + $0x3e8] sm:$0xff]
        %v539 = vld [vmem:[#allocation2 + $0x3f0] sm:$0xff]
        %v540 = vld [vmem:[#allocation2 + $0x3f8] sm:$0xff]
        %v541 = vld [vmem:[%s245] sm:$0xff]
        %v542 = vld [vmem:[%s245 + $0x8] sm:$0xff]
        %v543 = vld [vmem:[%s245 + $0x10] sm:$0xff]
        %v544 = vld [vmem:[%s245 + $0x18] sm:$0xff]
        %v545 = vld [vmem:[%s245 + $0x20] sm:$0xff]
        %v546 = vld [vmem:[%s245 + $0x28] sm:$0xff]
        %v547 = vld [vmem:[%s245 + $0x30] sm:$0xff]
        %v548 = vld [vmem:[%s245 + $0x38] sm:$0xff]
        %v549 = vld [vmem:[%s245 + $0x40] sm:$0xff]
        %v550 = vld [vmem:[%s245 + $0x48] sm:$0xff]
        %v551 = vld [vmem:[%s245 + $0x50] sm:$0xff]
        %v552 = vld [vmem:[%s245 + $0x58] sm:$0xff]
        %v553 = vld [vmem:[%s245 + $0x60] sm:$0xff]
        %v554 = vld [vmem:[%s245 + $0x68] sm:$0xff]
        %v555 = vld [vmem:[%s245 + $0x70] sm:$0xff]
        %v556 = vld [vmem:[%s245 + $0x78] sm:$0xff]
        %v557 = vld [vmem:[%s245 + $0x80] sm:$0xff]
        %v558 = vld [vmem:[%s245 + $0x88] sm:$0xff]
        %v559 = vld [vmem:[%s245 + $0x90] sm:$0xff]
        %v560 = vld [vmem:[%s245 + $0x98] sm:$0xff]
        %v561 = vld [vmem:[%s245 + $0xa0] sm:$0xff]
        %v562 = vld [vmem:[%s245 + $0xa8] sm:$0xff]
        %v563 = vld [vmem:[%s245 + $0xb0] sm:$0xff]
        %v564 = vld [vmem:[%s245 + $0xb8] sm:$0xff]
        %v565 = vld [vmem:[%s245 + $0xc0] sm:$0xff]
        %v566 = vld [vmem:[%s245 + $0xc8] sm:$0xff]
        %v567 = vld [vmem:[%s245 + $0xd0] sm:$0xff]
        %v568 = vld [vmem:[%s245 + $0xd8] sm:$0xff]
        %v569 = vld [vmem:[%s245 + $0xe0] sm:$0xff]
        %v570 = vld [vmem:[%s245 + $0xe8] sm:$0xff]
        %v571 = vld [vmem:[%s245 + $0xf0] sm:$0xff]
        %v572 = vld [vmem:[%s245 + $0xf8] sm:$0xff]
        %v573 = vld [vmem:[%s245 + $0x100] sm:$0xff]
        %v574 = vld [vmem:[%s245 + $0x108] sm:$0xff]
        %v575 = vld [vmem:[%s245 + $0x110] sm:$0xff]
        %v576 = vld [vmem:[%s245 + $0x118] sm:$0xff]
        %v577 = vld [vmem:[%s245 + $0x120] sm:$0xff]
        %v578 = vld [vmem:[%s245 + $0x128] sm:$0xff]
        %v579 = vld [vmem:[%s245 + $0x130] sm:$0xff]
        %v580 = vld [vmem:[%s245 + $0x138] sm:$0xff]
        %v581 = vld [vmem:[%s245 + $0x140] sm:$0xff]
        %v582 = vld [vmem:[%s245 + $0x148] sm:$0xff]
        %v583 = vld [vmem:[%s245 + $0x150] sm:$0xff]
        %v584 = vld [vmem:[%s245 + $0x158] sm:$0xff]
        %v585 = vld [vmem:[%s245 + $0x160] sm:$0xff]
        %v586 = vld [vmem:[%s245 + $0x168] sm:$0xff]
        %v587 = vld [vmem:[%s245 + $0x170] sm:$0xff]
        %v588 = vld [vmem:[%s245 + $0x178] sm:$0xff]
        %v589 = vld [vmem:[%s245 + $0x180] sm:$0xff]
        %v590 = vld [vmem:[%s245 + $0x188] sm:$0xff]
        %v591 = vld [vmem:[%s245 + $0x190] sm:$0xff]
        %v592 = vld [vmem:[%s245 + $0x198] sm:$0xff]
        %v593 = vld [vmem:[%s245 + $0x1a0] sm:$0xff]
        %v594 = vld [vmem:[%s245 + $0x1a8] sm:$0xff]
        %v595 = vld [vmem:[%s245 + $0x1b0] sm:$0xff]
        %v596 = vld [vmem:[%s245 + $0x1b8] sm:$0xff]
        %v597 = vld [vmem:[%s245 + $0x1c0] sm:$0xff]
        %v598 = vld [vmem:[%s245 + $0x1c8] sm:$0xff]
        %v599 = vld [vmem:[%s245 + $0x1d0] sm:$0xff]
        %v600 = vld [vmem:[%s245 + $0x1d8] sm:$0xff]
        %v601 = vld [vmem:[%s245 + $0x1e0] sm:$0xff]
        %v602 = vld [vmem:[%s245 + $0x1e8] sm:$0xff]
        %v603 = vld [vmem:[%s245 + $0x1f0] sm:$0xff]
        %v604 = vld [vmem:[%s245 + $0x1f8] sm:$0xff]
        %v605 = vld [vmem:[%s245 + $0x200] sm:$0xff]
        %v606 = vld [vmem:[%s245 + $0x208] sm:$0xff]
        %v607 = vld [vmem:[%s245 + $0x210] sm:$0xff]
        %v608 = vld [vmem:[%s245 + $0x218] sm:$0xff]
        %v609 = vld [vmem:[%s245 + $0x220] sm:$0xff]
        %v610 = vld [vmem:[%s245 + $0x228] sm:$0xff]
        %v611 = vld [vmem:[%s245 + $0x230] sm:$0xff]
        %v612 = vld [vmem:[%s245 + $0x238] sm:$0xff]
        %v613 = vld [vmem:[%s245 + $0x240] sm:$0xff]
        %v614 = vld [vmem:[%s245 + $0x248] sm:$0xff]
        %v615 = vld [vmem:[%s245 + $0x250] sm:$0xff]
        %v616 = vld [vmem:[%s245 + $0x258] sm:$0xff]
        %v617 = vld [vmem:[%s245 + $0x260] sm:$0xff]
        %v618 = vld [vmem:[%s245 + $0x268] sm:$0xff]
        %v619 = vld [vmem:[%s245 + $0x270] sm:$0xff]
        %v620 = vld [vmem:[%s245 + $0x278] sm:$0xff]
        %v621 = vld [vmem:[%s245 + $0x280] sm:$0xff]
        %v622 = vld [vmem:[%s245 + $0x288] sm:$0xff]
        %v623 = vld [vmem:[%s245 + $0x290] sm:$0xff]
        %v624 = vld [vmem:[%s245 + $0x298] sm:$0xff]
        %v625 = vld [vmem:[%s245 + $0x2a0] sm:$0xff]
        %v626 = vld [vmem:[%s245 + $0x2a8] sm:$0xff]
        %v627 = vld [vmem:[%s245 + $0x2b0] sm:$0xff]
        %v628 = vld [vmem:[%s245 + $0x2b8] sm:$0xff]
        %v629 = vld [vmem:[%s245 + $0x2c0] sm:$0xff]
        %v630 = vld [vmem:[%s245 + $0x2c8] sm:$0xff]
        %v631 = vld [vmem:[%s245 + $0x2d0] sm:$0xff]
        %v632 = vld [vmem:[%s245 + $0x2d8] sm:$0xff]
        %v633 = vld [vmem:[%s245 + $0x2e0] sm:$0xff]
        %v634 = vld [vmem:[%s245 + $0x2e8] sm:$0xff]
        %v635 = vld [vmem:[%s245 + $0x2f0] sm:$0xff]
        %v636 = vld [vmem:[%s245 + $0x2f8] sm:$0xff]
        %v637 = vld [vmem:[%s245 + $0x300] sm:$0xff]
        %v638 = vld [vmem:[%s245 + $0x308] sm:$0xff]
        %v639 = vld [vmem:[%s245 + $0x310] sm:$0xff]
        %v640 = vld [vmem:[%s245 + $0x318] sm:$0xff]
        %v641 = vld [vmem:[%s245 + $0x320] sm:$0xff]
        %v642 = vld [vmem:[%s245 + $0x328] sm:$0xff]
        %v643 = vld [vmem:[%s245 + $0x330] sm:$0xff]
        %v644 = vld [vmem:[%s245 + $0x338] sm:$0xff]
        %v645 = vld [vmem:[%s245 + $0x340] sm:$0xff]
        %v646 = vld [vmem:[%s245 + $0x348] sm:$0xff]
        %v647 = vld [vmem:[%s245 + $0x350] sm:$0xff]
        %v648 = vld [vmem:[%s245 + $0x358] sm:$0xff]
        %v649 = vld [vmem:[%s245 + $0x360] sm:$0xff]
        %v650 = vld [vmem:[%s245 + $0x368] sm:$0xff]
        %v651 = vld [vmem:[%s245 + $0x370] sm:$0xff]
        %v652 = vld [vmem:[%s245 + $0x378] sm:$0xff]
        %v653 = vld [vmem:[%s245 + $0x380] sm:$0xff]
        %v654 = vld [vmem:[%s245 + $0x388] sm:$0xff]
        %v655 = vld [vmem:[%s245 + $0x390] sm:$0xff]
        %v656 = vld [vmem:[%s245 + $0x398] sm:$0xff]
        %v657 = vld [vmem:[%s245 + $0x3a0] sm:$0xff]
        %v658 = vld [vmem:[%s245 + $0x3a8] sm:$0xff]
        %v659 = vld [vmem:[%s245 + $0x3b0] sm:$0xff]
        %v660 = vld [vmem:[%s245 + $0x3b8] sm:$0xff]
        %v661 = vld [vmem:[%s245 + $0x3c0] sm:$0xff]
        %v662 = vld [vmem:[%s245 + $0x3c8] sm:$0xff]
        %v663 = vld [vmem:[%s245 + $0x3d0] sm:$0xff]
        %v664 = vld [vmem:[%s245 + $0x3d8] sm:$0xff]
        %v665 = vld [vmem:[%s245 + $0x3e0] sm:$0xff]
        %v666 = vld [vmem:[%s245 + $0x3e8] sm:$0xff]
        %v667 = vld [vmem:[%s245 + $0x3f0] sm:$0xff]
        %v668 = vld [vmem:[%s245 + $0x3f8] sm:$0xff]
        %v669 = vld [vmem:[#allocation6] sm:$0xf]
        %v670 = vld [vmem:[#allocation6 + $0x4] sm:$0xf]
        %v671 = vld [vmem:[#allocation6 + $0x8] sm:$0xf]
        %v672 = vld [vmem:[#allocation6 + $0xc] sm:$0xf]
        %v673 = vld [vmem:[#allocation6 + $0x10] sm:$0xf]
        %v674 = vld [vmem:[#allocation6 + $0x14] sm:$0xf]
        %v675 = vld [vmem:[#allocation6 + $0x18] sm:$0xf]
        %v676 = vld [vmem:[#allocation6 + $0x1c] sm:$0xf]
        %v677 = vld [vmem:[#allocation6 + $0x20] sm:$0xf]
        %v678 = vld [vmem:[#allocation6 + $0x24] sm:$0xf]
        %v679 = vld [vmem:[#allocation6 + $0x28] sm:$0xf]
        %v680 = vld [vmem:[#allocation6 + $0x2c] sm:$0xf]
        %v681 = vld [vmem:[#allocation6 + $0x30] sm:$0xf]
        %v682 = vld [vmem:[#allocation6 + $0x34] sm:$0xf]
        %v683 = vld [vmem:[#allocation6 + $0x38] sm:$0xf]
        %v684 = vld [vmem:[#allocation6 + $0x3c] sm:$0xf]
        %v685 = vld [vmem:[#allocation6 + $0x40] sm:$0xf]
        %v686 = vld [vmem:[#allocation6 + $0x44] sm:$0xf]
        %v687 = vld [vmem:[#allocation6 + $0x48] sm:$0xf]
        %v688 = vld [vmem:[#allocation6 + $0x4c] sm:$0xf]
        %v689 = vld [vmem:[#allocation6 + $0x50] sm:$0xf]
        %v690 = vld [vmem:[#allocation6 + $0x54] sm:$0xf]
        %v691 = vld [vmem:[#allocation6 + $0x58] sm:$0xf]
        %v692 = vld [vmem:[#allocation6 + $0x5c] sm:$0xf]
        %v693 = vld [vmem:[#allocation6 + $0x60] sm:$0xf]
        %v694 = vld [vmem:[#allocation6 + $0x64] sm:$0xf]
        %v695 = vld [vmem:[#allocation6 + $0x68] sm:$0xf]
        %v696 = vld [vmem:[#allocation6 + $0x6c] sm:$0xf]
        %v697 = vld [vmem:[#allocation6 + $0x70] sm:$0xf]
        %v698 = vld [vmem:[#allocation6 + $0x74] sm:$0xf]
        %v699 = vld [vmem:[#allocation6 + $0x78] sm:$0xf]
        %v700 = vld [vmem:[#allocation6 + $0x7c] sm:$0xf]
        %v829 = vunpack.c.l.b16 %v541
        %v830 = vunpack.c.h.b16 %v541
        %v831 = vunpack.c.l.b16 %v542
        %v832 = vunpack.c.h.b16 %v542
        %v833 = vunpack.c.l.b16 %v543
        %v834 = vunpack.c.h.b16 %v543
        %v835 = vunpack.c.l.b16 %v544
        %v836 = vunpack.c.h.b16 %v544
        %v837 = vunpack.c.l.b16 %v545
        %v838 = vunpack.c.h.b16 %v545
        %v839 = vunpack.c.l.b16 %v546
        %v840 = vunpack.c.h.b16 %v546
        %v841 = vunpack.c.l.b16 %v547
        %v842 = vunpack.c.h.b16 %v547
        %v843 = vunpack.c.l.b16 %v548
        %v844 = vunpack.c.h.b16 %v548
        %v845 = vunpack.c.l.b16 %v549
        %v846 = vunpack.c.h.b16 %v549
        %v847 = vunpack.c.l.b16 %v550
        %v848 = vunpack.c.h.b16 %v550
        %v849 = vunpack.c.l.b16 %v551
        %v850 = vunpack.c.h.b16 %v551
        %v851 = vunpack.c.l.b16 %v552
        %v852 = vunpack.c.h.b16 %v552
        %v853 = vunpack.c.l.b16 %v553
        %v854 = vunpack.c.h.b16 %v553
        %v855 = vunpack.c.l.b16 %v554
        %v856 = vunpack.c.h.b16 %v554
        %v857 = vunpack.c.l.b16 %v555
        %v858 = vunpack.c.h.b16 %v555
        %v859 = vunpack.c.l.b16 %v556
        %v860 = vunpack.c.h.b16 %v556
        %v861 = vunpack.c.l.b16 %v557
        %v862 = vunpack.c.h.b16 %v557
        %v863 = vunpack.c.l.b16 %v558
        %v864 = vunpack.c.h.b16 %v558
        %v865 = vunpack.c.l.b16 %v559
        %v866 = vunpack.c.h.b16 %v559
        %v867 = vunpack.c.l.b16 %v560
        %v868 = vunpack.c.h.b16 %v560
        %v869 = vunpack.c.l.b16 %v561
        %v870 = vunpack.c.h.b16 %v561
        %v871 = vunpack.c.l.b16 %v562
        %v872 = vunpack.c.h.b16 %v562
        %v873 = vunpack.c.l.b16 %v563
        %v874 = vunpack.c.h.b16 %v563
        %v875 = vunpack.c.l.b16 %v564
        %v876 = vunpack.c.h.b16 %v564
        %v877 = vunpack.c.l.b16 %v565
        %v878 = vunpack.c.h.b16 %v565
        %v879 = vunpack.c.l.b16 %v566
        %v880 = vunpack.c.h.b16 %v566
        %v881 = vunpack.c.l.b16 %v567
        %v882 = vunpack.c.h.b16 %v567
        %v883 = vunpack.c.l.b16 %v568
        %v884 = vunpack.c.h.b16 %v568
        %v885 = vunpack.c.l.b16 %v569
        %v886 = vunpack.c.h.b16 %v569
        %v887 = vunpack.c.l.b16 %v570
        %v888 = vunpack.c.h.b16 %v570
        %v889 = vunpack.c.l.b16 %v571
        %v890 = vunpack.c.h.b16 %v571
        %v891 = vunpack.c.l.b16 %v572
        %v892 = vunpack.c.h.b16 %v572
        %v893 = vunpack.c.l.b16 %v573
        %v894 = vunpack.c.h.b16 %v573
        %v895 = vunpack.c.l.b16 %v574
        %v896 = vunpack.c.h.b16 %v574
        %v897 = vunpack.c.l.b16 %v575
        %v898 = vunpack.c.h.b16 %v575
        %v899 = vunpack.c.l.b16 %v576
        %v900 = vunpack.c.h.b16 %v576
        %v901 = vunpack.c.l.b16 %v577
        %v902 = vunpack.c.h.b16 %v577
        %v903 = vunpack.c.l.b16 %v578
        %v904 = vunpack.c.h.b16 %v578
        %v905 = vunpack.c.l.b16 %v579
        %v906 = vunpack.c.h.b16 %v579
        %v907 = vunpack.c.l.b16 %v580
        %v908 = vunpack.c.h.b16 %v580
        %v909 = vunpack.c.l.b16 %v581
        %v910 = vunpack.c.h.b16 %v581
        %v911 = vunpack.c.l.b16 %v582
        %v912 = vunpack.c.h.b16 %v582
        %v913 = vunpack.c.l.b16 %v583
        %v914 = vunpack.c.h.b16 %v583
        %v915 = vunpack.c.l.b16 %v584
        %v916 = vunpack.c.h.b16 %v584
        %v917 = vunpack.c.l.b16 %v585
        %v918 = vunpack.c.h.b16 %v585
        %v919 = vunpack.c.l.b16 %v586
        %v920 = vunpack.c.h.b16 %v586
        %v921 = vunpack.c.l.b16 %v587
        %v922 = vunpack.c.h.b16 %v587
        %v923 = vunpack.c.l.b16 %v588
        %v924 = vunpack.c.h.b16 %v588
        %v925 = vunpack.c.l.b16 %v589
        %v926 = vunpack.c.h.b16 %v589
        %v927 = vunpack.c.l.b16 %v590
        %v928 = vunpack.c.h.b16 %v590
        %v929 = vunpack.c.l.b16 %v591
        %v930 = vunpack.c.h.b16 %v591
        %v931 = vunpack.c.l.b16 %v592
        %v932 = vunpack.c.h.b16 %v592
        %v933 = vunpack.c.l.b16 %v593
        %v934 = vunpack.c.h.b16 %v593
        %v935 = vunpack.c.l.b16 %v594
        %v936 = vunpack.c.h.b16 %v594
        %v937 = vunpack.c.l.b16 %v595
        %v938 = vunpack.c.h.b16 %v595
        %v939 = vunpack.c.l.b16 %v596
        %v940 = vunpack.c.h.b16 %v596
        %v941 = vunpack.c.l.b16 %v597
        %v942 = vunpack.c.h.b16 %v597
        %v943 = vunpack.c.l.b16 %v598
        %v944 = vunpack.c.h.b16 %v598
        %v945 = vunpack.c.l.b16 %v599
        %v946 = vunpack.c.h.b16 %v599
        %v947 = vunpack.c.l.b16 %v600
        %v948 = vunpack.c.h.b16 %v600
        %v949 = vunpack.c.l.b16 %v601
        %v950 = vunpack.c.h.b16 %v601
        %v951 = vunpack.c.l.b16 %v602
        %v952 = vunpack.c.h.b16 %v602
        %v953 = vunpack.c.l.b16 %v603
        %v954 = vunpack.c.h.b16 %v603
        %v955 = vunpack.c.l.b16 %v604
        %v956 = vunpack.c.h.b16 %v604
        %v957 = vunpack.c.l.b16 %v605
        %v958 = vunpack.c.h.b16 %v605
        %v959 = vunpack.c.l.b16 %v606
        %v960 = vunpack.c.h.b16 %v606
        %v961 = vunpack.c.l.b16 %v607
        %v962 = vunpack.c.h.b16 %v607
        %v963 = vunpack.c.l.b16 %v608
        %v964 = vunpack.c.h.b16 %v608
        %v965 = vunpack.c.l.b16 %v609
        %v966 = vunpack.c.h.b16 %v609
        %v967 = vunpack.c.l.b16 %v610
        %v968 = vunpack.c.h.b16 %v610
        %v969 = vunpack.c.l.b16 %v611
        %v970 = vunpack.c.h.b16 %v611
        %v971 = vunpack.c.l.b16 %v612
        %v972 = vunpack.c.h.b16 %v612
        %v973 = vunpack.c.l.b16 %v613
        %v974 = vunpack.c.h.b16 %v613
        %v975 = vunpack.c.l.b16 %v614
        %v976 = vunpack.c.h.b16 %v614
        %v977 = vunpack.c.l.b16 %v615
        %v978 = vunpack.c.h.b16 %v615
        %v979 = vunpack.c.l.b16 %v616
        %v980 = vunpack.c.h.b16 %v616
        %v981 = vunpack.c.l.b16 %v617
        %v982 = vunpack.c.h.b16 %v617
        %v983 = vunpack.c.l.b16 %v618
        %v984 = vunpack.c.h.b16 %v618
        %v985 = vunpack.c.l.b16 %v619
        %v986 = vunpack.c.h.b16 %v619
        %v987 = vunpack.c.l.b16 %v620
        %v988 = vunpack.c.h.b16 %v620
        %v989 = vunpack.c.l.b16 %v621
        %v990 = vunpack.c.h.b16 %v621
        %v991 = vunpack.c.l.b16 %v622
        %v992 = vunpack.c.h.b16 %v622
        %v993 = vunpack.c.l.b16 %v623
        %v994 = vunpack.c.h.b16 %v623
        %v995 = vunpack.c.l.b16 %v624
        %v996 = vunpack.c.h.b16 %v624
        %v997 = vunpack.c.l.b16 %v625
        %v998 = vunpack.c.h.b16 %v625
        %v999 = vunpack.c.l.b16 %v626
        %v1000 = vunpack.c.h.b16 %v626
        %v1001 = vunpack.c.l.b16 %v627
        %v1002 = vunpack.c.h.b16 %v627
        %v1003 = vunpack.c.l.b16 %v628
        %v1004 = vunpack.c.h.b16 %v628
        %v1005 = vunpack.c.l.b16 %v629
        %v1006 = vunpack.c.h.b16 %v629
        %v1007 = vunpack.c.l.b16 %v630
        %v1008 = vunpack.c.h.b16 %v630
        %v1009 = vunpack.c.l.b16 %v631
        %v1010 = vunpack.c.h.b16 %v631
        %v1011 = vunpack.c.l.b16 %v632
        %v1012 = vunpack.c.h.b16 %v632
        %v1013 = vunpack.c.l.b16 %v633
        %v1014 = vunpack.c.h.b16 %v633
        %v1015 = vunpack.c.l.b16 %v634
        %v1016 = vunpack.c.h.b16 %v634
        %v1017 = vunpack.c.l.b16 %v635
        %v1018 = vunpack.c.h.b16 %v635
        %v1019 = vunpack.c.l.b16 %v636
        %v1020 = vunpack.c.h.b16 %v636
        %v1021 = vunpack.c.l.b16 %v637
        %v1022 = vunpack.c.h.b16 %v637
        %v1023 = vunpack.c.l.b16 %v638
        %v1024 = vunpack.c.h.b16 %v638
        %v1025 = vunpack.c.l.b16 %v639
        %v1026 = vunpack.c.h.b16 %v639
        %v1027 = vunpack.c.l.b16 %v640
        %v1028 = vunpack.c.h.b16 %v640
        %v1029 = vunpack.c.l.b16 %v641
        %v1030 = vunpack.c.h.b16 %v641
        %v1031 = vunpack.c.l.b16 %v642
        %v1032 = vunpack.c.h.b16 %v642
        %v1033 = vunpack.c.l.b16 %v643
        %v1034 = vunpack.c.h.b16 %v643
        %v1035 = vunpack.c.l.b16 %v644
        %v1036 = vunpack.c.h.b16 %v644
        %v1037 = vunpack.c.l.b16 %v645
        %v1038 = vunpack.c.h.b16 %v645
        %v1039 = vunpack.c.l.b16 %v646
        %v1040 = vunpack.c.h.b16 %v646
        %v1041 = vunpack.c.l.b16 %v647
        %v1042 = vunpack.c.h.b16 %v647
        %v1043 = vunpack.c.l.b16 %v648
        %v1044 = vunpack.c.h.b16 %v648
        %v1045 = vunpack.c.l.b16 %v649
        %v1046 = vunpack.c.h.b16 %v649
        %v1047 = vunpack.c.l.b16 %v650
        %v1048 = vunpack.c.h.b16 %v650
        %v1049 = vunpack.c.l.b16 %v651
        %v1050 = vunpack.c.h.b16 %v651
        %v1051 = vunpack.c.l.b16 %v652
        %v1052 = vunpack.c.h.b16 %v652
        %v1053 = vunpack.c.l.b16 %v653
        %v1054 = vunpack.c.h.b16 %v653
        %v1055 = vunpack.c.l.b16 %v654
        %v1056 = vunpack.c.h.b16 %v654
        %v1057 = vunpack.c.l.b16 %v655
        %v1058 = vunpack.c.h.b16 %v655
        %v1059 = vunpack.c.l.b16 %v656
        %v1060 = vunpack.c.h.b16 %v656
        %v1061 = vunpack.c.l.b16 %v657
        %v1062 = vunpack.c.h.b16 %v657
        %v1063 = vunpack.c.l.b16 %v658
        %v1064 = vunpack.c.h.b16 %v658
        %v1065 = vunpack.c.l.b16 %v659
        %v1066 = vunpack.c.h.b16 %v659
        %v1067 = vunpack.c.l.b16 %v660
        %v1068 = vunpack.c.h.b16 %v660
        %v1069 = vunpack.c.l.b16 %v661
        %v1070 = vunpack.c.h.b16 %v661
        %v1071 = vunpack.c.l.b16 %v662
        %v1072 = vunpack.c.h.b16 %v662
        %v1073 = vunpack.c.l.b16 %v663
        %v1074 = vunpack.c.h.b16 %v663
        %v1075 = vunpack.c.l.b16 %v664
        %v1076 = vunpack.c.h.b16 %v664
        %v1077 = vunpack.c.l.b16 %v665
        %v1078 = vunpack.c.h.b16 %v665
        %v1079 = vunpack.c.l.b16 %v666
        %v1080 = vunpack.c.h.b16 %v666
        %v1081 = vunpack.c.l.b16 %v667
        %v1082 = vunpack.c.h.b16 %v667
        %v1083 = vunpack.c.l.b16 %v668
        %v1084 = vunpack.c.h.b16 %v668
        %v1085 = vpack.c.b16 %v831, %v829
        %v1086 = vpack.c.b16 %v832, %v830
        %v1087 = vpack.c.b16 %v835, %v833
        %v1088 = vpack.c.b16 %v836, %v834
        %v1089 = vpack.c.b16 %v839, %v837
        %v1090 = vpack.c.b16 %v840, %v838
        %v1091 = vpack.c.b16 %v843, %v841
        %v1092 = vpack.c.b16 %v844, %v842
        %v1093 = vpack.c.b16 %v847, %v845
        %v1094 = vpack.c.b16 %v848, %v846
        %v1095 = vpack.c.b16 %v851, %v849
        %v1096 = vpack.c.b16 %v852, %v850
        %v1097 = vpack.c.b16 %v855, %v853
        %v1098 = vpack.c.b16 %v856, %v854
        %v1099 = vpack.c.b16 %v859, %v857
        %v1100 = vpack.c.b16 %v860, %v858
        %v1101 = vpack.c.b16 %v863, %v861
        %v1102 = vpack.c.b16 %v864, %v862
        %v1103 = vpack.c.b16 %v867, %v865
        %v1104 = vpack.c.b16 %v868, %v866
        %v1105 = vpack.c.b16 %v871, %v869
        %v1106 = vpack.c.b16 %v872, %v870
        %v1107 = vpack.c.b16 %v875, %v873
        %v1108 = vpack.c.b16 %v876, %v874
        %v1109 = vpack.c.b16 %v879, %v877
        %v1110 = vpack.c.b16 %v880, %v878
        %v1111 = vpack.c.b16 %v883, %v881
        %v1112 = vpack.c.b16 %v884, %v882
        %v1113 = vpack.c.b16 %v887, %v885
        %v1114 = vpack.c.b16 %v888, %v886
        %v1115 = vpack.c.b16 %v891, %v889
        %v1116 = vpack.c.b16 %v892, %v890
        %v1117 = vpack.c.b16 %v895, %v893
        %v1118 = vpack.c.b16 %v896, %v894
        %v1119 = vpack.c.b16 %v899, %v897
        %v1120 = vpack.c.b16 %v900, %v898
        %v1121 = vpack.c.b16 %v903, %v901
        %v1122 = vpack.c.b16 %v904, %v902
        %v1123 = vpack.c.b16 %v907, %v905
        %v1124 = vpack.c.b16 %v908, %v906
        %v1125 = vpack.c.b16 %v911, %v909
        %v1126 = vpack.c.b16 %v912, %v910
        %v1127 = vpack.c.b16 %v915, %v913
        %v1128 = vpack.c.b16 %v916, %v914
        %v1129 = vpack.c.b16 %v919, %v917
        %v1130 = vpack.c.b16 %v920, %v918
        %v1131 = vpack.c.b16 %v923, %v921
        %v1132 = vpack.c.b16 %v924, %v922
        %v1133 = vpack.c.b16 %v927, %v925
        %v1134 = vpack.c.b16 %v928, %v926
        %v1135 = vpack.c.b16 %v931, %v929
        %v1136 = vpack.c.b16 %v932, %v930
        %v1137 = vpack.c.b16 %v935, %v933
        %v1138 = vpack.c.b16 %v936, %v934
        %v1139 = vpack.c.b16 %v939, %v937
        %v1140 = vpack.c.b16 %v940, %v938
        %v1141 = vpack.c.b16 %v943, %v941
        %v1142 = vpack.c.b16 %v944, %v942
        %v1143 = vpack.c.b16 %v947, %v945
        %v1144 = vpack.c.b16 %v948, %v946
        %v1145 = vpack.c.b16 %v951, %v949
        %v1146 = vpack.c.b16 %v952, %v950
        %v1147 = vpack.c.b16 %v955, %v953
        %v1148 = vpack.c.b16 %v956, %v954
        %v1149 = vpack.c.b16 %v959, %v957
        %v1150 = vpack.c.b16 %v960, %v958
        %v1151 = vpack.c.b16 %v963, %v961
        %v1152 = vpack.c.b16 %v964, %v962
        %v1153 = vpack.c.b16 %v967, %v965
        %v1154 = vpack.c.b16 %v968, %v966
        %v1155 = vpack.c.b16 %v971, %v969
        %v1156 = vpack.c.b16 %v972, %v970
        %v1157 = vpack.c.b16 %v975, %v973
        %v1158 = vpack.c.b16 %v976, %v974
        %v1159 = vpack.c.b16 %v979, %v977
        %v1160 = vpack.c.b16 %v980, %v978
        %v1161 = vpack.c.b16 %v983, %v981
        %v1162 = vpack.c.b16 %v984, %v982
        %v1163 = vpack.c.b16 %v987, %v985
        %v1164 = vpack.c.b16 %v988, %v986
        %v1165 = vpack.c.b16 %v991, %v989
        %v1166 = vpack.c.b16 %v992, %v990
        %v1167 = vpack.c.b16 %v995, %v993
        %v1168 = vpack.c.b16 %v996, %v994
        %v1169 = vpack.c.b16 %v999, %v997
        %v1170 = vpack.c.b16 %v1000, %v998
        %v1171 = vpack.c.b16 %v1003, %v1001
        %v1172 = vpack.c.b16 %v1004, %v1002
        %v1173 = vpack.c.b16 %v1007, %v1005
        %v1174 = vpack.c.b16 %v1008, %v1006
        %v1175 = vpack.c.b16 %v1011, %v1009
        %v1176 = vpack.c.b16 %v1012, %v1010
        %v1177 = vpack.c.b16 %v1015, %v1013
        %v1178 = vpack.c.b16 %v1016, %v1014
        %v1179 = vpack.c.b16 %v1019, %v1017
        %v1180 = vpack.c.b16 %v1020, %v1018
        %v1181 = vpack.c.b16 %v1023, %v1021
        %v1182 = vpack.c.b16 %v1024, %v1022
        %v1183 = vpack.c.b16 %v1027, %v1025
        %v1184 = vpack.c.b16 %v1028, %v1026
        %v1185 = vpack.c.b16 %v1031, %v1029
        %v1186 = vpack.c.b16 %v1032, %v1030
        %v1187 = vpack.c.b16 %v1035, %v1033
        %v1188 = vpack.c.b16 %v1036, %v1034
        %v1189 = vpack.c.b16 %v1039, %v1037
        %v1190 = vpack.c.b16 %v1040, %v1038
        %v1191 = vpack.c.b16 %v1043, %v1041
        %v1192 = vpack.c.b16 %v1044, %v1042
        %v1193 = vpack.c.b16 %v1047, %v1045
        %v1194 = vpack.c.b16 %v1048, %v1046
        %v1195 = vpack.c.b16 %v1051, %v1049
        %v1196 = vpack.c.b16 %v1052, %v1050
        %v1197 = vpack.c.b16 %v1055, %v1053
        %v1198 = vpack.c.b16 %v1056, %v1054
        %v1199 = vpack.c.b16 %v1059, %v1057
        %v1200 = vpack.c.b16 %v1060, %v1058
        %v1201 = vpack.c.b16 %v1063, %v1061
        %v1202 = vpack.c.b16 %v1064, %v1062
        %v1203 = vpack.c.b16 %v1067, %v1065
        %v1204 = vpack.c.b16 %v1068, %v1066
        %v1205 = vpack.c.b16 %v1071, %v1069
        %v1206 = vpack.c.b16 %v1072, %v1070
        %v1207 = vpack.c.b16 %v1075, %v1073
        %v1208 = vpack.c.b16 %v1076, %v1074
        %v1209 = vpack.c.b16 %v1079, %v1077
        %v1210 = vpack.c.b16 %v1080, %v1078
        %v1211 = vpack.c.b16 %v1083, %v1081
        %v1212 = vpack.c.b16 %v1084, %v1082
        %v1373 = vunpack.c.l.b16 %v669
        %v1374 = vunpack.c.l.b16 %v670
        %v1375 = vunpack.c.l.b16 %v671
        %v1376 = vunpack.c.l.b16 %v672
        %v1377 = vunpack.c.l.b16 %v673
        %v1378 = vunpack.c.l.b16 %v674
        %v1379 = vunpack.c.l.b16 %v675
        %v1380 = vunpack.c.l.b16 %v676
        %v1381 = vunpack.c.l.b16 %v677
        %v1382 = vunpack.c.l.b16 %v678
        %v1383 = vunpack.c.l.b16 %v679
        %v1384 = vunpack.c.l.b16 %v680
        %v1385 = vunpack.c.l.b16 %v681
        %v1386 = vunpack.c.l.b16 %v682
        %v1387 = vunpack.c.l.b16 %v683
        %v1388 = vunpack.c.l.b16 %v684
        %v1389 = vunpack.c.l.b16 %v685
        %v1390 = vunpack.c.l.b16 %v686
        %v1391 = vunpack.c.l.b16 %v687
        %v1392 = vunpack.c.l.b16 %v688
        %v1393 = vunpack.c.l.b16 %v689
        %v1394 = vunpack.c.l.b16 %v690
        %v1395 = vunpack.c.l.b16 %v691
        %v1396 = vunpack.c.l.b16 %v692
        %v1397 = vunpack.c.l.b16 %v693
        %v1398 = vunpack.c.l.b16 %v694
        %v1399 = vunpack.c.l.b16 %v695
        %v1400 = vunpack.c.l.b16 %v696
        %v1401 = vunpack.c.l.b16 %v697
        %v1402 = vunpack.c.l.b16 %v698
        %v1403 = vunpack.c.l.b16 %v699
        %v1404 = vunpack.c.l.b16 %v700
        %v1405 = vpack.c.b16 %v1374, %v1373
        %v1406 = vpack.c.b16 %v1376, %v1375
        %v1407 = vpack.c.b16 %v1378, %v1377
        %v1408 = vpack.c.b16 %v1380, %v1379
        %v1409 = vpack.c.b16 %v1382, %v1381
        %v1410 = vpack.c.b16 %v1384, %v1383
        %v1411 = vpack.c.b16 %v1386, %v1385
        %v1412 = vpack.c.b16 %v1388, %v1387
        %v1413 = vpack.c.b16 %v1390, %v1389
        %v1414 = vpack.c.b16 %v1392, %v1391
        %v1415 = vpack.c.b16 %v1394, %v1393
        %v1416 = vpack.c.b16 %v1396, %v1395
        %v1417 = vpack.c.b16 %v1398, %v1397
        %v1418 = vpack.c.b16 %v1400, %v1399
        %v1419 = vpack.c.b16 %v1402, %v1401
        %v1420 = vpack.c.b16 %v1404, %v1403
        %1437 = vmatprep.subr.bf16.mxu0 0
        %1438 = vmatpush1.bf16.msra.mxu0 %v1405
        %1439 = vmatprep.subr.bf16.mxu0 0
        %1440 = vmatpush1.bf16.msra.mxu0 %v1406
        %1441 = vmatprep.subr.bf16.mxu0 0
        %1442 = vmatpush1.bf16.msra.mxu0 %v1407
        %1443 = vmatprep.subr.bf16.mxu0 0
        %1444 = vmatpush1.bf16.msra.mxu0 %v1408
        %1445 = vmatprep.subr.bf16.mxu0 0
        %1446 = vmatpush1.bf16.msra.mxu0 %v1409
        %1447 = vmatprep.subr.bf16.mxu0 0
        %1448 = vmatpush1.bf16.msra.mxu0 %v1410
        %1449 = vmatprep.subr.bf16.mxu0 0
        %1450 = vmatpush1.bf16.msra.mxu0 %v1411
        %1451 = vmatprep.subr.bf16.mxu0 0
        %1452 = vmatpush1.bf16.msra.mxu0 %v1412
        %1453 = vmatprep.subr.bf16.mxu0 0
        %1454 = vmatpush1.bf16.msra.mxu0 %v1413
        %1455 = vmatprep.subr.bf16.mxu0 0
        %1456 = vmatpush1.bf16.msra.mxu0 %v1414
        %1457 = vmatprep.subr.bf16.mxu0 0
        %1458 = vmatpush1.bf16.msra.mxu0 %v1415
        %1459 = vmatprep.subr.bf16.mxu0 0
        %1460 = vmatpush1.bf16.msra.mxu0 %v1416
        %1461 = vmatprep.subr.bf16.mxu0 0
        %1462 = vmatpush1.bf16.msra.mxu0 %v1417
        %1463 = vmatprep.subr.bf16.mxu0 0
        %1464 = vmatpush1.bf16.msra.mxu0 %v1418
        %1465 = vmatprep.subr.bf16.mxu0 0
        %1466 = vmatpush1.bf16.msra.mxu0 %v1419
        %1467 = vmatprep.subr.bf16.mxu0 0
        %1468 = vmatpush1.bf16.msra.mxu0 %v1420
        %1469 = vmatprep.mubr.bf16.mxu0 %v1086
        %1470 = vmatmul.mubr.bf16.gmra.mrb[0].mxu0 %v1085
        %v1471 = vpop.f32.mrb[0].mxu0
        %v1472 = vadd.f32 0.0, %v1471
        %v1473 = vpop.f32.mrb[0].mxu0
        %v1474 = vpop.f32.mrb[0].mxu0
        %v1475 = vadd.f32 0.0, %v1474
        %v1476 = vpop.f32.mrb[0].mxu0
        %1477 = vmatprep.mubr.bf16.mxu0 %v1088
        %1478 = vmatmul.mubr.bf16.gmra.mrb[0].mxu0 %v1087
        %v1479 = vpop.f32.mrb[0].mxu0
        %v1480 = vadd.f32 0.0, %v1479
        %v1481 = vpop.f32.mrb[0].mxu0
        %v1482 = vpop.f32.mrb[0].mxu0
        %v1483 = vadd.f32 0.0, %v1482
        %v1484 = vpop.f32.mrb[0].mxu0
        %1485 = vmatprep.mubr.bf16.mxu0 %v1090
        %1486 = vmatmul.mubr.bf16.gmra.mrb[0].mxu0 %v1089
        %v1487 = vpop.f32.mrb[0].mxu0
        %v1488 = vadd.f32 0.0, %v1487
        %v1489 = vpop.f32.mrb[0].mxu0
        %v1490 = vpop.f32.mrb[0].mxu0
        %v1491 = vadd.f32 0.0, %v1490
        %v1492 = vpop.f32.mrb[0].mxu0
        %1493 = vmatprep.mubr.bf16.mxu0 %v1092
        %1494 = vmatmul.mubr.bf16.gmra.mrb[0].mxu0 %v1091
        %v1495 = vpop.f32.mrb[0].mxu0
        %v1496 = vadd.f32 0.0, %v1495
        %v1497 = vpop.f32.mrb[0].mxu0
        %v1498 = vpop.f32.mrb[0].mxu0
        %v1499 = vadd.f32 0.0, %v1498
        %v1500 = vpop.f32.mrb[0].mxu0
        %1501 = vmatprep.mubr.bf16.mxu0 %v1094
        %1502 = vmatmul.mubr.bf16.gmra.mrb[0].mxu0 %v1093
        %v1503 = vpop.f32.mrb[0].mxu0
        %v1504 = vadd.f32 0.0, %v1503
        %v1505 = vpop.f32.mrb[0].mxu0
        %v1506 = vpop.f32.mrb[0].mxu0
        %v1507 = vadd.f32 0.0, %v1506
        %v1508 = vpop.f32.mrb[0].mxu0
        %1509 = vmatprep.mubr.bf16.mxu0 %v1096
        %1510 = vmatmul.mubr.bf16.gmra.mrb[0].mxu0 %v1095
        %v1511 = vpop.f32.mrb[0].mxu0
        %v1512 = vadd.f32 0.0, %v1511
        %v1513 = vpop.f32.mrb[0].mxu0
        %v1514 = vpop.f32.mrb[0].mxu0
        %v1515 = vadd.f32 0.0, %v1514
        %v1516 = vpop.f32.mrb[0].mxu0
        %1517 = vmatprep.mubr.bf16.mxu0 %v1098
        %1518 = vmatmul.mubr.bf16.gmra.mrb[0].mxu0 %v1097
        %v1519 = vpop.f32.mrb[0].mxu0
        %v1520 = vadd.f32 0.0, %v1519
        %v1521 = vpop.f32.mrb[0].mxu0
        %v1522 = vpop.f32.mrb[0].mxu0
        %v1523 = vadd.f32 0.0, %v1522
        %v1524 = vpop.f32.mrb[0].mxu0
        %1525 = vmatprep.mubr.bf16.mxu0 %v1100
        %1526 = vmatmul.mubr.bf16.gmra.mrb[0].mxu0 %v1099
        %v1527 = vpop.f32.mrb[0].mxu0
        %v1528 = vadd.f32 0.0, %v1527
        %v1529 = vpop.f32.mrb[0].mxu0
        %v1530 = vpop.f32.mrb[0].mxu0
        %v1531 = vadd.f32 0.0, %v1530
        %v1532 = vpop.f32.mrb[0].mxu0
        %1533 = vmatprep.mubr.bf16.mxu0 %v1102
        %1534 = vmatmul.mubr.bf16.gmra.mrb[0].mxu0 %v1101
        %v1535 = vpop.f32.mrb[0].mxu0
        %v1536 = vadd.f32 0.0, %v1535
        %v1537 = vpop.f32.mrb[0].mxu0
        %v1538 = vpop.f32.mrb[0].mxu0
        %v1539 = vadd.f32 0.0, %v1538
        %v1540 = vpop.f32.mrb[0].mxu0
        %1541 = vmatprep.mubr.bf16.mxu0 %v1104
        %1542 = vmatmul.mubr.bf16.gmra.mrb[0].mxu0 %v1103
        %v1543 = vpop.f32.mrb[0].mxu0
        %v1544 = vadd.f32 0.0, %v1543
        %v1545 = vpop.f32.mrb[0].mxu0
        %v1546 = vpop.f32.mrb[0].mxu0
        %v1547 = vadd.f32 0.0, %v1546
        %v1548 = vpop.f32.mrb[0].mxu0
        %1549 = vmatprep.mubr.bf16.mxu0 %v1106
        %1550 = vmatmul.mubr.bf16.gmra.mrb[0].mxu0 %v1105
        %v1551 = vpop.f32.mrb[0].mxu0
        %v1552 = vadd.f32 0.0, %v1551
        %v1553 = vpop.f32.mrb[0].mxu0
        %v1554 = vpop.f32.mrb[0].mxu0
        %v1555 = vadd.f32 0.0, %v1554
        %v1556 = vpop.f32.mrb[0].mxu0
        %1557 = vmatprep.mubr.bf16.mxu0 %v1108
        %1558 = vmatmul.mubr.bf16.gmra.mrb[0].mxu0 %v1107
        %v1559 = vpop.f32.mrb[0].mxu0
        %v1560 = vadd.f32 0.0, %v1559
        %v1561 = vpop.f32.mrb[0].mxu0
        %v1562 = vpop.f32.mrb[0].mxu0
        %v1563 = vadd.f32 0.0, %v1562
        %v1564 = vpop.f32.mrb[0].mxu0
        %1565 = vmatprep.mubr.bf16.mxu0 %v1110
        %1566 = vmatmul.mubr.bf16.gmra.mrb[0].mxu0 %v1109
        %v1567 = vpop.f32.mrb[0].mxu0
        %v1568 = vadd.f32 0.0, %v1567
        %v1569 = vpop.f32.mrb[0].mxu0
        %v1570 = vpop.f32.mrb[0].mxu0
        %v1571 = vadd.f32 0.0, %v1570
        %v1572 = vpop.f32.mrb[0].mxu0
        %1573 = vmatprep.mubr.bf16.mxu0 %v1112
        %1574 = vmatmul.mubr.bf16.gmra.mrb[0].mxu0 %v1111
        %v1575 = vpop.f32.mrb[0].mxu0
        %v1576 = vadd.f32 0.0, %v1575
        %v1577 = vpop.f32.mrb[0].mxu0
        %v1578 = vpop.f32.mrb[0].mxu0
        %v1579 = vadd.f32 0.0, %v1578
        %v1580 = vpop.f32.mrb[0].mxu0
        %1581 = vmatprep.mubr.bf16.mxu0 %v1114
        %1582 = vmatmul.mubr.bf16.gmra.mrb[0].mxu0 %v1113
        %v1583 = vpop.f32.mrb[0].mxu0
        %v1584 = vadd.f32 0.0, %v1583
        %v1585 = vpop.f32.mrb[0].mxu0
        %v1586 = vpop.f32.mrb[0].mxu0
        %v1587 = vadd.f32 0.0, %v1586
        %v1588 = vpop.f32.mrb[0].mxu0
        %1589 = vmatprep.mubr.bf16.mxu0 %v1116
        %1590 = vmatmul.mubr.bf16.gmra.mrb[0].mxu0 %v1115
        %v1591 = vpop.f32.mrb[0].mxu0
        %v1592 = vadd.f32 0.0, %v1591
        %v1593 = vpop.f32.mrb[0].mxu0
        %v1594 = vpop.f32.mrb[0].mxu0
        %v1595 = vadd.f32 0.0, %v1594
        %v1596 = vpop.f32.mrb[0].mxu0
        %1597 = vmatprep.mubr.bf16.mxu0 %v1118
        %1598 = vmatmul.mubr.bf16.gmra.mrb[0].mxu0 %v1117
        %v1599 = vpop.f32.mrb[0].mxu0
        %v1600 = vadd.f32 0.0, %v1599
        %v1601 = vpop.f32.mrb[0].mxu0
        %v1602 = vpop.f32.mrb[0].mxu0
        %v1603 = vadd.f32 0.0, %v1602
        %v1604 = vpop.f32.mrb[0].mxu0
        %1605 = vmatprep.mubr.bf16.mxu0 %v1120
        %1606 = vmatmul.mubr.bf16.gmra.mrb[0].mxu0 %v1119
        %v1607 = vpop.f32.mrb[0].mxu0
        %v1608 = vadd.f32 0.0, %v1607
        %v1609 = vpop.f32.mrb[0].mxu0
        %v1610 = vpop.f32.mrb[0].mxu0
        %v1611 = vadd.f32 0.0, %v1610
        %v1612 = vpop.f32.mrb[0].mxu0
        %1613 = vmatprep.mubr.bf16.mxu0 %v1122
        %1614 = vmatmul.mubr.bf16.gmra.mrb[0].mxu0 %v1121
        %v1615 = vpop.f32.mrb[0].mxu0
        %v1616 = vadd.f32 0.0, %v1615
        %v1617 = vpop.f32.mrb[0].mxu0
        %v1618 = vpop.f32.mrb[0].mxu0
        %v1619 = vadd.f32 0.0, %v1618
        %v1620 = vpop.f32.mrb[0].mxu0
        %1621 = vmatprep.mubr.bf16.mxu0 %v1124
        %1622 = vmatmul.mubr.bf16.gmra.mrb[0].mxu0 %v1123
        %v1623 = vpop.f32.mrb[0].mxu0
        %v1624 = vadd.f32 0.0, %v1623
        %v1625 = vpop.f32.mrb[0].mxu0
        %v1626 = vpop.f32.mrb[0].mxu0
        %v1627 = vadd.f32 0.0, %v1626
        %v1628 = vpop.f32.mrb[0].mxu0
        %1629 = vmatprep.mubr.bf16.mxu0 %v1126
        %1630 = vmatmul.mubr.bf16.gmra.mrb[0].mxu0 %v1125
        %v1631 = vpop.f32.mrb[0].mxu0
        %v1632 = vadd.f32 0.0, %v1631
        %v1633 = vpop.f32.mrb[0].mxu0
        %v1634 = vpop.f32.mrb[0].mxu0
        %v1635 = vadd.f32 0.0, %v1634
        %v1636 = vpop.f32.mrb[0].mxu0
        %1637 = vmatprep.mubr.bf16.mxu0 %v1128
        %1638 = vmatmul.mubr.bf16.gmra.mrb[0].mxu0 %v1127
        %v1639 = vpop.f32.mrb[0].mxu0
        %v1640 = vadd.f32 0.0, %v1639
        %v1641 = vpop.f32.mrb[0].mxu0
        %v1642 = vpop.f32.mrb[0].mxu0
        %v1643 = vadd.f32 0.0, %v1642
        %v1644 = vpop.f32.mrb[0].mxu0
        %1645 = vmatprep.mubr.bf16.mxu0 %v1130
        %1646 = vmatmul.mubr.bf16.gmra.mrb[0].mxu0 %v1129
        %v1647 = vpop.f32.mrb[0].mxu0
        %v1648 = vadd.f32 0.0, %v1647
        %v1649 = vpop.f32.mrb[0].mxu0
        %v1650 = vpop.f32.mrb[0].mxu0
        %v1651 = vadd.f32 0.0, %v1650
        %v1652 = vpop.f32.mrb[0].mxu0
        %1653 = vmatprep.mubr.bf16.mxu0 %v1132
        %1654 = vmatmul.mubr.bf16.gmra.mrb[0].mxu0 %v1131
        %v1655 = vpop.f32.mrb[0].mxu0
        %v1656 = vadd.f32 0.0, %v1655
        %v1657 = vpop.f32.mrb[0].mxu0
        %v1658 = vpop.f32.mrb[0].mxu0
        %v1659 = vadd.f32 0.0, %v1658
        %v1660 = vpop.f32.mrb[0].mxu0
        %1661 = vmatprep.mubr.bf16.mxu0 %v1134
        %1662 = vmatmul.mubr.bf16.gmra.mrb[0].mxu0 %v1133
        %v1663 = vpop.f32.mrb[0].mxu0
        %v1664 = vadd.f32 0.0, %v1663
        %v1665 = vpop.f32.mrb[0].mxu0
        %v1666 = vpop.f32.mrb[0].mxu0
        %v1667 = vadd.f32 0.0, %v1666
        %v1668 = vpop.f32.mrb[0].mxu0
        %1669 = vmatprep.mubr.bf16.mxu0 %v1136
        %1670 = vmatmul.mubr.bf16.gmra.mrb[0].mxu0 %v1135
        %v1671 = vpop.f32.mrb[0].mxu0
        %v1672 = vadd.f32 0.0, %v1671
        %v1673 = vpop.f32.mrb[0].mxu0
        %v1674 = vpop.f32.mrb[0].mxu0
        %v1675 = vadd.f32 0.0, %v1674
        %v1676 = vpop.f32.mrb[0].mxu0
        %1677 = vmatprep.mubr.bf16.mxu0 %v1138
        %1678 = vmatmul.mubr.bf16.gmra.mrb[0].mxu0 %v1137
        %v1679 = vpop.f32.mrb[0].mxu0
        %v1680 = vadd.f32 0.0, %v1679
        %v1681 = vpop.f32.mrb[0].mxu0
        %v1682 = vpop.f32.mrb[0].mxu0
        %v1683 = vadd.f32 0.0, %v1682
        %v1684 = vpop.f32.mrb[0].mxu0
        %1685 = vmatprep.mubr.bf16.mxu0 %v1140
        %1686 = vmatmul.mubr.bf16.gmra.mrb[0].mxu0 %v1139
        %v1687 = vpop.f32.mrb[0].mxu0
        %v1688 = vadd.f32 0.0, %v1687
        %v1689 = vpop.f32.mrb[0].mxu0
        %v1690 = vpop.f32.mrb[0].mxu0
        %v1691 = vadd.f32 0.0, %v1690
        %v1692 = vpop.f32.mrb[0].mxu0
        %1693 = vmatprep.mubr.bf16.mxu0 %v1142
        %1694 = vmatmul.mubr.bf16.gmra.mrb[0].mxu0 %v1141
        %v1695 = vpop.f32.mrb[0].mxu0
        %v1696 = vadd.f32 0.0, %v1695
        %v1697 = vpop.f32.mrb[0].mxu0
        %v1698 = vpop.f32.mrb[0].mxu0
        %v1699 = vadd.f32 0.0, %v1698
        %v1700 = vpop.f32.mrb[0].mxu0
        %1701 = vmatprep.mubr.bf16.mxu0 %v1144
        %1702 = vmatmul.mubr.bf16.gmra.mrb[0].mxu0 %v1143
        %v1703 = vpop.f32.mrb[0].mxu0
        %v1704 = vadd.f32 0.0, %v1703
        %v1705 = vpop.f32.mrb[0].mxu0
        %v1706 = vpop.f32.mrb[0].mxu0
        %v1707 = vadd.f32 0.0, %v1706
        %v1708 = vpop.f32.mrb[0].mxu0
        %1709 = vmatprep.mubr.bf16.mxu0 %v1146
        %1710 = vmatmul.mubr.bf16.gmra.mrb[0].mxu0 %v1145
        %v1711 = vpop.f32.mrb[0].mxu0
        %v1712 = vadd.f32 0.0, %v1711
        %v1713 = vpop.f32.mrb[0].mxu0
        %v1714 = vpop.f32.mrb[0].mxu0
        %v1715 = vadd.f32 0.0, %v1714
        %v1716 = vpop.f32.mrb[0].mxu0
        %1717 = vmatprep.mubr.bf16.mxu0 %v1148
        %1718 = vmatmul.mubr.bf16.gmra.mrb[0].mxu0 %v1147
        %v1719 = vpop.f32.mrb[0].mxu0
        %v1720 = vadd.f32 0.0, %v1719
        %v1721 = vpop.f32.mrb[0].mxu0
        %v1722 = vpop.f32.mrb[0].mxu0
        %v1723 = vadd.f32 0.0, %v1722
        %v1724 = vpop.f32.mrb[0].mxu0
        %1725 = vmatprep.mubr.bf16.mxu0 %v1150
        %1726 = vmatmul.mubr.bf16.gmra.mrb[0].mxu0 %v1149
        %v1727 = vpop.f32.mrb[0].mxu0
        %v1728 = vadd.f32 0.0, %v1727
        %v1729 = vpop.f32.mrb[0].mxu0
        %v1730 = vpop.f32.mrb[0].mxu0
        %v1731 = vadd.f32 0.0, %v1730
        %v1732 = vpop.f32.mrb[0].mxu0
        %1733 = vmatprep.mubr.bf16.mxu0 %v1152
        %1734 = vmatmul.mubr.bf16.gmra.mrb[0].mxu0 %v1151
        %v1735 = vpop.f32.mrb[0].mxu0
        %v1736 = vadd.f32 0.0, %v1735
        %v1737 = vpop.f32.mrb[0].mxu0
        %v1738 = vpop.f32.mrb[0].mxu0
        %v1739 = vadd.f32 0.0, %v1738
        %v1740 = vpop.f32.mrb[0].mxu0
        %1741 = vmatprep.mubr.bf16.mxu0 %v1154
        %1742 = vmatmul.mubr.bf16.gmra.mrb[0].mxu0 %v1153
        %v1743 = vpop.f32.mrb[0].mxu0
        %v1744 = vadd.f32 0.0, %v1743
        %v1745 = vpop.f32.mrb[0].mxu0
        %v1746 = vpop.f32.mrb[0].mxu0
        %v1747 = vadd.f32 0.0, %v1746
        %v1748 = vpop.f32.mrb[0].mxu0
        %1749 = vmatprep.mubr.bf16.mxu0 %v1156
        %1750 = vmatmul.mubr.bf16.gmra.mrb[0].mxu0 %v1155
        %v1751 = vpop.f32.mrb[0].mxu0
        %v1752 = vadd.f32 0.0, %v1751
        %v1753 = vpop.f32.mrb[0].mxu0
        %v1754 = vpop.f32.mrb[0].mxu0
        %v1755 = vadd.f32 0.0, %v1754
        %v1756 = vpop.f32.mrb[0].mxu0
        %1757 = vmatprep.mubr.bf16.mxu0 %v1158
        %1758 = vmatmul.mubr.bf16.gmra.mrb[0].mxu0 %v1157
        %v1759 = vpop.f32.mrb[0].mxu0
        %v1760 = vadd.f32 0.0, %v1759
        %v1761 = vpop.f32.mrb[0].mxu0
        %v1762 = vpop.f32.mrb[0].mxu0
        %v1763 = vadd.f32 0.0, %v1762
        %v1764 = vpop.f32.mrb[0].mxu0
        %1765 = vmatprep.mubr.bf16.mxu0 %v1160
        %1766 = vmatmul.mubr.bf16.gmra.mrb[0].mxu0 %v1159
        %v1767 = vpop.f32.mrb[0].mxu0
        %v1768 = vadd.f32 0.0, %v1767
        %v1769 = vpop.f32.mrb[0].mxu0
        %v1770 = vpop.f32.mrb[0].mxu0
        %v1771 = vadd.f32 0.0, %v1770
        %v1772 = vpop.f32.mrb[0].mxu0
        %1773 = vmatprep.mubr.bf16.mxu0 %v1162
        %1774 = vmatmul.mubr.bf16.gmra.mrb[0].mxu0 %v1161
        %v1775 = vpop.f32.mrb[0].mxu0
        %v1776 = vadd.f32 0.0, %v1775
        %v1777 = vpop.f32.mrb[0].mxu0
        %v1778 = vpop.f32.mrb[0].mxu0
        %v1779 = vadd.f32 0.0, %v1778
        %v1780 = vpop.f32.mrb[0].mxu0
        %1781 = vmatprep.mubr.bf16.mxu0 %v1164
        %1782 = vmatmul.mubr.bf16.gmra.mrb[0].mxu0 %v1163
        %v1783 = vpop.f32.mrb[0].mxu0
        %v1784 = vadd.f32 0.0, %v1783
        %v1785 = vpop.f32.mrb[0].mxu0
        %v1786 = vpop.f32.mrb[0].mxu0
        %v1787 = vadd.f32 0.0, %v1786
        %v1788 = vpop.f32.mrb[0].mxu0
        %1789 = vmatprep.mubr.bf16.mxu0 %v1166
        %1790 = vmatmul.mubr.bf16.gmra.mrb[0].mxu0 %v1165
        %v1791 = vpop.f32.mrb[0].mxu0
        %v1792 = vadd.f32 0.0, %v1791
        %v1793 = vpop.f32.mrb[0].mxu0
        %v1794 = vpop.f32.mrb[0].mxu0
        %v1795 = vadd.f32 0.0, %v1794
        %v1796 = vpop.f32.mrb[0].mxu0
        %1797 = vmatprep.mubr.bf16.mxu0 %v1168
        %1798 = vmatmul.mubr.bf16.gmra.mrb[0].mxu0 %v1167
        %v1799 = vpop.f32.mrb[0].mxu0
        %v1800 = vadd.f32 0.0, %v1799
        %v1801 = vpop.f32.mrb[0].mxu0
        %v1802 = vpop.f32.mrb[0].mxu0
        %v1803 = vadd.f32 0.0, %v1802
        %v1804 = vpop.f32.mrb[0].mxu0
        %1805 = vmatprep.mubr.bf16.mxu0 %v1170
        %1806 = vmatmul.mubr.bf16.gmra.mrb[0].mxu0 %v1169
        %v1807 = vpop.f32.mrb[0].mxu0
        %v1808 = vadd.f32 0.0, %v1807
        %v1809 = vpop.f32.mrb[0].mxu0
        %v1810 = vpop.f32.mrb[0].mxu0
        %v1811 = vadd.f32 0.0, %v1810
        %v1812 = vpop.f32.mrb[0].mxu0
        %1813 = vmatprep.mubr.bf16.mxu0 %v1172
        %1814 = vmatmul.mubr.bf16.gmra.mrb[0].mxu0 %v1171
        %v1815 = vpop.f32.mrb[0].mxu0
        %v1816 = vadd.f32 0.0, %v1815
        %v1817 = vpop.f32.mrb[0].mxu0
        %v1818 = vpop.f32.mrb[0].mxu0
        %v1819 = vadd.f32 0.0, %v1818
        %v1820 = vpop.f32.mrb[0].mxu0
        %1821 = vmatprep.mubr.bf16.mxu0 %v1174
        %1822 = vmatmul.mubr.bf16.gmra.mrb[0].mxu0 %v1173
        %v1823 = vpop.f32.mrb[0].mxu0
        %v1824 = vadd.f32 0.0, %v1823
        %v1825 = vpop.f32.mrb[0].mxu0
        %v1826 = vpop.f32.mrb[0].mxu0
        %v1827 = vadd.f32 0.0, %v1826
        %v1828 = vpop.f32.mrb[0].mxu0
        %1829 = vmatprep.mubr.bf16.mxu0 %v1176
        %1830 = vmatmul.mubr.bf16.gmra.mrb[0].mxu0 %v1175
        %v1831 = vpop.f32.mrb[0].mxu0
        %v1832 = vadd.f32 0.0, %v1831
        %v1833 = vpop.f32.mrb[0].mxu0
        %v1834 = vpop.f32.mrb[0].mxu0
        %v1835 = vadd.f32 0.0, %v1834
        %v1836 = vpop.f32.mrb[0].mxu0
        %1837 = vmatprep.mubr.bf16.mxu0 %v1178
        %1838 = vmatmul.mubr.bf16.gmra.mrb[0].mxu0 %v1177
        %v1839 = vpop.f32.mrb[0].mxu0
        %v1840 = vadd.f32 0.0, %v1839
        %v1841 = vpop.f32.mrb[0].mxu0
        %v1842 = vpop.f32.mrb[0].mxu0
        %v1843 = vadd.f32 0.0, %v1842
        %v1844 = vpop.f32.mrb[0].mxu0
        %1845 = vmatprep.mubr.bf16.mxu0 %v1180
        %1846 = vmatmul.mubr.bf16.gmra.mrb[0].mxu0 %v1179
        %v1847 = vpop.f32.mrb[0].mxu0
        %v1848 = vadd.f32 0.0, %v1847
        %v1849 = vpop.f32.mrb[0].mxu0
        %v1850 = vpop.f32.mrb[0].mxu0
        %v1851 = vadd.f32 0.0, %v1850
        %v1852 = vpop.f32.mrb[0].mxu0
        %1853 = vmatprep.mubr.bf16.mxu0 %v1182
        %1854 = vmatmul.mubr.bf16.gmra.mrb[0].mxu0 %v1181
        %v1855 = vpop.f32.mrb[0].mxu0
        %v1856 = vadd.f32 0.0, %v1855
        %v1857 = vpop.f32.mrb[0].mxu0
        %v1858 = vpop.f32.mrb[0].mxu0
        %v1859 = vadd.f32 0.0, %v1858
        %v1860 = vpop.f32.mrb[0].mxu0
        %1861 = vmatprep.mubr.bf16.mxu0 %v1184
        %1862 = vmatmul.mubr.bf16.gmra.mrb[0].mxu0 %v1183
        %v1863 = vpop.f32.mrb[0].mxu0
        %v1864 = vadd.f32 0.0, %v1863
        %v1865 = vpop.f32.mrb[0].mxu0
        %v1866 = vpop.f32.mrb[0].mxu0
        %v1867 = vadd.f32 0.0, %v1866
        %v1868 = vpop.f32.mrb[0].mxu0
        %1869 = vmatprep.mubr.bf16.mxu0 %v1186
        %1870 = vmatmul.mubr.bf16.gmra.mrb[0].mxu0 %v1185
        %v1871 = vpop.f32.mrb[0].mxu0
        %v1872 = vadd.f32 0.0, %v1871
        %v1873 = vpop.f32.mrb[0].mxu0
        %v1874 = vpop.f32.mrb[0].mxu0
        %v1875 = vadd.f32 0.0, %v1874
        %v1876 = vpop.f32.mrb[0].mxu0
        %1877 = vmatprep.mubr.bf16.mxu0 %v1188
        %1878 = vmatmul.mubr.bf16.gmra.mrb[0].mxu0 %v1187
        %v1879 = vpop.f32.mrb[0].mxu0
        %v1880 = vadd.f32 0.0, %v1879
        %v1881 = vpop.f32.mrb[0].mxu0
        %v1882 = vpop.f32.mrb[0].mxu0
        %v1883 = vadd.f32 0.0, %v1882
        %v1884 = vpop.f32.mrb[0].mxu0
        %1885 = vmatprep.mubr.bf16.mxu0 %v1190
        %1886 = vmatmul.mubr.bf16.gmra.mrb[0].mxu0 %v1189
        %v1887 = vpop.f32.mrb[0].mxu0
        %v1888 = vadd.f32 0.0, %v1887
        %v1889 = vpop.f32.mrb[0].mxu0
        %v1890 = vpop.f32.mrb[0].mxu0
        %v1891 = vadd.f32 0.0, %v1890
        %v1892 = vpop.f32.mrb[0].mxu0
        %1893 = vmatprep.mubr.bf16.mxu0 %v1192
        %1894 = vmatmul.mubr.bf16.gmra.mrb[0].mxu0 %v1191
        %v1895 = vpop.f32.mrb[0].mxu0
        %v1896 = vadd.f32 0.0, %v1895
        %v1897 = vpop.f32.mrb[0].mxu0
        %v1898 = vpop.f32.mrb[0].mxu0
        %v1899 = vadd.f32 0.0, %v1898
        %v1900 = vpop.f32.mrb[0].mxu0
        %1901 = vmatprep.mubr.bf16.mxu0 %v1194
        %1902 = vmatmul.mubr.bf16.gmra.mrb[0].mxu0 %v1193
        %v1903 = vpop.f32.mrb[0].mxu0
        %v1904 = vadd.f32 0.0, %v1903
        %v1905 = vpop.f32.mrb[0].mxu0
        %v1906 = vpop.f32.mrb[0].mxu0
        %v1907 = vadd.f32 0.0, %v1906
        %v1908 = vpop.f32.mrb[0].mxu0
        %1909 = vmatprep.mubr.bf16.mxu0 %v1196
        %1910 = vmatmul.mubr.bf16.gmra.mrb[0].mxu0 %v1195
        %v1911 = vpop.f32.mrb[0].mxu0
        %v1912 = vadd.f32 0.0, %v1911
        %v1913 = vpop.f32.mrb[0].mxu0
        %v1914 = vpop.f32.mrb[0].mxu0
        %v1915 = vadd.f32 0.0, %v1914
        %v1916 = vpop.f32.mrb[0].mxu0
        %1917 = vmatprep.mubr.bf16.mxu0 %v1198
        %1918 = vmatmul.mubr.bf16.gmra.mrb[0].mxu0 %v1197
        %v1919 = vpop.f32.mrb[0].mxu0
        %v1920 = vadd.f32 0.0, %v1919
        %v1921 = vpop.f32.mrb[0].mxu0
        %v1922 = vpop.f32.mrb[0].mxu0
        %v1923 = vadd.f32 0.0, %v1922
        %v1924 = vpop.f32.mrb[0].mxu0
        %1925 = vmatprep.mubr.bf16.mxu0 %v1200
        %1926 = vmatmul.mubr.bf16.gmra.mrb[0].mxu0 %v1199
        %v1927 = vpop.f32.mrb[0].mxu0
        %v1928 = vadd.f32 0.0, %v1927
        %v1929 = vpop.f32.mrb[0].mxu0
        %v1930 = vpop.f32.mrb[0].mxu0
        %v1931 = vadd.f32 0.0, %v1930
        %v1932 = vpop.f32.mrb[0].mxu0
        %1933 = vmatprep.mubr.bf16.mxu0 %v1202
        %1934 = vmatmul.mubr.bf16.gmra.mrb[0].mxu0 %v1201
        %v1935 = vpop.f32.mrb[0].mxu0
        %v1936 = vadd.f32 0.0, %v1935
        %v1937 = vpop.f32.mrb[0].mxu0
        %v1938 = vpop.f32.mrb[0].mxu0
        %v1939 = vadd.f32 0.0, %v1938
        %v1940 = vpop.f32.mrb[0].mxu0
        %1941 = vmatprep.mubr.bf16.mxu0 %v1204
        %1942 = vmatmul.mubr.bf16.gmra.mrb[0].mxu0 %v1203
        %v1943 = vpop.f32.mrb[0].mxu0
        %v1944 = vadd.f32 0.0, %v1943
        %v1945 = vpop.f32.mrb[0].mxu0
        %v1946 = vpop.f32.mrb[0].mxu0
        %v1947 = vadd.f32 0.0, %v1946
        %v1948 = vpop.f32.mrb[0].mxu0
        %1949 = vmatprep.mubr.bf16.mxu0 %v1206
        %1950 = vmatmul.mubr.bf16.gmra.mrb[0].mxu0 %v1205
        %v1951 = vpop.f32.mrb[0].mxu0
        %v1952 = vadd.f32 0.0, %v1951
        %v1953 = vpop.f32.mrb[0].mxu0
        %v1954 = vpop.f32.mrb[0].mxu0
        %v1955 = vadd.f32 0.0, %v1954
        %v1956 = vpop.f32.mrb[0].mxu0
        %1957 = vmatprep.mubr.bf16.mxu0 %v1208
        %1958 = vmatmul.mubr.bf16.gmra.mrb[0].mxu0 %v1207
        %v1959 = vpop.f32.mrb[0].mxu0
        %v1960 = vadd.f32 0.0, %v1959
        %v1961 = vpop.f32.mrb[0].mxu0
        %v1962 = vpop.f32.mrb[0].mxu0
        %v1963 = vadd.f32 0.0, %v1962
        %v1964 = vpop.f32.mrb[0].mxu0
        %1965 = vmatprep.mubr.bf16.mxu0 %v1210
        %1966 = vmatmul.mubr.bf16.gmra.mrb[0].mxu0 %v1209
        %v1967 = vpop.f32.mrb[0].mxu0
        %v1968 = vadd.f32 0.0, %v1967
        %v1969 = vpop.f32.mrb[0].mxu0
        %v1970 = vpop.f32.mrb[0].mxu0
        %v1971 = vadd.f32 0.0, %v1970
        %v1972 = vpop.f32.mrb[0].mxu0
        %1973 = vmatprep.mubr.bf16.mxu0 %v1212
        %1974 = vmatmul.mubr.bf16.gmra.mrb[0].mxu0 %v1211
        %v1975 = vpop.f32.mrb[0].mxu0
        %v1976 = vadd.f32 0.0, %v1975
        %v1977 = vpop.f32.mrb[0].mxu0
        %v1978 = vpop.f32.mrb[0].mxu0
        %v1979 = vadd.f32 0.0, %v1978
        %v1980 = vpop.f32.mrb[0].mxu0
        %1981 = vdwg.mxu0
        %v1982 = vadd.f32 %v413, %v1472
        %v1983 = vadd.f32 %v414, %v1475
        %v1984 = vadd.f32 %v415, %v1480
        %v1985 = vadd.f32 %v416, %v1483
        %v1986 = vadd.f32 %v417, %v1488
        %v1987 = vadd.f32 %v418, %v1491
        %v1988 = vadd.f32 %v419, %v1496
        %v1989 = vadd.f32 %v420, %v1499
        %v1990 = vadd.f32 %v421, %v1504
        %v1991 = vadd.f32 %v422, %v1507
        %v1992 = vadd.f32 %v423, %v1512
        %v1993 = vadd.f32 %v424, %v1515
        %v1994 = vadd.f32 %v425, %v1520
        %v1995 = vadd.f32 %v426, %v1523
        %v1996 = vadd.f32 %v427, %v1528
        %v1997 = vadd.f32 %v428, %v1531
        %v1998 = vadd.f32 %v429, %v1536
        %v1999 = vadd.f32 %v430, %v1539
        %v2000 = vadd.f32 %v431, %v1544
        %v2001 = vadd.f32 %v432, %v1547
        %v2002 = vadd.f32 %v433, %v1552
        %v2003 = vadd.f32 %v434, %v1555
        %v2004 = vadd.f32 %v435, %v1560
        %v2005 = vadd.f32 %v436, %v1563
        %v2006 = vadd.f32 %v437, %v1568
        %v2007 = vadd.f32 %v438, %v1571
        %v2008 = vadd.f32 %v439, %v1576
        %v2009 = vadd.f32 %v440, %v1579
        %v2010 = vadd.f32 %v441, %v1584
        %v2011 = vadd.f32 %v442, %v1587
        %v2012 = vadd.f32 %v443, %v1592
        %v2013 = vadd.f32 %v444, %v1595
        %v2014 = vadd.f32 %v445, %v1600
        %v2015 = vadd.f32 %v446, %v1603
        %v2016 = vadd.f32 %v447, %v1608
        %v2017 = vadd.f32 %v448, %v1611
        %v2018 = vadd.f32 %v449, %v1616
        %v2019 = vadd.f32 %v450, %v1619
        %v2020 = vadd.f32 %v451, %v1624
        %v2021 = vadd.f32 %v452, %v1627
        %v2022 = vadd.f32 %v453, %v1632
        %v2023 = vadd.f32 %v454, %v1635
        %v2024 = vadd.f32 %v455, %v1640
        %v2025 = vadd.f32 %v456, %v1643
        %v2026 = vadd.f32 %v457, %v1648
        %v2027 = vadd.f32 %v458, %v1651
        %v2028 = vadd.f32 %v459, %v1656
        %v2029 = vadd.f32 %v460, %v1659
        %v2030 = vadd.f32 %v461, %v1664
        %v2031 = vadd.f32 %v462, %v1667
        %v2032 = vadd.f32 %v463, %v1672
        %v2033 = vadd.f32 %v464, %v1675
        %v2034 = vadd.f32 %v465, %v1680
        %v2035 = vadd.f32 %v466, %v1683
        %v2036 = vadd.f32 %v467, %v1688
        %v2037 = vadd.f32 %v468, %v1691
        %v2038 = vadd.f32 %v469, %v1696
        %v2039 = vadd.f32 %v470, %v1699
        %v2040 = vadd.f32 %v471, %v1704
        %v2041 = vadd.f32 %v472, %v1707
        %v2042 = vadd.f32 %v473, %v1712
        %v2043 = vadd.f32 %v474, %v1715
        %v2044 = vadd.f32 %v475, %v1720
        %v2045 = vadd.f32 %v476, %v1723
        %v2046 = vadd.f32 %v477, %v1728
        %v2047 = vadd.f32 %v478, %v1731
        %v2048 = vadd.f32 %v479, %v1736
        %v2049 = vadd.f32 %v480, %v1739
        %v2050 = vadd.f32 %v481, %v1744
        %v2051 = vadd.f32 %v482, %v1747
        %v2052 = vadd.f32 %v483, %v1752
        %v2053 = vadd.f32 %v484, %v1755
        %v2054 = vadd.f32 %v485, %v1760
        %v2055 = vadd.f32 %v486, %v1763
        %v2056 = vadd.f32 %v487, %v1768
        %v2057 = vadd.f32 %v488, %v1771
        %v2058 = vadd.f32 %v489, %v1776
        %v2059 = vadd.f32 %v490, %v1779
        %v2060 = vadd.f32 %v491, %v1784
        %v2061 = vadd.f32 %v492, %v1787
        %v2062 = vadd.f32 %v493, %v1792
        %v2063 = vadd.f32 %v494, %v1795
        %v2064 = vadd.f32 %v495, %v1800
        %v2065 = vadd.f32 %v496, %v1803
        %v2066 = vadd.f32 %v497, %v1808
        %v2067 = vadd.f32 %v498, %v1811
        %v2068 = vadd.f32 %v499, %v1816
        %v2069 = vadd.f32 %v500, %v1819
        %v2070 = vadd.f32 %v501, %v1824
        %v2071 = vadd.f32 %v502, %v1827
        %v2072 = vadd.f32 %v503, %v1832
        %v2073 = vadd.f32 %v504, %v1835
        %v2074 = vadd.f32 %v505, %v1840
        %v2075 = vadd.f32 %v506, %v1843
        %v2076 = vadd.f32 %v507, %v1848
        %v2077 = vadd.f32 %v508, %v1851
        %v2078 = vadd.f32 %v509, %v1856
        %v2079 = vadd.f32 %v510, %v1859
        %v2080 = vadd.f32 %v511, %v1864
        %v2081 = vadd.f32 %v512, %v1867
        %v2082 = vadd.f32 %v513, %v1872
        %v2083 = vadd.f32 %v514, %v1875
        %v2084 = vadd.f32 %v515, %v1880
        %v2085 = vadd.f32 %v516, %v1883
        %v2086 = vadd.f32 %v517, %v1888
        %v2087 = vadd.f32 %v518, %v1891
        %v2088 = vadd.f32 %v519, %v1896
        %v2089 = vadd.f32 %v520, %v1899
        %v2090 = vadd.f32 %v521, %v1904
        %v2091 = vadd.f32 %v522, %v1907
        %v2092 = vadd.f32 %v523, %v1912
        %v2093 = vadd.f32 %v524, %v1915
        %v2094 = vadd.f32 %v525, %v1920
        %v2095 = vadd.f32 %v526, %v1923
        %v2096 = vadd.f32 %v527, %v1928
        %v2097 = vadd.f32 %v528, %v1931
        %v2098 = vadd.f32 %v529, %v1936
        %v2099 = vadd.f32 %v530, %v1939
        %v2100 = vadd.f32 %v531, %v1944
        %v2101 = vadd.f32 %v532, %v1947
        %v2102 = vadd.f32 %v533, %v1952
        %v2103 = vadd.f32 %v534, %v1955
        %v2104 = vadd.f32 %v535, %v1960
        %v2105 = vadd.f32 %v536, %v1963
        %v2106 = vadd.f32 %v537, %v1968
        %v2107 = vadd.f32 %v538, %v1971
        %v2108 = vadd.f32 %v539, %v1976
        %v2109 = vadd.f32 %v540, %v1979
        %2110 = vst [vmem:[#allocation2] sm:$0xff] %v1982
        %2111 = vst [vmem:[#allocation2 + $0x8] sm:$0xff] %v1983
        %2112 = vst [vmem:[#allocation2 + $0x10] sm:$0xff] %v1984
        %2113 = vst [vmem:[#allocation2 + $0x18] sm:$0xff] %v1985
        %2114 = vst [vmem:[#allocation2 + $0x20] sm:$0xff] %v1986
        %2115 = vst [vmem:[#allocation2 + $0x28] sm:$0xff] %v1987
        %2116 = vst [vmem:[#allocation2 + $0x30] sm:$0xff] %v1988
        %2117 = vst [vmem:[#allocation2 + $0x38] sm:$0xff] %v1989
        %2118 = vst [vmem:[#allocation2 + $0x40] sm:$0xff] %v1990
        %2119 = vst [vmem:[#allocation2 + $0x48] sm:$0xff] %v1991
        %2120 = vst [vmem:[#allocation2 + $0x50] sm:$0xff] %v1992
        %2121 = vst [vmem:[#allocation2 + $0x58] sm:$0xff] %v1993
        %2122 = vst [vmem:[#allocation2 + $0x60] sm:$0xff] %v1994
        %2123 = vst [vmem:[#allocation2 + $0x68] sm:$0xff] %v1995
        %2124 = vst [vmem:[#allocation2 + $0x70] sm:$0xff] %v1996
        %2125 = vst [vmem:[#allocation2 + $0x78] sm:$0xff] %v1997
        %2126 = vst [vmem:[#allocation2 + $0x80] sm:$0xff] %v1998
        %2127 = vst [vmem:[#allocation2 + $0x88] sm:$0xff] %v1999
        %2128 = vst [vmem:[#allocation2 + $0x90] sm:$0xff] %v2000
        %2129 = vst [vmem:[#allocation2 + $0x98] sm:$0xff] %v2001
        %2130 = vst [vmem:[#allocation2 + $0xa0] sm:$0xff] %v2002
        %2131 = vst [vmem:[#allocation2 + $0xa8] sm:$0xff] %v2003
        %2132 = vst [vmem:[#allocation2 + $0xb0] sm:$0xff] %v2004
        %2133 = vst [vmem:[#allocation2 + $0xb8] sm:$0xff] %v2005
        %2134 = vst [vmem:[#allocation2 + $0xc0] sm:$0xff] %v2006
        %2135 = vst [vmem:[#allocation2 + $0xc8] sm:$0xff] %v2007
        %2136 = vst [vmem:[#allocation2 + $0xd0] sm:$0xff] %v2008
        %2137 = vst [vmem:[#allocation2 + $0xd8] sm:$0xff] %v2009
        %2138 = vst [vmem:[#allocation2 + $0xe0] sm:$0xff] %v2010
        %2139 = vst [vmem:[#allocation2 + $0xe8] sm:$0xff] %v2011
        %2140 = vst [vmem:[#allocation2 + $0xf0] sm:$0xff] %v2012
        %2141 = vst [vmem:[#allocation2 + $0xf8] sm:$0xff] %v2013
        %2142 = vst [vmem:[#allocation2 + $0x100] sm:$0xff] %v2014
        %2143 = vst [vmem:[#allocation2 + $0x108] sm:$0xff] %v2015
        %2144 = vst [vmem:[#allocation2 + $0x110] sm:$0xff] %v2016
        %2145 = vst [vmem:[#allocation2 + $0x118] sm:$0xff] %v2017
        %2146 = vst [vmem:[#allocation2 + $0x120] sm:$0xff] %v2018
        %2147 = vst [vmem:[#allocation2 + $0x128] sm:$0xff] %v2019
        %2148 = vst [vmem:[#allocation2 + $0x130] sm:$0xff] %v2020
        %2149 = vst [vmem:[#allocation2 + $0x138] sm:$0xff] %v2021
        %2150 = vst [vmem:[#allocation2 + $0x140] sm:$0xff] %v2022
        %2151 = vst [vmem:[#allocation2 + $0x148] sm:$0xff] %v2023
        %2152 = vst [vmem:[#allocation2 + $0x150] sm:$0xff] %v2024
        %2153 = vst [vmem:[#allocation2 + $0x158] sm:$0xff] %v2025
        %2154 = vst [vmem:[#allocation2 + $0x160] sm:$0xff] %v2026
        %2155 = vst [vmem:[#allocation2 + $0x168] sm:$0xff] %v2027
        %2156 = vst [vmem:[#allocation2 + $0x170] sm:$0xff] %v2028
        %2157 = vst [vmem:[#allocation2 + $0x178] sm:$0xff] %v2029
        %2158 = vst [vmem:[#allocation2 + $0x180] sm:$0xff] %v2030
        %2159 = vst [vmem:[#allocation2 + $0x188] sm:$0xff] %v2031
        %2160 = vst [vmem:[#allocation2 + $0x190] sm:$0xff] %v2032
        %2161 = vst [vmem:[#allocation2 + $0x198] sm:$0xff] %v2033
        %2162 = vst [vmem:[#allocation2 + $0x1a0] sm:$0xff] %v2034
        %2163 = vst [vmem:[#allocation2 + $0x1a8] sm:$0xff] %v2035
        %2164 = vst [vmem:[#allocation2 + $0x1b0] sm:$0xff] %v2036
        %2165 = vst [vmem:[#allocation2 + $0x1b8] sm:$0xff] %v2037
        %2166 = vst [vmem:[#allocation2 + $0x1c0] sm:$0xff] %v2038
        %2167 = vst [vmem:[#allocation2 + $0x1c8] sm:$0xff] %v2039
        %2168 = vst [vmem:[#allocation2 + $0x1d0] sm:$0xff] %v2040
        %2169 = vst [vmem:[#allocation2 + $0x1d8] sm:$0xff] %v2041
        %2170 = vst [vmem:[#allocation2 + $0x1e0] sm:$0xff] %v2042
        %2171 = vst [vmem:[#allocation2 + $0x1e8] sm:$0xff] %v2043
        %2172 = vst [vmem:[#allocation2 + $0x1f0] sm:$0xff] %v2044
        %2173 = vst [vmem:[#allocation2 + $0x1f8] sm:$0xff] %v2045
        %2174 = vst [vmem:[#allocation2 + $0x200] sm:$0xff] %v2046
        %2175 = vst [vmem:[#allocation2 + $0x208] sm:$0xff] %v2047
        %2176 = vst [vmem:[#allocation2 + $0x210] sm:$0xff] %v2048
        %2177 = vst [vmem:[#allocation2 + $0x218] sm:$0xff] %v2049
        %2178 = vst [vmem:[#allocation2 + $0x220] sm:$0xff] %v2050
        %2179 = vst [vmem:[#allocation2 + $0x228] sm:$0xff] %v2051
        %2180 = vst [vmem:[#allocation2 + $0x230] sm:$0xff] %v2052
        %2181 = vst [vmem:[#allocation2 + $0x238] sm:$0xff] %v2053
        %2182 = vst [vmem:[#allocation2 + $0x240] sm:$0xff] %v2054
        %2183 = vst [vmem:[#allocation2 + $0x248] sm:$0xff] %v2055
        %2184 = vst [vmem:[#allocation2 + $0x250] sm:$0xff] %v2056
        %2185 = vst [vmem:[#allocation2 + $0x258] sm:$0xff] %v2057
        %2186 = vst [vmem:[#allocation2 + $0x260] sm:$0xff] %v2058
        %2187 = vst [vmem:[#allocation2 + $0x268] sm:$0xff] %v2059
        %2188 = vst [vmem:[#allocation2 + $0x270] sm:$0xff] %v2060
        %2189 = vst [vmem:[#allocation2 + $0x278] sm:$0xff] %v2061
        %2190 = vst [vmem:[#allocation2 + $0x280] sm:$0xff] %v2062
        %2191 = vst [vmem:[#allocation2 + $0x288] sm:$0xff] %v2063
        %2192 = vst [vmem:[#allocation2 + $0x290] sm:$0xff] %v2064
        %2193 = vst [vmem:[#allocation2 + $0x298] sm:$0xff] %v2065
        %2194 = vst [vmem:[#allocation2 + $0x2a0] sm:$0xff] %v2066
        %2195 = vst [vmem:[#allocation2 + $0x2a8] sm:$0xff] %v2067
        %2196 = vst [vmem:[#allocation2 + $0x2b0] sm:$0xff] %v2068
        %2197 = vst [vmem:[#allocation2 + $0x2b8] sm:$0xff] %v2069
        %2198 = vst [vmem:[#allocation2 + $0x2c0] sm:$0xff] %v2070
        %2199 = vst [vmem:[#allocation2 + $0x2c8] sm:$0xff] %v2071
        %2200 = vst [vmem:[#allocation2 + $0x2d0] sm:$0xff] %v2072
        %2201 = vst [vmem:[#allocation2 + $0x2d8] sm:$0xff] %v2073
        %2202 = vst [vmem:[#allocation2 + $0x2e0] sm:$0xff] %v2074
        %2203 = vst [vmem:[#allocation2 + $0x2e8] sm:$0xff] %v2075
        %2204 = vst [vmem:[#allocation2 + $0x2f0] sm:$0xff] %v2076
        %2205 = vst [vmem:[#allocation2 + $0x2f8] sm:$0xff] %v2077
        %2206 = vst [vmem:[#allocation2 + $0x300] sm:$0xff] %v2078
        %2207 = vst [vmem:[#allocation2 + $0x308] sm:$0xff] %v2079
        %2208 = vst [vmem:[#allocation2 + $0x310] sm:$0xff] %v2080
        %2209 = vst [vmem:[#allocation2 + $0x318] sm:$0xff] %v2081
        %2210 = vst [vmem:[#allocation2 + $0x320] sm:$0xff] %v2082
        %2211 = vst [vmem:[#allocation2 + $0x328] sm:$0xff] %v2083
        %2212 = vst [vmem:[#allocation2 + $0x330] sm:$0xff] %v2084
        %2213 = vst [vmem:[#allocation2 + $0x338] sm:$0xff] %v2085
        %2214 = vst [vmem:[#allocation2 + $0x340] sm:$0xff] %v2086
        %2215 = vst [vmem:[#allocation2 + $0x348] sm:$0xff] %v2087
        %2216 = vst [vmem:[#allocation2 + $0x350] sm:$0xff] %v2088
        %2217 = vst [vmem:[#allocation2 + $0x358] sm:$0xff] %v2089
        %2218 = vst [vmem:[#allocation2 + $0x360] sm:$0xff] %v2090
        %2219 = vst [vmem:[#allocation2 + $0x368] sm:$0xff] %v2091
        %2220 = vst [vmem:[#allocation2 + $0x370] sm:$0xff] %v2092
        %2221 = vst [vmem:[#allocation2 + $0x378] sm:$0xff] %v2093
        %2222 = vst [vmem:[#allocation2 + $0x380] sm:$0xff] %v2094
        %2223 = vst [vmem:[#allocation2 + $0x388] sm:$0xff] %v2095
        %2224 = vst [vmem:[#allocation2 + $0x390] sm:$0xff] %v2096
        %2225 = vst [vmem:[#allocation2 + $0x398] sm:$0xff] %v2097
        %2226 = vst [vmem:[#allocation2 + $0x3a0] sm:$0xff] %v2098
        %2227 = vst [vmem:[#allocation2 + $0x3a8] sm:$0xff] %v2099
        %2228 = vst [vmem:[#allocation2 + $0x3b0] sm:$0xff] %v2100
        %2229 = vst [vmem:[#allocation2 + $0x3b8] sm:$0xff] %v2101
        %2230 = vst [vmem:[#allocation2 + $0x3c0] sm:$0xff] %v2102
        %2231 = vst [vmem:[#allocation2 + $0x3c8] sm:$0xff] %v2103
        %2232 = vst [vmem:[#allocation2 + $0x3d0] sm:$0xff] %v2104
        %2233 = vst [vmem:[#allocation2 + $0x3d8] sm:$0xff] %v2105
        %2234 = vst [vmem:[#allocation2 + $0x3e0] sm:$0xff] %v2106
        %2235 = vst [vmem:[#allocation2 + $0x3e8] sm:$0xff] %v2107
        %2236 = vst [vmem:[#allocation2 + $0x3f0] sm:$0xff] %v2108
        %2237 = vst [vmem:[#allocation2 + $0x3f8] sm:$0xff] %v2109
        // Predicated region
        $region49: #{tpu_custom_call.1} parent=31 // pred_check
          %p2238 = pneg %p281
        $region50: #{tpu_custom_call.1} parent=31 // pred_check_branch
          %2240 = sbr.rel (%p2238) target = $region52
        $region51: #{tpu_custom_call.1} parent=31 // pred_region
          %v2241 = vld [vmem:[#allocation2] sm:$0xff]
          %v2242 = vld [vmem:[#allocation2 + $0x8] sm:$0xff]
          %v2243 = vld [vmem:[#allocation2 + $0x10] sm:$0xff]
          %v2244 = vld [vmem:[#allocation2 + $0x18] sm:$0xff]
          %v2245 = vld [vmem:[#allocation2 + $0x20] sm:$0xff]
          %v2246 = vld [vmem:[#allocation2 + $0x28] sm:$0xff]
          %v2247 = vld [vmem:[#allocation2 + $0x30] sm:$0xff]
          %v2248 = vld [vmem:[#allocation2 + $0x38] sm:$0xff]
          %v2249 = vld [vmem:[#allocation2 + $0x40] sm:$0xff]
          %v2250 = vld [vmem:[#allocation2 + $0x48] sm:$0xff]
          %v2251 = vld [vmem:[#allocation2 + $0x50] sm:$0xff]
          %v2252 = vld [vmem:[#allocation2 + $0x58] sm:$0xff]
          %v2253 = vld [vmem:[#allocation2 + $0x60] sm:$0xff]
          %v2254 = vld [vmem:[#allocation2 + $0x68] sm:$0xff]
          %v2255 = vld [vmem:[#allocation2 + $0x70] sm:$0xff]
          %v2256 = vld [vmem:[#allocation2 + $0x78] sm:$0xff]
          %v2257 = vld [vmem:[#allocation2 + $0x80] sm:$0xff]
          %v2258 = vld [vmem:[#allocation2 + $0x88] sm:$0xff]
          %v2259 = vld [vmem:[#allocation2 + $0x90] sm:$0xff]
          %v2260 = vld [vmem:[#allocation2 + $0x98] sm:$0xff]
          %v2261 = vld [vmem:[#allocation2 + $0xa0] sm:$0xff]
          %v2262 = vld [vmem:[#allocation2 + $0xa8] sm:$0xff]
          %v2263 = vld [vmem:[#allocation2 + $0xb0] sm:$0xff]
          %v2264 = vld [vmem:[#allocation2 + $0xb8] sm:$0xff]
          %v2265 = vld [vmem:[#allocation2 + $0xc0] sm:$0xff]
          %v2266 = vld [vmem:[#allocation2 + $0xc8] sm:$0xff]
          %v2267 = vld [vmem:[#allocation2 + $0xd0] sm:$0xff]
          %v2268 = vld [vmem:[#allocation2 + $0xd8] sm:$0xff]
          %v2269 = vld [vmem:[#allocation2 + $0xe0] sm:$0xff]
          %v2270 = vld [vmem:[#allocation2 + $0xe8] sm:$0xff]
          %v2271 = vld [vmem:[#allocation2 + $0xf0] sm:$0xff]
          %v2272 = vld [vmem:[#allocation2 + $0xf8] sm:$0xff]
          %v2273 = vld [vmem:[#allocation2 + $0x100] sm:$0xff]
          %v2274 = vld [vmem:[#allocation2 + $0x108] sm:$0xff]
          %v2275 = vld [vmem:[#allocation2 + $0x110] sm:$0xff]
          %v2276 = vld [vmem:[#allocation2 + $0x118] sm:$0xff]
          %v2277 = vld [vmem:[#allocation2 + $0x120] sm:$0xff]
          %v2278 = vld [vmem:[#allocation2 + $0x128] sm:$0xff]
          %v2279 = vld [vmem:[#allocation2 + $0x130] sm:$0xff]
          %v2280 = vld [vmem:[#allocation2 + $0x138] sm:$0xff]
          %v2281 = vld [vmem:[#allocation2 + $0x140] sm:$0xff]
          %v2282 = vld [vmem:[#allocation2 + $0x148] sm:$0xff]
          %v2283 = vld [vmem:[#allocation2 + $0x150] sm:$0xff]
          %v2284 = vld [vmem:[#allocation2 + $0x158] sm:$0xff]
          %v2285 = vld [vmem:[#allocation2 + $0x160] sm:$0xff]
          %v2286 = vld [vmem:[#allocation2 + $0x168] sm:$0xff]
          %v2287 = vld [vmem:[#allocation2 + $0x170] sm:$0xff]
          %v2288 = vld [vmem:[#allocation2 + $0x178] sm:$0xff]
          %v2289 = vld [vmem:[#allocation2 + $0x180] sm:$0xff]
          %v2290 = vld [vmem:[#allocation2 + $0x188] sm:$0xff]
          %v2291 = vld [vmem:[#allocation2 + $0x190] sm:$0xff]
          %v2292 = vld [vmem:[#allocation2 + $0x198] sm:$0xff]
          %v2293 = vld [vmem:[#allocation2 + $0x1a0] sm:$0xff]
          %v2294 = vld [vmem:[#allocation2 + $0x1a8] sm:$0xff]
          %v2295 = vld [vmem:[#allocation2 + $0x1b0] sm:$0xff]
          %v2296 = vld [vmem:[#allocation2 + $0x1b8] sm:$0xff]
          %v2297 = vld [vmem:[#allocation2 + $0x1c0] sm:$0xff]
          %v2298 = vld [vmem:[#allocation2 + $0x1c8] sm:$0xff]
          %v2299 = vld [vmem:[#allocation2 + $0x1d0] sm:$0xff]
          %v2300 = vld [vmem:[#allocation2 + $0x1d8] sm:$0xff]
          %v2301 = vld [vmem:[#allocation2 + $0x1e0] sm:$0xff]
          %v2302 = vld [vmem:[#allocation2 + $0x1e8] sm:$0xff]
          %v2303 = vld [vmem:[#allocation2 + $0x1f0] sm:$0xff]
          %v2304 = vld [vmem:[#allocation2 + $0x1f8] sm:$0xff]
          %v2305 = vld [vmem:[#allocation2 + $0x200] sm:$0xff]
          %v2306 = vld [vmem:[#allocation2 + $0x208] sm:$0xff]
          %v2307 = vld [vmem:[#allocation2 + $0x210] sm:$0xff]
          %v2308 = vld [vmem:[#allocation2 + $0x218] sm:$0xff]
          %v2309 = vld [vmem:[#allocation2 + $0x220] sm:$0xff]
          %v2310 = vld [vmem:[#allocation2 + $0x228] sm:$0xff]
          %v2311 = vld [vmem:[#allocation2 + $0x230] sm:$0xff]
          %v2312 = vld [vmem:[#allocation2 + $0x238] sm:$0xff]
          %v2313 = vld [vmem:[#allocation2 + $0x240] sm:$0xff]
          %v2314 = vld [vmem:[#allocation2 + $0x248] sm:$0xff]
          %v2315 = vld [vmem:[#allocation2 + $0x250] sm:$0xff]
          %v2316 = vld [vmem:[#allocation2 + $0x258] sm:$0xff]
          %v2317 = vld [vmem:[#allocation2 + $0x260] sm:$0xff]
          %v2318 = vld [vmem:[#allocation2 + $0x268] sm:$0xff]
          %v2319 = vld [vmem:[#allocation2 + $0x270] sm:$0xff]
          %v2320 = vld [vmem:[#allocation2 + $0x278] sm:$0xff]
          %v2321 = vld [vmem:[#allocation2 + $0x280] sm:$0xff]
          %v2322 = vld [vmem:[#allocation2 + $0x288] sm:$0xff]
          %v2323 = vld [vmem:[#allocation2 + $0x290] sm:$0xff]
          %v2324 = vld [vmem:[#allocation2 + $0x298] sm:$0xff]
          %v2325 = vld [vmem:[#allocation2 + $0x2a0] sm:$0xff]
          %v2326 = vld [vmem:[#allocation2 + $0x2a8] sm:$0xff]
          %v2327 = vld [vmem:[#allocation2 + $0x2b0] sm:$0xff]
          %v2328 = vld [vmem:[#allocation2 + $0x2b8] sm:$0xff]
          %v2329 = vld [vmem:[#allocation2 + $0x2c0] sm:$0xff]
          %v2330 = vld [vmem:[#allocation2 + $0x2c8] sm:$0xff]
          %v2331 = vld [vmem:[#allocation2 + $0x2d0] sm:$0xff]
          %v2332 = vld [vmem:[#allocation2 + $0x2d8] sm:$0xff]
          %v2333 = vld [vmem:[#allocation2 + $0x2e0] sm:$0xff]
          %v2334 = vld [vmem:[#allocation2 + $0x2e8] sm:$0xff]
          %v2335 = vld [vmem:[#allocation2 + $0x2f0] sm:$0xff]
          %v2336 = vld [vmem:[#allocation2 + $0x2f8] sm:$0xff]
          %v2337 = vld [vmem:[#allocation2 + $0x300] sm:$0xff]
          %v2338 = vld [vmem:[#allocation2 + $0x308] sm:$0xff]
          %v2339 = vld [vmem:[#allocation2 + $0x310] sm:$0xff]
          %v2340 = vld [vmem:[#allocation2 + $0x318] sm:$0xff]
          %v2341 = vld [vmem:[#allocation2 + $0x320] sm:$0xff]
          %v2342 = vld [vmem:[#allocation2 + $0x328] sm:$0xff]
          %v2343 = vld [vmem:[#allocation2 + $0x330] sm:$0xff]
          %v2344 = vld [vmem:[#allocation2 + $0x338] sm:$0xff]
          %v2345 = vld [vmem:[#allocation2 + $0x340] sm:$0xff]
          %v2346 = vld [vmem:[#allocation2 + $0x348] sm:$0xff]
          %v2347 = vld [vmem:[#allocation2 + $0x350] sm:$0xff]
          %v2348 = vld [vmem:[#allocation2 + $0x358] sm:$0xff]
          %v2349 = vld [vmem:[#allocation2 + $0x360] sm:$0xff]
          %v2350 = vld [vmem:[#allocation2 + $0x368] sm:$0xff]
          %v2351 = vld [vmem:[#allocation2 + $0x370] sm:$0xff]
          %v2352 = vld [vmem:[#allocation2 + $0x378] sm:$0xff]
          %v2353 = vld [vmem:[#allocation2 + $0x380] sm:$0xff]
          %v2354 = vld [vmem:[#allocation2 + $0x388] sm:$0xff]
          %v2355 = vld [vmem:[#allocation2 + $0x390] sm:$0xff]
          %v2356 = vld [vmem:[#allocation2 + $0x398] sm:$0xff]
          %v2357 = vld [vmem:[#allocation2 + $0x3a0] sm:$0xff]
          %v2358 = vld [vmem:[#allocation2 + $0x3a8] sm:$0xff]
          %v2359 = vld [vmem:[#allocation2 + $0x3b0] sm:$0xff]
          %v2360 = vld [vmem:[#allocation2 + $0x3b8] sm:$0xff]
          %v2361 = vld [vmem:[#allocation2 + $0x3c0] sm:$0xff]
          %v2362 = vld [vmem:[#allocation2 + $0x3c8] sm:$0xff]
          %v2363 = vld [vmem:[#allocation2 + $0x3d0] sm:$0xff]
          %v2364 = vld [vmem:[#allocation2 + $0x3d8] sm:$0xff]
          %v2365 = vld [vmem:[#allocation2 + $0x3e0] sm:$0xff]
          %v2366 = vld [vmem:[#allocation2 + $0x3e8] sm:$0xff]
          %v2367 = vld [vmem:[#allocation2 + $0x3f0] sm:$0xff]
          %v2368 = vld [vmem:[#allocation2 + $0x3f8] sm:$0xff]
          %v2369 = vld [vmem:[#allocation8] sm:$0x1]
          %v2371 = vlaneseq
          %v2372 = vshrl.u32 %v2371, 7
          %v2373 = vsub.s32 0, %v2372
          %v2374 = vrot.slane %v2369, %v2373
          %v2376 = vadd.f32 %v2241, %v2374
          %v2377 = vadd.f32 %v2242, %v2374
          %v2378 = vadd.f32 %v2243, %v2374
          %v2379 = vadd.f32 %v2244, %v2374
          %v2380 = vadd.f32 %v2245, %v2374
          %v2381 = vadd.f32 %v2246, %v2374
          %v2382 = vadd.f32 %v2247, %v2374
          %v2383 = vadd.f32 %v2248, %v2374
          %v2384 = vadd.f32 %v2249, %v2374
          %v2385 = vadd.f32 %v2250, %v2374
          %v2386 = vadd.f32 %v2251, %v2374
          %v2387 = vadd.f32 %v2252, %v2374
          %v2388 = vadd.f32 %v2253, %v2374
          %v2389 = vadd.f32 %v2254, %v2374
          %v2390 = vadd.f32 %v2255, %v2374
          %v2391 = vadd.f32 %v2256, %v2374
          %v2392 = vadd.f32 %v2257, %v2374
          %v2393 = vadd.f32 %v2258, %v2374
          %v2394 = vadd.f32 %v2259, %v2374
          %v2395 = vadd.f32 %v2260, %v2374
          %v2396 = vadd.f32 %v2261, %v2374
          %v2397 = vadd.f32 %v2262, %v2374
          %v2398 = vadd.f32 %v2263, %v2374
          %v2399 = vadd.f32 %v2264, %v2374
          %v2400 = vadd.f32 %v2265, %v2374
          %v2401 = vadd.f32 %v2266, %v2374
          %v2402 = vadd.f32 %v2267, %v2374
          %v2403 = vadd.f32 %v2268, %v2374
          %v2404 = vadd.f32 %v2269, %v2374
          %v2405 = vadd.f32 %v2270, %v2374
          %v2406 = vadd.f32 %v2271, %v2374
          %v2407 = vadd.f32 %v2272, %v2374
          %v2408 = vadd.f32 %v2273, %v2374
          %v2409 = vadd.f32 %v2274, %v2374
          %v2410 = vadd.f32 %v2275, %v2374
          %v2411 = vadd.f32 %v2276, %v2374
          %v2412 = vadd.f32 %v2277, %v2374
          %v2413 = vadd.f32 %v2278, %v2374
          %v2414 = vadd.f32 %v2279, %v2374
          %v2415 = vadd.f32 %v2280, %v2374
          %v2416 = vadd.f32 %v2281, %v2374
          %v2417 = vadd.f32 %v2282, %v2374
          %v2418 = vadd.f32 %v2283, %v2374
          %v2419 = vadd.f32 %v2284, %v2374
          %v2420 = vadd.f32 %v2285, %v2374
          %v2421 = vadd.f32 %v2286, %v2374
          %v2422 = vadd.f32 %v2287, %v2374
          %v2423 = vadd.f32 %v2288, %v2374
          %v2424 = vadd.f32 %v2289, %v2374
          %v2425 = vadd.f32 %v2290, %v2374
          %v2426 = vadd.f32 %v2291, %v2374
          %v2427 = vadd.f32 %v2292, %v2374
          %v2428 = vadd.f32 %v2293, %v2374
          %v2429 = vadd.f32 %v2294, %v2374
          %v2430 = vadd.f32 %v2295, %v2374
          %v2431 = vadd.f32 %v2296, %v2374
          %v2432 = vadd.f32 %v2297, %v2374
          %v2433 = vadd.f32 %v2298, %v2374
          %v2434 = vadd.f32 %v2299, %v2374
          %v2435 = vadd.f32 %v2300, %v2374
          %v2436 = vadd.f32 %v2301, %v2374
          %v2437 = vadd.f32 %v2302, %v2374
          %v2438 = vadd.f32 %v2303, %v2374
          %v2439 = vadd.f32 %v2304, %v2374
          %v2440 = vadd.f32 %v2305, %v2374
          %v2441 = vadd.f32 %v2306, %v2374
          %v2442 = vadd.f32 %v2307, %v2374
          %v2443 = vadd.f32 %v2308, %v2374
          %v2444 = vadd.f32 %v2309, %v2374
          %v2445 = vadd.f32 %v2310, %v2374
          %v2446 = vadd.f32 %v2311, %v2374
          %v2447 = vadd.f32 %v2312, %v2374
          %v2448 = vadd.f32 %v2313, %v2374
          %v2449 = vadd.f32 %v2314, %v2374
          %v2450 = vadd.f32 %v2315, %v2374
          %v2451 = vadd.f32 %v2316, %v2374
          %v2452 = vadd.f32 %v2317, %v2374
          %v2453 = vadd.f32 %v2318, %v2374
          %v2454 = vadd.f32 %v2319, %v2374
          %v2455 = vadd.f32 %v2320, %v2374
          %v2456 = vadd.f32 %v2321, %v2374
          %v2457 = vadd.f32 %v2322, %v2374
          %v2458 = vadd.f32 %v2323, %v2374
          %v2459 = vadd.f32 %v2324, %v2374
          %v2460 = vadd.f32 %v2325, %v2374
          %v2461 = vadd.f32 %v2326, %v2374
          %v2462 = vadd.f32 %v2327, %v2374
          %v2463 = vadd.f32 %v2328, %v2374
          %v2464 = vadd.f32 %v2329, %v2374
          %v2465 = vadd.f32 %v2330, %v2374
          %v2466 = vadd.f32 %v2331, %v2374
          %v2467 = vadd.f32 %v2332, %v2374
          %v2468 = vadd.f32 %v2333, %v2374
          %v2469 = vadd.f32 %v2334, %v2374
          %v2470 = vadd.f32 %v2335, %v2374
          %v2471 = vadd.f32 %v2336, %v2374
          %v2472 = vadd.f32 %v2337, %v2374
          %v2473 = vadd.f32 %v2338, %v2374
          %v2474 = vadd.f32 %v2339, %v2374
          %v2475 = vadd.f32 %v2340, %v2374
          %v2476 = vadd.f32 %v2341, %v2374
          %v2477 = vadd.f32 %v2342, %v2374
          %v2478 = vadd.f32 %v2343, %v2374
          %v2479 = vadd.f32 %v2344, %v2374
          %v2480 = vadd.f32 %v2345, %v2374
          %v2481 = vadd.f32 %v2346, %v2374
          %v2482 = vadd.f32 %v2347, %v2374
          %v2483 = vadd.f32 %v2348, %v2374
          %v2484 = vadd.f32 %v2349, %v2374
          %v2485 = vadd.f32 %v2350, %v2374
          %v2486 = vadd.f32 %v2351, %v2374
          %v2487 = vadd.f32 %v2352, %v2374
          %v2488 = vadd.f32 %v2353, %v2374
          %v2489 = vadd.f32 %v2354, %v2374
          %v2490 = vadd.f32 %v2355, %v2374
          %v2491 = vadd.f32 %v2356, %v2374
          %v2492 = vadd.f32 %v2357, %v2374
          %v2493 = vadd.f32 %v2358, %v2374
          %v2494 = vadd.f32 %v2359, %v2374
          %v2495 = vadd.f32 %v2360, %v2374
          %v2496 = vadd.f32 %v2361, %v2374
          %v2497 = vadd.f32 %v2362, %v2374
          %v2498 = vadd.f32 %v2363, %v2374
          %v2499 = vadd.f32 %v2364, %v2374
          %v2500 = vadd.f32 %v2365, %v2374
          %v2501 = vadd.f32 %v2366, %v2374
          %v2502 = vadd.f32 %v2367, %v2374
          %v2503 = vadd.f32 %v2368, %v2374
          %v2504 = vmax.f32 %v2376, 0.0
          %v2505 = vmax.f32 %v2377, 0.0
          %v2506 = vmax.f32 %v2378, 0.0
          %v2507 = vmax.f32 %v2379, 0.0
          %v2508 = vmax.f32 %v2380, 0.0
          %v2509 = vmax.f32 %v2381, 0.0
          %v2510 = vmax.f32 %v2382, 0.0
          %v2511 = vmax.f32 %v2383, 0.0
          %v2512 = vmax.f32 %v2384, 0.0
          %v2513 = vmax.f32 %v2385, 0.0
          %v2514 = vmax.f32 %v2386, 0.0
          %v2515 = vmax.f32 %v2387, 0.0
          %v2516 = vmax.f32 %v2388, 0.0
          %v2517 = vmax.f32 %v2389, 0.0
          %v2518 = vmax.f32 %v2390, 0.0
          %v2519 = vmax.f32 %v2391, 0.0
          %v2520 = vmax.f32 %v2392, 0.0
          %v2521 = vmax.f32 %v2393, 0.0
          %v2522 = vmax.f32 %v2394, 0.0
          %v2523 = vmax.f32 %v2395, 0.0
          %v2524 = vmax.f32 %v2396, 0.0
          %v2525 = vmax.f32 %v2397, 0.0
          %v2526 = vmax.f32 %v2398, 0.0
          %v2527 = vmax.f32 %v2399, 0.0
          %v2528 = vmax.f32 %v2400, 0.0
          %v2529 = vmax.f32 %v2401, 0.0
          %v2530 = vmax.f32 %v2402, 0.0
          %v2531 = vmax.f32 %v2403, 0.0
          %v2532 = vmax.f32 %v2404, 0.0
          %v2533 = vmax.f32 %v2405, 0.0
          %v2534 = vmax.f32 %v2406, 0.0
          %v2535 = vmax.f32 %v2407, 0.0
          %v2536 = vmax.f32 %v2408, 0.0
          %v2537 = vmax.f32 %v2409, 0.0
          %v2538 = vmax.f32 %v2410, 0.0
          %v2539 = vmax.f32 %v2411, 0.0
          %v2540 = vmax.f32 %v2412, 0.0
          %v2541 = vmax.f32 %v2413, 0.0
          %v2542 = vmax.f32 %v2414, 0.0
          %v2543 = vmax.f32 %v2415, 0.0
          %v2544 = vmax.f32 %v2416, 0.0
          %v2545 = vmax.f32 %v2417, 0.0
          %v2546 = vmax.f32 %v2418, 0.0
          %v2547 = vmax.f32 %v2419, 0.0
          %v2548 = vmax.f32 %v2420, 0.0
          %v2549 = vmax.f32 %v2421, 0.0
          %v2550 = vmax.f32 %v2422, 0.0
          %v2551 = vmax.f32 %v2423, 0.0
          %v2552 = vmax.f32 %v2424, 0.0
          %v2553 = vmax.f32 %v2425, 0.0
          %v2554 = vmax.f32 %v2426, 0.0
          %v2555 = vmax.f32 %v2427, 0.0
          %v2556 = vmax.f32 %v2428, 0.0
          %v2557 = vmax.f32 %v2429, 0.0
          %v2558 = vmax.f32 %v2430, 0.0
          %v2559 = vmax.f32 %v2431, 0.0
          %v2560 = vmax.f32 %v2432, 0.0
          %v2561 = vmax.f32 %v2433, 0.0
          %v2562 = vmax.f32 %v2434, 0.0
          %v2563 = vmax.f32 %v2435, 0.0
          %v2564 = vmax.f32 %v2436, 0.0
          %v2565 = vmax.f32 %v2437, 0.0
          %v2566 = vmax.f32 %v2438, 0.0
          %v2567 = vmax.f32 %v2439, 0.0
          %v2568 = vmax.f32 %v2440, 0.0
          %v2569 = vmax.f32 %v2441, 0.0
          %v2570 = vmax.f32 %v2442, 0.0
          %v2571 = vmax.f32 %v2443, 0.0
          %v2572 = vmax.f32 %v2444, 0.0
          %v2573 = vmax.f32 %v2445, 0.0
          %v2574 = vmax.f32 %v2446, 0.0
          %v2575 = vmax.f32 %v2447, 0.0
          %v2576 = vmax.f32 %v2448, 0.0
          %v2577 = vmax.f32 %v2449, 0.0
          %v2578 = vmax.f32 %v2450, 0.0
          %v2579 = vmax.f32 %v2451, 0.0
          %v2580 = vmax.f32 %v2452, 0.0
          %v2581 = vmax.f32 %v2453, 0.0
          %v2582 = vmax.f32 %v2454, 0.0
          %v2583 = vmax.f32 %v2455, 0.0
          %v2584 = vmax.f32 %v2456, 0.0
          %v2585 = vmax.f32 %v2457, 0.0
          %v2586 = vmax.f32 %v2458, 0.0
          %v2587 = vmax.f32 %v2459, 0.0
          %v2588 = vmax.f32 %v2460, 0.0
          %v2589 = vmax.f32 %v2461, 0.0
          %v2590 = vmax.f32 %v2462, 0.0
          %v2591 = vmax.f32 %v2463, 0.0
          %v2592 = vmax.f32 %v2464, 0.0
          %v2593 = vmax.f32 %v2465, 0.0
          %v2594 = vmax.f32 %v2466, 0.0
          %v2595 = vmax.f32 %v2467, 0.0
          %v2596 = vmax.f32 %v2468, 0.0
          %v2597 = vmax.f32 %v2469, 0.0
          %v2598 = vmax.f32 %v2470, 0.0
          %v2599 = vmax.f32 %v2471, 0.0
          %v2600 = vmax.f32 %v2472, 0.0
          %v2601 = vmax.f32 %v2473, 0.0
          %v2602 = vmax.f32 %v2474, 0.0
          %v2603 = vmax.f32 %v2475, 0.0
          %v2604 = vmax.f32 %v2476, 0.0
          %v2605 = vmax.f32 %v2477, 0.0
          %v2606 = vmax.f32 %v2478, 0.0
          %v2607 = vmax.f32 %v2479, 0.0
          %v2608 = vmax.f32 %v2480, 0.0
          %v2609 = vmax.f32 %v2481, 0.0
          %v2610 = vmax.f32 %v2482, 0.0
          %v2611 = vmax.f32 %v2483, 0.0
          %v2612 = vmax.f32 %v2484, 0.0
          %v2613 = vmax.f32 %v2485, 0.0
          %v2614 = vmax.f32 %v2486, 0.0
          %v2615 = vmax.f32 %v2487, 0.0
          %v2616 = vmax.f32 %v2488, 0.0
          %v2617 = vmax.f32 %v2489, 0.0
          %v2618 = vmax.f32 %v2490, 0.0
          %v2619 = vmax.f32 %v2491, 0.0
          %v2620 = vmax.f32 %v2492, 0.0
          %v2621 = vmax.f32 %v2493, 0.0
          %v2622 = vmax.f32 %v2494, 0.0
          %v2623 = vmax.f32 %v2495, 0.0
          %v2624 = vmax.f32 %v2496, 0.0
          %v2625 = vmax.f32 %v2497, 0.0
          %v2626 = vmax.f32 %v2498, 0.0
          %v2627 = vmax.f32 %v2499, 0.0
          %v2628 = vmax.f32 %v2500, 0.0
          %v2629 = vmax.f32 %v2501, 0.0
          %v2630 = vmax.f32 %v2502, 0.0
          %v2631 = vmax.f32 %v2503, 0.0
          %v2632 = vpack.c.bf16 %v2505, %v2504
          %v2633 = vpack.c.bf16 %v2507, %v2506
          %v2634 = vpack.c.bf16 %v2509, %v2508
          %v2635 = vpack.c.bf16 %v2511, %v2510
          %v2636 = vpack.c.bf16 %v2513, %v2512
          %v2637 = vpack.c.bf16 %v2515, %v2514
          %v2638 = vpack.c.bf16 %v2517, %v2516
          %v2639 = vpack.c.bf16 %v2519, %v2518
          %v2640 = vpack.c.bf16 %v2521, %v2520
          %v2641 = vpack.c.bf16 %v2523, %v2522
          %v2642 = vpack.c.bf16 %v2525, %v2524
          %v2643 = vpack.c.bf16 %v2527, %v2526
          %v2644 = vpack.c.bf16 %v2529, %v2528
          %v2645 = vpack.c.bf16 %v2531, %v2530
          %v2646 = vpack.c.bf16 %v2533, %v2532
          %v2647 = vpack.c.bf16 %v2535, %v2534
          %v2648 = vpack.c.bf16 %v2537, %v2536
          %v2649 = vpack.c.bf16 %v2539, %v2538
          %v2650 = vpack.c.bf16 %v2541, %v2540
          %v2651 = vpack.c.bf16 %v2543, %v2542
          %v2652 = vpack.c.bf16 %v2545, %v2544
          %v2653 = vpack.c.bf16 %v2547, %v2546
          %v2654 = vpack.c.bf16 %v2549, %v2548
          %v2655 = vpack.c.bf16 %v2551, %v2550
          %v2656 = vpack.c.bf16 %v2553, %v2552
          %v2657 = vpack.c.bf16 %v2555, %v2554
          %v2658 = vpack.c.bf16 %v2557, %v2556
          %v2659 = vpack.c.bf16 %v2559, %v2558
          %v2660 = vpack.c.bf16 %v2561, %v2560
          %v2661 = vpack.c.bf16 %v2563, %v2562
          %v2662 = vpack.c.bf16 %v2565, %v2564
          %v2663 = vpack.c.bf16 %v2567, %v2566
          %v2664 = vpack.c.bf16 %v2569, %v2568
          %v2665 = vpack.c.bf16 %v2571, %v2570
          %v2666 = vpack.c.bf16 %v2573, %v2572
          %v2667 = vpack.c.bf16 %v2575, %v2574
          %v2668 = vpack.c.bf16 %v2577, %v2576
          %v2669 = vpack.c.bf16 %v2579, %v2578
          %v2670 = vpack.c.bf16 %v2581, %v2580
          %v2671 = vpack.c.bf16 %v2583, %v2582
          %v2672 = vpack.c.bf16 %v2585, %v2584
          %v2673 = vpack.c.bf16 %v2587, %v2586
          %v2674 = vpack.c.bf16 %v2589, %v2588
          %v2675 = vpack.c.bf16 %v2591, %v2590
          %v2676 = vpack.c.bf16 %v2593, %v2592
          %v2677 = vpack.c.bf16 %v2595, %v2594
          %v2678 = vpack.c.bf16 %v2597, %v2596
          %v2679 = vpack.c.bf16 %v2599, %v2598
          %v2680 = vpack.c.bf16 %v2601, %v2600
          %v2681 = vpack.c.bf16 %v2603, %v2602
          %v2682 = vpack.c.bf16 %v2605, %v2604
          %v2683 = vpack.c.bf16 %v2607, %v2606
          %v2684 = vpack.c.bf16 %v2609, %v2608
          %v2685 = vpack.c.bf16 %v2611, %v2610
          %v2686 = vpack.c.bf16 %v2613, %v2612
          %v2687 = vpack.c.bf16 %v2615, %v2614
          %v2688 = vpack.c.bf16 %v2617, %v2616
          %v2689 = vpack.c.bf16 %v2619, %v2618
          %v2690 = vpack.c.bf16 %v2621, %v2620
          %v2691 = vpack.c.bf16 %v2623, %v2622
          %v2692 = vpack.c.bf16 %v2625, %v2624
          %v2693 = vpack.c.bf16 %v2627, %v2626
          %v2694 = vpack.c.bf16 %v2629, %v2628
          %v2695 = vpack.c.bf16 %v2631, %v2630
          %v2760 = vunpack.c.l.b16 %v2632
          %v2761 = vunpack.c.h.b16 %v2632
          %v2762 = vunpack.c.l.b16 %v2633
          %v2763 = vunpack.c.h.b16 %v2633
          %v2764 = vunpack.c.l.b16 %v2634
          %v2765 = vunpack.c.h.b16 %v2634
          %v2766 = vunpack.c.l.b16 %v2635
          %v2767 = vunpack.c.h.b16 %v2635
          %v2768 = vunpack.c.l.b16 %v2636
          %v2769 = vunpack.c.h.b16 %v2636
          %v2770 = vunpack.c.l.b16 %v2637
          %v2771 = vunpack.c.h.b16 %v2637
          %v2772 = vunpack.c.l.b16 %v2638
          %v2773 = vunpack.c.h.b16 %v2638
          %v2774 = vunpack.c.l.b16 %v2639
          %v2775 = vunpack.c.h.b16 %v2639
          %v2776 = vunpack.c.l.b16 %v2640
          %v2777 = vunpack.c.h.b16 %v2640
          %v2778 = vunpack.c.l.b16 %v2641
          %v2779 = vunpack.c.h.b16 %v2641
          %v2780 = vunpack.c.l.b16 %v2642
          %v2781 = vunpack.c.h.b16 %v2642
          %v2782 = vunpack.c.l.b16 %v2643
          %v2783 = vunpack.c.h.b16 %v2643
          %v2784 = vunpack.c.l.b16 %v2644
          %v2785 = vunpack.c.h.b16 %v2644
          %v2786 = vunpack.c.l.b16 %v2645
          %v2787 = vunpack.c.h.b16 %v2645
          %v2788 = vunpack.c.l.b16 %v2646
          %v2789 = vunpack.c.h.b16 %v2646
          %v2790 = vunpack.c.l.b16 %v2647
          %v2791 = vunpack.c.h.b16 %v2647
          %v2792 = vunpack.c.l.b16 %v2648
          %v2793 = vunpack.c.h.b16 %v2648
          %v2794 = vunpack.c.l.b16 %v2649
          %v2795 = vunpack.c.h.b16 %v2649
          %v2796 = vunpack.c.l.b16 %v2650
          %v2797 = vunpack.c.h.b16 %v2650
          %v2798 = vunpack.c.l.b16 %v2651
          %v2799 = vunpack.c.h.b16 %v2651
          %v2800 = vunpack.c.l.b16 %v2652
          %v2801 = vunpack.c.h.b16 %v2652
          %v2802 = vunpack.c.l.b16 %v2653
          %v2803 = vunpack.c.h.b16 %v2653
          %v2804 = vunpack.c.l.b16 %v2654
          %v2805 = vunpack.c.h.b16 %v2654
          %v2806 = vunpack.c.l.b16 %v2655
          %v2807 = vunpack.c.h.b16 %v2655
          %v2808 = vunpack.c.l.b16 %v2656
          %v2809 = vunpack.c.h.b16 %v2656
          %v2810 = vunpack.c.l.b16 %v2657
          %v2811 = vunpack.c.h.b16 %v2657
          %v2812 = vunpack.c.l.b16 %v2658
          %v2813 = vunpack.c.h.b16 %v2658
          %v2814 = vunpack.c.l.b16 %v2659
          %v2815 = vunpack.c.h.b16 %v2659
          %v2816 = vunpack.c.l.b16 %v2660
          %v2817 = vunpack.c.h.b16 %v2660
          %v2818 = vunpack.c.l.b16 %v2661
          %v2819 = vunpack.c.h.b16 %v2661
          %v2820 = vunpack.c.l.b16 %v2662
          %v2821 = vunpack.c.h.b16 %v2662
          %v2822 = vunpack.c.l.b16 %v2663
          %v2823 = vunpack.c.h.b16 %v2663
          %v2824 = vunpack.c.l.b16 %v2664
          %v2825 = vunpack.c.h.b16 %v2664
          %v2826 = vunpack.c.l.b16 %v2665
          %v2827 = vunpack.c.h.b16 %v2665
          %v2828 = vunpack.c.l.b16 %v2666
          %v2829 = vunpack.c.h.b16 %v2666
          %v2830 = vunpack.c.l.b16 %v2667
          %v2831 = vunpack.c.h.b16 %v2667
          %v2832 = vunpack.c.l.b16 %v2668
          %v2833 = vunpack.c.h.b16 %v2668
          %v2834 = vunpack.c.l.b16 %v2669
          %v2835 = vunpack.c.h.b16 %v2669
          %v2836 = vunpack.c.l.b16 %v2670
          %v2837 = vunpack.c.h.b16 %v2670
          %v2838 = vunpack.c.l.b16 %v2671
          %v2839 = vunpack.c.h.b16 %v2671
          %v2840 = vunpack.c.l.b16 %v2672
          %v2841 = vunpack.c.h.b16 %v2672
          %v2842 = vunpack.c.l.b16 %v2673
          %v2843 = vunpack.c.h.b16 %v2673
          %v2844 = vunpack.c.l.b16 %v2674
          %v2845 = vunpack.c.h.b16 %v2674
          %v2846 = vunpack.c.l.b16 %v2675
          %v2847 = vunpack.c.h.b16 %v2675
          %v2848 = vunpack.c.l.b16 %v2676
          %v2849 = vunpack.c.h.b16 %v2676
          %v2850 = vunpack.c.l.b16 %v2677
          %v2851 = vunpack.c.h.b16 %v2677
          %v2852 = vunpack.c.l.b16 %v2678
          %v2853 = vunpack.c.h.b16 %v2678
          %v2854 = vunpack.c.l.b16 %v2679
          %v2855 = vunpack.c.h.b16 %v2679
          %v2856 = vunpack.c.l.b16 %v2680
          %v2857 = vunpack.c.h.b16 %v2680
          %v2858 = vunpack.c.l.b16 %v2681
          %v2859 = vunpack.c.h.b16 %v2681
          %v2860 = vunpack.c.l.b16 %v2682
          %v2861 = vunpack.c.h.b16 %v2682
          %v2862 = vunpack.c.l.b16 %v2683
          %v2863 = vunpack.c.h.b16 %v2683
          %v2864 = vunpack.c.l.b16 %v2684
          %v2865 = vunpack.c.h.b16 %v2684
          %v2866 = vunpack.c.l.b16 %v2685
          %v2867 = vunpack.c.h.b16 %v2685
          %v2868 = vunpack.c.l.b16 %v2686
          %v2869 = vunpack.c.h.b16 %v2686
          %v2870 = vunpack.c.l.b16 %v2687
          %v2871 = vunpack.c.h.b16 %v2687
          %v2872 = vunpack.c.l.b16 %v2688
          %v2873 = vunpack.c.h.b16 %v2688
          %v2874 = vunpack.c.l.b16 %v2689
          %v2875 = vunpack.c.h.b16 %v2689
          %v2876 = vunpack.c.l.b16 %v2690
          %v2877 = vunpack.c.h.b16 %v2690
          %v2878 = vunpack.c.l.b16 %v2691
          %v2879 = vunpack.c.h.b16 %v2691
          %v2880 = vunpack.c.l.b16 %v2692
          %v2881 = vunpack.c.h.b16 %v2692
          %v2882 = vunpack.c.l.b16 %v2693
          %v2883 = vunpack.c.h.b16 %v2693
          %v2884 = vunpack.c.l.b16 %v2694
          %v2885 = vunpack.c.h.b16 %v2694
          %v2886 = vunpack.c.l.b16 %v2695
          %v2887 = vunpack.c.h.b16 %v2695
          %v2888 = vpack.c.b16 %v2760, %v2760
          %v2889 = vpack.c.b16 %v2761, %v2761
          %v2890 = vpack.c.b16 %v2762, %v2762
          %v2891 = vpack.c.b16 %v2763, %v2763
          %v2892 = vpack.c.b16 %v2764, %v2764
          %v2893 = vpack.c.b16 %v2765, %v2765
          %v2894 = vpack.c.b16 %v2766, %v2766
          %v2895 = vpack.c.b16 %v2767, %v2767
          %v2896 = vpack.c.b16 %v2768, %v2768
          %v2897 = vpack.c.b16 %v2769, %v2769
          %v2898 = vpack.c.b16 %v2770, %v2770
          %v2899 = vpack.c.b16 %v2771, %v2771
          %v2900 = vpack.c.b16 %v2772, %v2772
          %v2901 = vpack.c.b16 %v2773, %v2773
          %v2902 = vpack.c.b16 %v2774, %v2774
          %v2903 = vpack.c.b16 %v2775, %v2775
          %v2904 = vpack.c.b16 %v2776, %v2776
          %v2905 = vpack.c.b16 %v2777, %v2777
          %v2906 = vpack.c.b16 %v2778, %v2778
          %v2907 = vpack.c.b16 %v2779, %v2779
          %v2908 = vpack.c.b16 %v2780, %v2780
          %v2909 = vpack.c.b16 %v2781, %v2781
          %v2910 = vpack.c.b16 %v2782, %v2782
          %v2911 = vpack.c.b16 %v2783, %v2783
          %v2912 = vpack.c.b16 %v2784, %v2784
          %v2913 = vpack.c.b16 %v2785, %v2785
          %v2914 = vpack.c.b16 %v2786, %v2786
          %v2915 = vpack.c.b16 %v2787, %v2787
          %v2916 = vpack.c.b16 %v2788, %v2788
          %v2917 = vpack.c.b16 %v2789, %v2789
          %v2918 = vpack.c.b16 %v2790, %v2790
          %v2919 = vpack.c.b16 %v2791, %v2791
          %v2920 = vpack.c.b16 %v2792, %v2792
          %v2921 = vpack.c.b16 %v2793, %v2793
          %v2922 = vpack.c.b16 %v2794, %v2794
          %v2923 = vpack.c.b16 %v2795, %v2795
          %v2924 = vpack.c.b16 %v2796, %v2796
          %v2925 = vpack.c.b16 %v2797, %v2797
          %v2926 = vpack.c.b16 %v2798, %v2798
          %v2927 = vpack.c.b16 %v2799, %v2799
          %v2928 = vpack.c.b16 %v2800, %v2800
          %v2929 = vpack.c.b16 %v2801, %v2801
          %v2930 = vpack.c.b16 %v2802, %v2802
          %v2931 = vpack.c.b16 %v2803, %v2803
          %v2932 = vpack.c.b16 %v2804, %v2804
          %v2933 = vpack.c.b16 %v2805, %v2805
          %v2934 = vpack.c.b16 %v2806, %v2806
          %v2935 = vpack.c.b16 %v2807, %v2807
          %v2936 = vpack.c.b16 %v2808, %v2808
          %v2937 = vpack.c.b16 %v2809, %v2809
          %v2938 = vpack.c.b16 %v2810, %v2810
          %v2939 = vpack.c.b16 %v2811, %v2811
          %v2940 = vpack.c.b16 %v2812, %v2812
          %v2941 = vpack.c.b16 %v2813, %v2813
          %v2942 = vpack.c.b16 %v2814, %v2814
          %v2943 = vpack.c.b16 %v2815, %v2815
          %v2944 = vpack.c.b16 %v2816, %v2816
          %v2945 = vpack.c.b16 %v2817, %v2817
          %v2946 = vpack.c.b16 %v2818, %v2818
          %v2947 = vpack.c.b16 %v2819, %v2819
          %v2948 = vpack.c.b16 %v2820, %v2820
          %v2949 = vpack.c.b16 %v2821, %v2821
          %v2950 = vpack.c.b16 %v2822, %v2822
          %v2951 = vpack.c.b16 %v2823, %v2823
          %v2952 = vpack.c.b16 %v2824, %v2824
          %v2953 = vpack.c.b16 %v2825, %v2825
          %v2954 = vpack.c.b16 %v2826, %v2826
          %v2955 = vpack.c.b16 %v2827, %v2827
          %v2956 = vpack.c.b16 %v2828, %v2828
          %v2957 = vpack.c.b16 %v2829, %v2829
          %v2958 = vpack.c.b16 %v2830, %v2830
          %v2959 = vpack.c.b16 %v2831, %v2831
          %v2960 = vpack.c.b16 %v2832, %v2832
          %v2961 = vpack.c.b16 %v2833, %v2833
          %v2962 = vpack.c.b16 %v2834, %v2834
          %v2963 = vpack.c.b16 %v2835, %v2835
          %v2964 = vpack.c.b16 %v2836, %v2836
          %v2965 = vpack.c.b16 %v2837, %v2837
          %v2966 = vpack.c.b16 %v2838, %v2838
          %v2967 = vpack.c.b16 %v2839, %v2839
          %v2968 = vpack.c.b16 %v2840, %v2840
          %v2969 = vpack.c.b16 %v2841, %v2841
          %v2970 = vpack.c.b16 %v2842, %v2842
          %v2971 = vpack.c.b16 %v2843, %v2843
          %v2972 = vpack.c.b16 %v2844, %v2844
          %v2973 = vpack.c.b16 %v2845, %v2845
          %v2974 = vpack.c.b16 %v2846, %v2846
          %v2975 = vpack.c.b16 %v2847, %v2847
          %v2976 = vpack.c.b16 %v2848, %v2848
          %v2977 = vpack.c.b16 %v2849, %v2849
          %v2978 = vpack.c.b16 %v2850, %v2850
          %v2979 = vpack.c.b16 %v2851, %v2851
          %v2980 = vpack.c.b16 %v2852, %v2852
          %v2981 = vpack.c.b16 %v2853, %v2853
          %v2982 = vpack.c.b16 %v2854, %v2854
          %v2983 = vpack.c.b16 %v2855, %v2855
          %v2984 = vpack.c.b16 %v2856, %v2856
          %v2985 = vpack.c.b16 %v2857, %v2857
          %v2986 = vpack.c.b16 %v2858, %v2858
          %v2987 = vpack.c.b16 %v2859, %v2859
          %v2988 = vpack.c.b16 %v2860, %v2860
          %v2989 = vpack.c.b16 %v2861, %v2861
          %v2990 = vpack.c.b16 %v2862, %v2862
          %v2991 = vpack.c.b16 %v2863, %v2863
          %v2992 = vpack.c.b16 %v2864, %v2864
          %v2993 = vpack.c.b16 %v2865, %v2865
          %v2994 = vpack.c.b16 %v2866, %v2866
          %v2995 = vpack.c.b16 %v2867, %v2867
          %v2996 = vpack.c.b16 %v2868, %v2868
          %v2997 = vpack.c.b16 %v2869, %v2869
          %v2998 = vpack.c.b16 %v2870, %v2870
          %v2999 = vpack.c.b16 %v2871, %v2871
          %v3000 = vpack.c.b16 %v2872, %v2872
          %v3001 = vpack.c.b16 %v2873, %v2873
          %v3002 = vpack.c.b16 %v2874, %v2874
          %v3003 = vpack.c.b16 %v2875, %v2875
          %v3004 = vpack.c.b16 %v2876, %v2876
          %v3005 = vpack.c.b16 %v2877, %v2877
          %v3006 = vpack.c.b16 %v2878, %v2878
          %v3007 = vpack.c.b16 %v2879, %v2879
          %v3008 = vpack.c.b16 %v2880, %v2880
          %v3009 = vpack.c.b16 %v2881, %v2881
          %v3010 = vpack.c.b16 %v2882, %v2882
          %v3011 = vpack.c.b16 %v2883, %v2883
          %v3012 = vpack.c.b16 %v2884, %v2884
          %v3013 = vpack.c.b16 %v2885, %v2885
          %v3014 = vpack.c.b16 %v2886, %v2886
          %v3015 = vpack.c.b16 %v2887, %v2887
          %3144 = vst [vmem:[%s275] sm:$0xf] %v2888
          %3145 = vst [vmem:[%s275 + $0x4] sm:$0xf] %v2889
          %3146 = vst [vmem:[%s275 + $0x8] sm:$0xf] %v2890
          %3147 = vst [vmem:[%s275 + $0xc] sm:$0xf] %v2891
          %3148 = vst [vmem:[%s275 + $0x10] sm:$0xf] %v2892
          %3149 = vst [vmem:[%s275 + $0x14] sm:$0xf] %v2893
          %3150 = vst [vmem:[%s275 + $0x18] sm:$0xf] %v2894
          %3151 = vst [vmem:[%s275 + $0x1c] sm:$0xf] %v2895
          %3152 = vst [vmem:[%s275 + $0x20] sm:$0xf] %v2896
          %3153 = vst [vmem:[%s275 + $0x24] sm:$0xf] %v2897
          %3154 = vst [vmem:[%s275 + $0x28] sm:$0xf] %v2898
          %3155 = vst [vmem:[%s275 + $0x2c] sm:$0xf] %v2899
          %3156 = vst [vmem:[%s275 + $0x30] sm:$0xf] %v2900
          %3157 = vst [vmem:[%s275 + $0x34] sm:$0xf] %v2901
          %3158 = vst [vmem:[%s275 + $0x38] sm:$0xf] %v2902
          %3159 = vst [vmem:[%s275 + $0x3c] sm:$0xf] %v2903
          %3160 = vst [vmem:[%s275 + $0x40] sm:$0xf] %v2904
          %3161 = vst [vmem:[%s275 + $0x44] sm:$0xf] %v2905
          %3162 = vst [vmem:[%s275 + $0x48] sm:$0xf] %v2906
          %3163 = vst [vmem:[%s275 + $0x4c] sm:$0xf] %v2907
          %3164 = vst [vmem:[%s275 + $0x50] sm:$0xf] %v2908
          %3165 = vst [vmem:[%s275 + $0x54] sm:$0xf] %v2909
          %3166 = vst [vmem:[%s275 + $0x58] sm:$0xf] %v2910
          %3167 = vst [vmem:[%s275 + $0x5c] sm:$0xf] %v2911
          %3168 = vst [vmem:[%s275 + $0x60] sm:$0xf] %v2912
          %3169 = vst [vmem:[%s275 + $0x64] sm:$0xf] %v2913
          %3170 = vst [vmem:[%s275 + $0x68] sm:$0xf] %v2914
          %3171 = vst [vmem:[%s275 + $0x6c] sm:$0xf] %v2915
          %3172 = vst [vmem:[%s275 + $0x70] sm:$0xf] %v2916
          %3173 = vst [vmem:[%s275 + $0x74] sm:$0xf] %v2917
          %3174 = vst [vmem:[%s275 + $0x78] sm:$0xf] %v2918
          %3175 = vst [vmem:[%s275 + $0x7c] sm:$0xf] %v2919
          %3176 = vst [vmem:[%s275 + $0x80] sm:$0xf] %v2920
          %3177 = vst [vmem:[%s275 + $0x84] sm:$0xf] %v2921
          %3178 = vst [vmem:[%s275 + $0x88] sm:$0xf] %v2922
          %3179 = vst [vmem:[%s275 + $0x8c] sm:$0xf] %v2923
          %3180 = vst [vmem:[%s275 + $0x90] sm:$0xf] %v2924
          %3181 = vst [vmem:[%s275 + $0x94] sm:$0xf] %v2925
          %3182 = vst [vmem:[%s275 + $0x98] sm:$0xf] %v2926
          %3183 = vst [vmem:[%s275 + $0x9c] sm:$0xf] %v2927
          %3184 = vst [vmem:[%s275 + $0xa0] sm:$0xf] %v2928
          %3185 = vst [vmem:[%s275 + $0xa4] sm:$0xf] %v2929
          %3186 = vst [vmem:[%s275 + $0xa8] sm:$0xf] %v2930
          %3187 = vst [vmem:[%s275 + $0xac] sm:$0xf] %v2931
          %3188 = vst [vmem:[%s275 + $0xb0] sm:$0xf] %v2932
          %3189 = vst [vmem:[%s275 + $0xb4] sm:$0xf] %v2933
          %3190 = vst [vmem:[%s275 + $0xb8] sm:$0xf] %v2934
          %3191 = vst [vmem:[%s275 + $0xbc] sm:$0xf] %v2935
          %3192 = vst [vmem:[%s275 + $0xc0] sm:$0xf] %v2936
          %3193 = vst [vmem:[%s275 + $0xc4] sm:$0xf] %v2937
          %3194 = vst [vmem:[%s275 + $0xc8] sm:$0xf] %v2938
          %3195 = vst [vmem:[%s275 + $0xcc] sm:$0xf] %v2939
          %3196 = vst [vmem:[%s275 + $0xd0] sm:$0xf] %v2940
          %3197 = vst [vmem:[%s275 + $0xd4] sm:$0xf] %v2941
          %3198 = vst [vmem:[%s275 + $0xd8] sm:$0xf] %v2942
          %3199 = vst [vmem:[%s275 + $0xdc] sm:$0xf] %v2943
          %3200 = vst [vmem:[%s275 + $0xe0] sm:$0xf] %v2944
          %3201 = vst [vmem:[%s275 + $0xe4] sm:$0xf] %v2945
          %3202 = vst [vmem:[%s275 + $0xe8] sm:$0xf] %v2946
          %3203 = vst [vmem:[%s275 + $0xec] sm:$0xf] %v2947
          %3204 = vst [vmem:[%s275 + $0xf0] sm:$0xf] %v2948
          %3205 = vst [vmem:[%s275 + $0xf4] sm:$0xf] %v2949
          %3206 = vst [vmem:[%s275 + $0xf8] sm:$0xf] %v2950
          %3207 = vst [vmem:[%s275 + $0xfc] sm:$0xf] %v2951
          %3208 = vst [vmem:[%s275 + $0x100] sm:$0xf] %v2952
          %3209 = vst [vmem:[%s275 + $0x104] sm:$0xf] %v2953
          %3210 = vst [vmem:[%s275 + $0x108] sm:$0xf] %v2954
          %3211 = vst [vmem:[%s275 + $0x10c] sm:$0xf] %v2955
          %3212 = vst [vmem:[%s275 + $0x110] sm:$0xf] %v2956
          %3213 = vst [vmem:[%s275 + $0x114] sm:$0xf] %v2957
          %3214 = vst [vmem:[%s275 + $0x118] sm:$0xf] %v2958
          %3215 = vst [vmem:[%s275 + $0x11c] sm:$0xf] %v2959
          %3216 = vst [vmem:[%s275 + $0x120] sm:$0xf] %v2960
          %3217 = vst [vmem:[%s275 + $0x124] sm:$0xf] %v2961
          %3218 = vst [vmem:[%s275 + $0x128] sm:$0xf] %v2962
          %3219 = vst [vmem:[%s275 + $0x12c] sm:$0xf] %v2963
          %3220 = vst [vmem:[%s275 + $0x130] sm:$0xf] %v2964
          %3221 = vst [vmem:[%s275 + $0x134] sm:$0xf] %v2965
          %3222 = vst [vmem:[%s275 + $0x138] sm:$0xf] %v2966
          %3223 = vst [vmem:[%s275 + $0x13c] sm:$0xf] %v2967
          %3224 = vst [vmem:[%s275 + $0x140] sm:$0xf] %v2968
          %3225 = vst [vmem:[%s275 + $0x144] sm:$0xf] %v2969
          %3226 = vst [vmem:[%s275 + $0x148] sm:$0xf] %v2970
          %3227 = vst [vmem:[%s275 + $0x14c] sm:$0xf] %v2971
          %3228 = vst [vmem:[%s275 + $0x150] sm:$0xf] %v2972
          %3229 = vst [vmem:[%s275 + $0x154] sm:$0xf] %v2973
          %3230 = vst [vmem:[%s275 + $0x158] sm:$0xf] %v2974
          %3231 = vst [vmem:[%s275 + $0x15c] sm:$0xf] %v2975
          %3232 = vst [vmem:[%s275 + $0x160] sm:$0xf] %v2976
          %3233 = vst [vmem:[%s275 + $0x164] sm:$0xf] %v2977
          %3234 = vst [vmem:[%s275 + $0x168] sm:$0xf] %v2978
          %3235 = vst [vmem:[%s275 + $0x16c] sm:$0xf] %v2979
          %3236 = vst [vmem:[%s275 + $0x170] sm:$0xf] %v2980
          %3237 = vst [vmem:[%s275 + $0x174] sm:$0xf] %v2981
          %3238 = vst [vmem:[%s275 + $0x178] sm:$0xf] %v2982
          %3239 = vst [vmem:[%s275 + $0x17c] sm:$0xf] %v2983
          %3240 = vst [vmem:[%s275 + $0x180] sm:$0xf] %v2984
          %3241 = vst [vmem:[%s275 + $0x184] sm:$0xf] %v2985
          %3242 = vst [vmem:[%s275 + $0x188] sm:$0xf] %v2986
          %3243 = vst [vmem:[%s275 + $0x18c] sm:$0xf] %v2987
          %3244 = vst [vmem:[%s275 + $0x190] sm:$0xf] %v2988
          %3245 = vst [vmem:[%s275 + $0x194] sm:$0xf] %v2989
          %3246 = vst [vmem:[%s275 + $0x198] sm:$0xf] %v2990
          %3247 = vst [vmem:[%s275 + $0x19c] sm:$0xf] %v2991
          %3248 = vst [vmem:[%s275 + $0x1a0] sm:$0xf] %v2992
          %3249 = vst [vmem:[%s275 + $0x1a4] sm:$0xf] %v2993
          %3250 = vst [vmem:[%s275 + $0x1a8] sm:$0xf] %v2994
          %3251 = vst [vmem:[%s275 + $0x1ac] sm:$0xf] %v2995
          %3252 = vst [vmem:[%s275 + $0x1b0] sm:$0xf] %v2996
          %3253 = vst [vmem:[%s275 + $0x1b4] sm:$0xf] %v2997
          %3254 = vst [vmem:[%s275 + $0x1b8] sm:$0xf] %v2998
          %3255 = vst [vmem:[%s275 + $0x1bc] sm:$0xf] %v2999
          %3256 = vst [vmem:[%s275 + $0x1c0] sm:$0xf] %v3000
          %3257 = vst [vmem:[%s275 + $0x1c4] sm:$0xf] %v3001
          %3258 = vst [vmem:[%s275 + $0x1c8] sm:$0xf] %v3002
          %3259 = vst [vmem:[%s275 + $0x1cc] sm:$0xf] %v3003
          %3260 = vst [vmem:[%s275 + $0x1d0] sm:$0xf] %v3004
          %3261 = vst [vmem:[%s275 + $0x1d4] sm:$0xf] %v3005
          %3262 = vst [vmem:[%s275 + $0x1d8] sm:$0xf] %v3006
          %3263 = vst [vmem:[%s275 + $0x1dc] sm:$0xf] %v3007
          %3264 = vst [vmem:[%s275 + $0x1e0] sm:$0xf] %v3008
          %3265 = vst [vmem:[%s275 + $0x1e4] sm:$0xf] %v3009
          %3266 = vst [vmem:[%s275 + $0x1e8] sm:$0xf] %v3010
          %3267 = vst [vmem:[%s275 + $0x1ec] sm:$0xf] %v3011
          %3268 = vst [vmem:[%s275 + $0x1f0] sm:$0xf] %v3012
          %3269 = vst [vmem:[%s275 + $0x1f4] sm:$0xf] %v3013
          %3270 = vst [vmem:[%s275 + $0x1f8] sm:$0xf] %v3014
          %3271 = vst [vmem:[%s275 + $0x1fc] sm:$0xf] %v3015
        $region52: #{tpu_custom_call.1} parent=31 // pred_fallthru
          _
        %s3272 = sand.u32 %s145, 1
        %s3273 = scalar_lea.sflag [#allocation5], %s3272
        %s3274 = sand.u32 %s145, 1
        %s3275 = smul.addr %s3274, 512
        %s3276 = scalar_lea.vmem [#allocation9], %s3275
        // Predicated region
        $region53: #{tpu_custom_call.1} parent=31 // pred_check
          %p3277 = pneg %p155
        $region54: #{tpu_custom_call.1} parent=31 // pred_check_branch
          %3279 = sbr.rel (%p3277) target = $region56
        $region55: #{tpu_custom_call.1} parent=31 // pred_region
          %s3280 = smul.u32 128, %s28
          %s3282 = ssub.s32 8192, 8192
          %3283 = vsyncadd %s3273, %s3282
          %s3284 = sadd.s32 %s29, %s3280
          %s3285 = smul.addr %s27, 256
          %s3286 = sadd.s32 %s3284, %s3285
          %s3287 = smul.addr %s3286, 64
          %s3288 = scalar_lea.hbm %s3, %s3287
          %s3289 = sshll.u32 %s3276, 4
          %s3290 = int_to_ptr.vmem [resolvable:$true] %s3289
          %3295 = dma.vmem_to_hbm [thread:$0]  %s3290, 8192, %s3288, %s3273, 64, 64, 4
        $region56: #{tpu_custom_call.1} parent=31 // pred_fallthru
          _
      $region32: #{tpu_custom_call.1} parent=5 // pred_fallthru
        _
      %p3296 = scmp.le.s32.totalorder 2, %s16
      // Predicated region
      $region57: #{tpu_custom_call.1} parent=5 // pred_check
        %p3297 = pneg %p3296
      $region58: #{tpu_custom_call.1} parent=5 // pred_check_branch
        %3299 = sbr.rel (%p3297) target = $region60
      $region59: #{tpu_custom_call.1} parent=5 // pred_region
        %s3300 = ssub.s32 %s16, 2
        // Predicated region
        $region61: #{tpu_custom_call.1} parent=59 // pred_check
          %p3301 = pneg %p161
        $region62: #{tpu_custom_call.1} parent=59 // pred_check_branch
          %3303 = sbr.rel (%p3301) target = $region64
        $region63: #{tpu_custom_call.1} parent=59 // pred_region
          %s3304 = sand.u32 %s146, 1
          %s3305 = scalar_lea.sflag [#allocation5], %s3304
          %s3306 = sand.u32 %s146, 1
          %s3307 = smul.addr %s3306, 512
          %s3308 = scalar_lea.vmem [#allocation9], %s3307
          %3309 = dma.done %s3305, 8192
        $region64: #{tpu_custom_call.1} parent=59 // pred_fallthru
          _
      $region60: #{tpu_custom_call.1} parent=5 // pred_fallthru
        _
    $region6: #{tpu_custom_call.1} parent=1 // loop_footer
      %s20 = sadd.s32 1, %s16
    $region7: #{tpu_custom_call.1} parent=1 // loop_footer_branch
      %15 = sbr.rel target = $region3
    $region8: #{tpu_custom_call.1} parent=1 // loop_exit
      _
    %3310 = vsyncpa [#allocation4], 1
    %s3311 = scalar_lea.sflag [#allocation4], 1
    %3312 = vsyncpa %s3311, 1
    %3313 = vsyncpa [#allocation7], 1
    %3314 = vsyncpa [#allocation5], 1
    %s3315 = scalar_lea.sflag [#allocation5], 1
    %3316 = vsyncpa %s3315, 1

</llo_original>
